<compile_context>
chip_gen: v6e
topology: v6e:2x2x1
jax: 0.10.0
libtpu: 0.0.40
codegen_flags: <defaults>
</compile_context>

<pallas_src>
import functools

import jax
import jax.numpy as jnp
from jax import lax
from jax.experimental import pallas as pl
from jax.experimental.pallas import tpu as pltpu


# --------------------------- fused TGCN kernel -----------------------------
def _tgcn_fused_kernel(
    a_ref, x_ref, wg_ref, bg_ref, h0_ref,
    wih_ref, whh_ref, bx_ref, bhn_ref,
    out_ref, hn_ref,
    gi_s,
):
    hp = hn_ref.shape[1]           # padded hidden width (lane-dense, 128)
    n_steps = out_ref.shape[0]     # sequence length == number of nodes

    # ---- GCN: g = A_norm @ (X @ Wg) + bg   (bf16 MXU, f32 accumulate) ----
    xw = jnp.dot(
        x_ref[...].astype(jnp.bfloat16), wg_ref[...],
        preferred_element_type=jnp.float32,
    )
    g = jnp.dot(
        a_ref[...].astype(jnp.bfloat16), xw.astype(jnp.bfloat16),
        preferred_element_type=jnp.float32,
    ) + bg_ref[...]

    # ---- fused GRU input projection for ALL timesteps: [N, 3*Hp] ----------
    # bx already contains (b_ir+b_hr, b_iz+b_hz, b_in): loop-invariant biases
    # are applied exactly once here, off the recurrence critical path.
    gi_s[...] = jnp.dot(
        g.astype(jnp.bfloat16), wih_ref[...],
        preferred_element_type=jnp.float32,
    ) + bx_ref[...]

    whh = whh_ref[...]             # [Hp, 3Hp] bf16 (fused r|z|n hidden weights)
    bhn = bhn_ref[...]             # [1, Hp]   f32  (hidden bias of the n gate)

    # Process the recurrence in blocks of 8 steps so output stores are full
    # (8, 128) slabs (unmasked vst) and the scheduler sees 8 unrolled steps.
    blk = 8 if (n_steps % 8 == 0) else 1

    def block_step(b, h):
        base = pl.multiple_of(b * blk, blk)
        rows = []
        for j in range(blk):                       # python-unrolled inner steps
            gi_t = gi_s[pl.ds(base + j, 1), :]     # [1, 3Hp]
            gh = jnp.dot(
                h.astype(jnp.bfloat16), whh,
                preferred_element_type=jnp.float32,
            )                                      # [1, 3Hp] single MXU push
            r = jax.nn.sigmoid(gi_t[:, 0:hp] + gh[:, 0:hp])
            z = jax.nn.sigmoid(gi_t[:, hp:2 * hp] + gh[:, hp:2 * hp])
            n = jnp.tanh(gi_t[:, 2 * hp:3 * hp] + r * (gh[:, 2 * hp:3 * hp] + bhn))
            h = (1.0 - z) * n + z * h
            rows.append(h)
        slab = rows[0] if blk == 1 else jnp.concatenate(rows, axis=0)
        out_ref[pl.ds(base, blk), :] = slab
        return h

    h_final = lax.fori_loop(
        0, n_steps // blk, block_step, h0_ref[...], unroll=True
    )
    hn_ref[...] = h_final


def tgcn_pallas(a_norm, x, params):
    n, f_in = x.shape
    fp = params["wg"].shape[1]       # padded gcn_out (128)
    hp = params["h0"].shape[1]       # padded rnn_hidden (128)

    def full(shp):
        return pl.BlockSpec(shp, lambda i, _s=len(shp): (0,) * _s)

    out, hn = pl.pallas_call(
        _tgcn_fused_kernel,
        grid=(1,),
        in_specs=[
            full((n, n)),            # A_norm
            full((n, f_in)),         # X
            full((f_in, fp)),        # W_gcn (bf16, padded)
            full((1, fp)),           # b_gcn (f32, padded)
            full((1, hp)),           # h0    (f32, padded)
            full((fp, 3 * hp)),      # W_ih fused r|z|n (bf16)
            full((hp, 3 * hp)),      # W_hh fused r|z|n (bf16)
            full((1, 3 * hp)),       # fused input biases (f32)
            full((1, hp)),           # b_hn (f32)
        ],
        out_specs=(full((n, hp)), full((1, hp))),
        out_shape=(
            jax.ShapeDtypeStruct((n, hp), jnp.float32),
            jax.ShapeDtypeStruct((1, hp), jnp.float32),
        ),
        scratch_shapes=[pltpu.VMEM((n, 3 * hp), jnp.float32)],
        compiler_params=pltpu.CompilerParams(
            dimension_semantics=("arbitrary",)
        ),
    )(
        a_norm, x, params["wg"], params["bg"], params["h0"],
        params["wih"], params["whh"], params["bx"], params["bhn"],
    )
    return out, hn


# ----------------------------- glue / params ------------------------------
def build_norm_adj(edge_index, num_nodes):
    """Dense symmetric-normalized adjacency with self-loops (PyG gcn_norm)."""
    src, dst = edge_index[0], edge_index[1]
    a = jnp.zeros((num_nodes, num_nodes), jnp.float32)
    a = a.at[dst, src].add(1.0)                     # aggregate src -> dst
    a = a + jnp.eye(num_nodes, dtype=jnp.float32)   # self loops (weight 1)
    deg = a.sum(axis=1)
    dinv = jnp.where(deg > 0, jax.lax.rsqrt(deg), 0.0)
    return dinv[:, None] * a * dinv[None, :]


def init_params(key, gcn_in, gcn_out, rnn_hidden):
    """Raw parameters in PyTorch layout (weight_ih [3H,in], gate order r,z,n)."""
    ks = jax.random.split(key, 7)
    scale = 0.1
    return dict(
        w_gcn=scale * jax.random.normal(ks[0], (gcn_in, gcn_out), jnp.float32),
        b_gcn=scale * jax.random.normal(ks[1], (gcn_out,), jnp.float32),
        w_ih=scale * jax.random.normal(ks[2], (3 * rnn_hidden, gcn_out), jnp.float32),
        w_hh=scale * jax.random.normal(ks[3], (3 * rnn_hidden, rnn_hidden), jnp.float32),
        b_ih=scale * jax.random.normal(ks[4], (3 * rnn_hidden,), jnp.float32),
        b_hh=scale * jax.random.normal(ks[5], (3 * rnn_hidden,), jnp.float32),
        h0=jax.random.normal(ks[6], (1, 1, rnn_hidden), jnp.float32),
    )


def _pad_to(x, shape):
    return jnp.pad(x, [(0, s - d) for d, s in zip(x.shape, shape)])


def prepare_params(raw, *, lane_pad=128):
    """Pad to lane-dense widths, fuse gate weights/biases, cast weights bf16."""
    gcn_in, gcn_out = raw["w_gcn"].shape
    H = raw["w_hh"].shape[1]
    fp = ((gcn_out + lane_pad - 1) // lane_pad) * lane_pad
    hp = ((H + lane_pad - 1) // lane_pad) * lane_pad

    wg = _pad_to(raw["w_gcn"], (gcn_in, fp)).astype(jnp.bfloat16)
    bg = _pad_to(raw["b_gcn"].reshape(1, -1), (1, fp)).astype(jnp.float32)

    def split3(m):
        return m[0:H], m[H:2 * H], m[2 * H:3 * H]

    wir, wiz, win = split3(raw["w_ih"])      # each [H, gcn_out]
    whr, whz, whn = split3(raw["w_hh"])      # each [H, H]
    bir, biz, bi_n = split3(raw["b_ih"])
    bhr, bhz, bhn = split3(raw["b_hh"])

    wih = jnp.concatenate(
        [_pad_to(w.T, (fp, hp)) for w in (wir, wiz, win)], axis=1
    ).astype(jnp.bfloat16)                   # [Fp, 3Hp]
    whh = jnp.concatenate(
        [_pad_to(w.T, (hp, hp)) for w in (whr, whz, whn)], axis=1
    ).astype(jnp.bfloat16)                   # [Hp, 3Hp]

    bx = jnp.concatenate(
        [
            _pad_to((bir + bhr).reshape(1, -1), (1, hp)),
            _pad_to((biz + bhz).reshape(1, -1), (1, hp)),
            _pad_to(bi_n.reshape(1, -1), (1, hp)),
        ],
        axis=1,
    ).astype(jnp.float32)                    # [1, 3Hp]
    bhn_p = _pad_to(bhn.reshape(1, -1), (1, hp)).astype(jnp.float32)

    h0 = _pad_to(raw["h0"][0], (1, hp)).astype(jnp.float32)   # [1, Hp]

    return dict(wg=wg, bg=bg, wih=wih, whh=whh, bx=bx, bhn=bhn_p, h0=h0)


@functools.partial(jax.jit, static_argnames=("num_nodes", "rnn_hidden"))
def tgcn_forward(params, x, edge_index, num_nodes, rnn_hidden):
    a_norm = build_norm_adj(edge_index, num_nodes)
    out_p, hn_p = tgcn_pallas(a_norm, x, params)
    # Strip lane padding; reshape to PyTorch GRU output convention.
    out = out_p[None, :, :rnn_hidden]        # [1, N, H]  (batch_first)
    h_n = hn_p[None, :, :rnn_hidden]         # [num_layers=1, 1, H]
    return out, h_n


if __name__ == "__main__":
    N = 16            # number of graph nodes (== GRU sequence length)
    GCN_IN = 8
    GCN_OUT = 32
    RNN_HIDDEN = 32

    key = jax.random.PRNGKey(0)
    k_x, k_p = jax.random.split(key)

    x = jax.random.normal(k_x, (N, GCN_IN), jnp.float32)
    # deterministic ring graph, both directions
    src = jnp.arange(N, dtype=jnp.int32)
    dst = (src + 1) % N
    edge_index = jnp.stack(
        [jnp.concatenate([src, dst]), jnp.concatenate([dst, src])], axis=0
    )  # [2, 2N]

    raw = init_params(k_p, GCN_IN, GCN_OUT, RNN_HIDDEN)
    params = prepare_params(raw)

    out, h_n = tgcn_forward(params, x, edge_index, N, RNN_HIDDEN)
    jax.block_until_ready((out, h_n))
    assert out.shape == (1, N, RNN_HIDDEN) and h_n.shape == (1, 1, RNN_HIDDEN)
    assert bool(jnp.all(jnp.isfinite(out))) and bool(jnp.all(jnp.isfinite(h_n)))
    print("KERNEL_OK")
</pallas_src>

<mosaic_0001>
module attributes {stable_mosaic.version = 11 : i64} {
  func.func private @main(%arg0: i32) attributes {dimension_semantics = [#tpu.dimension_semantics<core_parallel>], iteration_bounds = array<i64: 2>, tpu.core_type = #tpu.core_type<sc_scalar_subcore>, window_params = []} {
    return
  }
}

module attributes {stable_mosaic.version = 11 : i64} {
  func.func private @main(%arg0: i32) attributes {dimension_semantics = [#tpu.dimension_semantics<core_parallel>], iteration_bounds = array<i64: 2>, tpu.core_type = #tpu.core_type<sc_scalar_subcore>, window_params = []} {
    return
  }
}

module attributes {stable_mosaic.version = 11 : i64} {
  func.func @_tgcn_fused_kernel(%arg0: i32, %arg1: memref<16x16xf32, #tpu.memory_space<vmem>>, %arg2: memref<16x8xf32, #tpu.memory_space<vmem>>, %arg3: memref<8x128xbf16, #tpu.memory_space<vmem>>, %arg4: memref<1x128xf32, #tpu.memory_space<vmem>>, %arg5: memref<1x128xf32, #tpu.memory_space<vmem>>, %arg6: memref<128x384xbf16, #tpu.memory_space<vmem>>, %arg7: memref<128x384xbf16, #tpu.memory_space<vmem>>, %arg8: memref<1x384xf32, #tpu.memory_space<vmem>>, %arg9: memref<1x128xf32, #tpu.memory_space<vmem>>, %arg10: memref<16x128xf32, #tpu.memory_space<vmem>>, %arg11: memref<1x128xf32, #tpu.memory_space<vmem>>, %arg12: memref<16x384xf32, #tpu.memory_space<vmem>>) attributes {dimension_semantics = [#tpu.dimension_semantics<arbitrary>], iteration_bounds = array<i64: 1>, scalar_prefetch = 0 : i64, scratch_operands = 1 : i64, tpu.core_type = #tpu.core_type<tc>, window_params = [{pipeline_mode = #tpu.pipeline_mode<synchronous>, transform_indices = @transform_0, window_bounds = array<i64: 16, 16>}, {pipeline_mode = #tpu.pipeline_mode<synchronous>, transform_indices = @transform_1, window_bounds = array<i64: 16, 8>}, {pipeline_mode = #tpu.pipeline_mode<synchronous>, transform_indices = @transform_2, window_bounds = array<i64: 8, 128>}, {pipeline_mode = #tpu.pipeline_mode<synchronous>, transform_indices = @transform_3, window_bounds = array<i64: 1, 128>}, {pipeline_mode = #tpu.pipeline_mode<synchronous>, transform_indices = @transform_4, window_bounds = array<i64: 1, 128>}, {pipeline_mode = #tpu.pipeline_mode<synchronous>, transform_indices = @transform_5, window_bounds = array<i64: 128, 384>}, {pipeline_mode = #tpu.pipeline_mode<synchronous>, transform_indices = @transform_6, window_bounds = array<i64: 128, 384>}, {pipeline_mode = #tpu.pipeline_mode<synchronous>, transform_indices = @transform_7, window_bounds = array<i64: 1, 384>}, {pipeline_mode = #tpu.pipeline_mode<synchronous>, transform_indices = @transform_8, window_bounds = array<i64: 1, 128>}, {pipeline_mode = #tpu.pipeline_mode<synchronous>, transform_indices = @transform_9, window_bounds = array<i64: 16, 128>}, {pipeline_mode = #tpu.pipeline_mode<synchronous>, transform_indices = @transform_10, window_bounds = array<i64: 1, 128>}]} {
    %c0 = arith.constant 0 : index
    %c0_0 = arith.constant 0 : index
    %0 = vector.load %arg2[%c0, %c0_0] : memref<16x8xf32, #tpu.memory_space<vmem>>, vector<16x8xf32>
    %1 = arith.truncf %0 : vector<16x8xf32> to vector<16x8xbf16>
    %c0_1 = arith.constant 0 : index
    %c0_2 = arith.constant 0 : index
    %2 = vector.load %arg3[%c0_1, %c0_2] : memref<8x128xbf16, #tpu.memory_space<vmem>>, vector<8x128xbf16>
    %cst = arith.constant dense<0.000000e+00> : vector<16x128xf32>
    %3 = tpu.matmul %1, %2, %cst {dimension_numbers = #tpu.dot_dimension_numbers<[1], [0], [0], [1], [0, 0, 1, 1], [], []>} : vector<16x8xbf16>, vector<8x128xbf16>, vector<16x128xf32> -> vector<16x128xf32>
    %c0_3 = arith.constant 0 : index
    %c0_4 = arith.constant 0 : index
    %4 = vector.load %arg1[%c0_3, %c0_4] : memref<16x16xf32, #tpu.memory_space<vmem>>, vector<16x16xf32>
    %5 = arith.truncf %4 : vector<16x16xf32> to vector<16x16xbf16>
    %6 = arith.truncf %3 : vector<16x128xf32> to vector<16x128xbf16>
    %cst_5 = arith.constant dense<0.000000e+00> : vector<16x128xf32>
    %7 = tpu.matmul %5, %6, %cst_5 {dimension_numbers = #tpu.dot_dimension_numbers<[1], [0], [0], [1], [0, 0, 1, 1], [], []>} : vector<16x16xbf16>, vector<16x128xbf16>, vector<16x128xf32> -> vector<16x128xf32>
    %c0_6 = arith.constant 0 : index
    %c0_7 = arith.constant 0 : index
    %8 = vector.load %arg4[%c0_6, %c0_7] : memref<1x128xf32, #tpu.memory_space<vmem>>, vector<1x128xf32>
    %9 = vector.broadcast %8 : vector<1x128xf32> to vector<16x128xf32>
    %10 = arith.addf %7, %9 : vector<16x128xf32>
    %11 = arith.truncf %10 : vector<16x128xf32> to vector<16x128xbf16>
    %c0_8 = arith.constant 0 : index
    %c0_9 = arith.constant 0 : index
    %12 = vector.load %arg6[%c0_8, %c0_9] : memref<128x384xbf16, #tpu.memory_space<vmem>>, vector<128x384xbf16>
    %cst_10 = arith.constant dense<0.000000e+00> : vector<16x384xf32>
    %13 = tpu.matmul %11, %12, %cst_10 {dimension_numbers = #tpu.dot_dimension_numbers<[1], [0], [0], [1], [0, 0, 1, 1], [], []>} : vector<16x128xbf16>, vector<128x384xbf16>, vector<16x384xf32> -> vector<16x384xf32>
    %c0_11 = arith.constant 0 : index
    %c0_12 = arith.constant 0 : index
    %14 = vector.load %arg8[%c0_11, %c0_12] : memref<1x384xf32, #tpu.memory_space<vmem>>, vector<1x384xf32>
    %15 = vector.broadcast %14 : vector<1x384xf32> to vector<16x384xf32>
    %16 = arith.addf %13, %15 : vector<16x384xf32>
    %c0_13 = arith.constant 0 : index
    %c0_14 = arith.constant 0 : index
    %17 = vector.load %arg12[%c0_13, %c0_14] : memref<16x384xf32, #tpu.memory_space<vmem>>, vector<16x384xf32>
    tpu.vector_store %arg12[%c0_13, %c0_14], %16 {strides = array<i32>} : memref<16x384xf32, #tpu.memory_space<vmem>>, vector<16x384xf32>,
    %c0_15 = arith.constant 0 : index
    %c0_16 = arith.constant 0 : index
    %18 = vector.load %arg7[%c0_15, %c0_16] : memref<128x384xbf16, #tpu.memory_space<vmem>>, vector<128x384xbf16>
    %c0_17 = arith.constant 0 : index
    %c0_18 = arith.constant 0 : index
    %19 = vector.load %arg9[%c0_17, %c0_18] : memref<1x128xf32, #tpu.memory_space<vmem>>, vector<1x128xf32>
    %c0_19 = arith.constant 0 : index
    %c0_20 = arith.constant 0 : index
    %20 = vector.load %arg5[%c0_19, %c0_20] : memref<1x128xf32, #tpu.memory_space<vmem>>, vector<1x128xf32>
    %c0_i32 = arith.constant 0 : i32
    %c8_i32 = arith.constant 8 : i32
    %21 = arith.muli %c0_i32, %c8_i32 : i32
    %22 = tpu.assume_multiple %21, 8 : i32
    %c0_i32_21 = arith.constant 0 : i32
    %23 = arith.addi %22, %c0_i32_21 : i32
    %24 = arith.index_cast %23 : i32 to index
    %c0_22 = arith.constant 0 : index
    %25 = vector.load %arg12[%24, %c0_22] : memref<16x384xf32, #tpu.memory_space<vmem>>, vector<1x384xf32>
    %26 = arith.truncf %20 : vector<1x128xf32> to vector<1x128xbf16>
    %cst_23 = arith.constant dense<0.000000e+00> : vector<1x384xf32>
    %27 = tpu.matmul %26, %18, %cst_23 {dimension_numbers = #tpu.dot_dimension_numbers<[1], [0], [0], [1], [0, 0, 1, 1], [], []>} : vector<1x128xbf16>, vector<128x384xbf16>, vector<1x384xf32> -> vector<1x384xf32>
    %28 = vector.extract_strided_slice %25 {offsets = [0, 0], sizes = [1, 128], strides = [1, 1]} : vector<1x384xf32> to vector<1x128xf32>
    %29 = vector.extract_strided_slice %27 {offsets = [0, 0], sizes = [1, 128], strides = [1, 1]} : vector<1x384xf32> to vector<1x128xf32>
    %30 = arith.addf %28, %29 : vector<1x128xf32>
    %31 = arith.negf %30 : vector<1x128xf32>
    %32 = math.exp %31 : vector<1x128xf32>
    %cst_24 = arith.constant 1.000000e+00 : f32
    %33 = vector.broadcast %cst_24 : f32 to vector<1x128xf32>
    %34 = arith.addf %33, %32 : vector<1x128xf32>
    %35 = arith.divf %33, %34 : vector<1x128xf32>
    %36 = vector.extract_strided_slice %25 {offsets = [0, 128], sizes = [1, 128], strides = [1, 1]} : vector<1x384xf32> to vector<1x128xf32>
    %37 = vector.extract_strided_slice %27 {offsets = [0, 128], sizes = [1, 128], strides = [1, 1]} : vector<1x384xf32> to vector<1x128xf32>
    %38 = arith.addf %36, %37 : vector<1x128xf32>
    %39 = arith.negf %38 : vector<1x128xf32>
    %40 = math.exp %39 : vector<1x128xf32>
    %cst_25 = arith.constant 1.000000e+00 : f32
    %41 = vector.broadcast %cst_25 : f32 to vector<1x128xf32>
    %42 = arith.addf %41, %40 : vector<1x128xf32>
    %43 = arith.divf %41, %42 : vector<1x128xf32>
    %44 = vector.extract_strided_slice %25 {offsets = [0, 256], sizes = [1, 128], strides = [1, 1]} : vector<1x384xf32> to vector<1x128xf32>
    %45 = vector.extract_strided_slice %27 {offsets = [0, 256], sizes = [1, 128], strides = [1, 1]} : vector<1x384xf32> to vector<1x128xf32>
    %46 = arith.addf %45, %19 : vector<1x128xf32>
    %47 = arith.mulf %35, %46 : vector<1x128xf32>
    %48 = arith.addf %44, %47 : vector<1x128xf32>
    %49 = math.tanh %48 : vector<1x128xf32>
    %cst_26 = arith.constant 1.000000e+00 : f32
    %50 = vector.broadcast %cst_26 : f32 to vector<1x128xf32>
    %51 = arith.subf %50, %43 : vector<1x128xf32>
    %52 = arith.mulf %51, %49 : vector<1x128xf32>
    %53 = arith.mulf %43, %20 : vector<1x128xf32>
    %54 = arith.addf %52, %53 : vector<1x128xf32>
    %c1_i32 = arith.constant 1 : i32
    %55 = arith.addi %22, %c1_i32 : i32
    %56 = arith.index_cast %55 : i32 to index
    %c0_27 = arith.constant 0 : index
    %57 = vector.load %arg12[%56, %c0_27] : memref<16x384xf32, #tpu.memory_space<vmem>>, vector<1x384xf32>
    %58 = arith.truncf %54 : vector<1x128xf32> to vector<1x128xbf16>
    %cst_28 = arith.constant dense<0.000000e+00> : vector<1x384xf32>
    %59 = tpu.matmul %58, %18, %cst_28 {dimension_numbers = #tpu.dot_dimension_numbers<[1], [0], [0], [1], [0, 0, 1, 1], [], []>} : vector<1x128xbf16>, vector<128x384xbf16>, vector<1x384xf32> -> vector<1x384xf32>
    %60 = vector.extract_strided_slice %57 {offsets = [0, 0], sizes = [1, 128], strides = [1, 1]} : vector<1x384xf32> to vector<1x128xf32>
    %61 = vector.extract_strided_slice %59 {offsets = [0, 0], sizes = [1, 128], strides = [1, 1]} : vector<1x384xf32> to vector<1x128xf32>
    %62 = arith.addf %60, %61 : vector<1x128xf32>
    %63 = arith.negf %62 : vector<1x128xf32>
    %64 = math.exp %63 : vector<1x128xf32>
    %cst_29 = arith.constant 1.000000e+00 : f32
    %65 = vector.broadcast %cst_29 : f32 to vector<1x128xf32>
    %66 = arith.addf %65, %64 : vector<1x128xf32>
    %67 = arith.divf %65, %66 : vector<1x128xf32>
    %68 = vector.extract_strided_slice %57 {offsets = [0, 128], sizes = [1, 128], strides = [1, 1]} : vector<1x384xf32> to vector<1x128xf32>
    %69 = vector.extract_strided_slice %59 {offsets = [0, 128], sizes = [1, 128], strides = [1, 1]} : vector<1x384xf32> to vector<1x128xf32>
    %70 = arith.addf %68, %69 : vector<1x128xf32>
    %71 = arith.negf %70 : vector<1x128xf32>
    %72 = math.exp %71 : vector<1x128xf32>
    %cst_30 = arith.constant 1.000000e+00 : f32
    %73 = vector.broadcast %cst_30 : f32 to vector<1x128xf32>
    %74 = arith.addf %73, %72 : vector<1x128xf32>
    %75 = arith.divf %73, %74 : vector<1x128xf32>
    %76 = vector.extract_strided_slice %57 {offsets = [0, 256], sizes = [1, 128], strides = [1, 1]} : vector<1x384xf32> to vector<1x128xf32>
    %77 = vector.extract_strided_slice %59 {offsets = [0, 256], sizes = [1, 128], strides = [1, 1]} : vector<1x384xf32> to vector<1x128xf32>
    %78 = arith.addf %77, %19 : vector<1x128xf32>
    %79 = arith.mulf %67, %78 : vector<1x128xf32>
    %80 = arith.addf %76, %79 : vector<1x128xf32>
    %81 = math.tanh %80 : vector<1x128xf32>
    %cst_31 = arith.constant 1.000000e+00 : f32
    %82 = vector.broadcast %cst_31 : f32 to vector<1x128xf32>
    %83 = arith.subf %82, %75 : vector<1x128xf32>
    %84 = arith.mulf %83, %81 : vector<1x128xf32>
    %85 = arith.mulf %75, %54 : vector<1x128xf32>
    %86 = arith.addf %84, %85 : vector<1x128xf32>
    %c2_i32 = arith.constant 2 : i32
    %87 = arith.addi %22, %c2_i32 : i32
    %88 = arith.index_cast %87 : i32 to index
    %c0_32 = arith.constant 0 : index
    %89 = vector.load %arg12[%88, %c0_32] : memref<16x384xf32, #tpu.memory_space<vmem>>, vector<1x384xf32>
    %90 = arith.truncf %86 : vector<1x128xf32> to vector<1x128xbf16>
    %cst_33 = arith.constant dense<0.000000e+00> : vector<1x384xf32>
    %91 = tpu.matmul %90, %18, %cst_33 {dimension_numbers = #tpu.dot_dimension_numbers<[1], [0], [0], [1], [0, 0, 1, 1], [], []>} : vector<1x128xbf16>, vector<128x384xbf16>, vector<1x384xf32> -> vector<1x384xf32>
    %92 = vector.extract_strided_slice %89 {offsets = [0, 0], sizes = [1, 128], strides = [1, 1]} : vector<1x384xf32> to vector<1x128xf32>
    %93 = vector.extract_strided_slice %91 {offsets = [0, 0], sizes = [1, 128], strides = [1, 1]} : vector<1x384xf32> to vector<1x128xf32>
    %94 = arith.addf %92, %93 : vector<1x128xf32>
    %95 = arith.negf %94 : vector<1x128xf32>
    %96 = math.exp %95 : vector<1x128xf32>
    %cst_34 = arith.constant 1.000000e+00 : f32
    %97 = vector.broadcast %cst_34 : f32 to vector<1x128xf32>
    %98 = arith.addf %97, %96 : vector<1x128xf32>
    %99 = arith.divf %97, %98 : vector<1x128xf32>
    %100 = vector.extract_strided_slice %89 {offsets = [0, 128], sizes = [1, 128], strides = [1, 1]} : vector<1x384xf32> to vector<1x128xf32>
    %101 = vector.extract_strided_slice %91 {offsets = [0, 128], sizes = [1, 128], strides = [1, 1]} : vector<1x384xf32> to vector<1x128xf32>
    %102 = arith.addf %100, %101 : vector<1x128xf32>
    %103 = arith.negf %102 : vector<1x128xf32>
    %104 = math.exp %103 : vector<1x128xf32>
    %cst_35 = arith.constant 1.000000e+00 : f32
    %105 = vector.broadcast %cst_35 : f32 to vector<1x128xf32>
    %106 = arith.addf %105, %104 : vector<1x128xf32>
    %107 = arith.divf %105, %106 : vector<1x128xf32>
    %108 = vector.extract_strided_slice %89 {offsets = [0, 256], sizes = [1, 128], strides = [1, 1]} : vector<1x384xf32> to vector<1x128xf32>
    %109 = vector.extract_strided_slice %91 {offsets = [0, 256], sizes = [1, 128], strides = [1, 1]} : vector<1x384xf32> to vector<1x128xf32>
    %110 = arith.addf %109, %19 : vector<1x128xf32>
    %111 = arith.mulf %99, %110 : vector<1x128xf32>
    %112 = arith.addf %108, %111 : vector<1x128xf32>
    %113 = math.tanh %112 : vector<1x128xf32>
    %cst_36 = arith.constant 1.000000e+00 : f32
    %114 = vector.broadcast %cst_36 : f32 to vector<1x128xf32>
    %115 = arith.subf %114, %107 : vector<1x128xf32>
    %116 = arith.mulf %115, %113 : vector<1x128xf32>
    %117 = arith.mulf %107, %86 : vector<1x128xf32>
    %118 = arith.addf %116, %117 : vector<1x128xf32>
    %c3_i32 = arith.constant 3 : i32
    %119 = arith.addi %22, %c3_i32 : i32
    %120 = arith.index_cast %119 : i32 to index
    %c0_37 = arith.constant 0 : index
    %121 = vector.load %arg12[%120, %c0_37] : memref<16x384xf32, #tpu.memory_space<vmem>>, vector<1x384xf32>
    %122 = arith.truncf %118 : vector<1x128xf32> to vector<1x128xbf16>
    %cst_38 = arith.constant dense<0.000000e+00> : vector<1x384xf32>
    %123 = tpu.matmul %122, %18, %cst_38 {dimension_numbers = #tpu.dot_dimension_numbers<[1], [0], [0], [1], [0, 0, 1, 1], [], []>} : vector<1x128xbf16>, vector<128x384xbf16>, vector<1x384xf32> -> vector<1x384xf32>
    %124 = vector.extract_strided_slice %121 {offsets = [0, 0], sizes = [1, 128], strides = [1, 1]} : vector<1x384xf32> to vector<1x128xf32>
    %125 = vector.extract_strided_slice %123 {offsets = [0, 0], sizes = [1, 128], strides = [1, 1]} : vector<1x384xf32> to vector<1x128xf32>
    %126 = arith.addf %124, %125 : vector<1x128xf32>
    %127 = arith.negf %126 : vector<1x128xf32>
    %128 = math.exp %127 : vector<1x128xf32>
    %cst_39 = arith.constant 1.000000e+00 : f32
    %129 = vector.broadcast %cst_39 : f32 to vector<1x128xf32>
    %130 = arith.addf %129, %128 : vector<1x128xf32>
    %131 = arith.divf %129, %130 : vector<1x128xf32>
    %132 = vector.extract_strided_slice %121 {offsets = [0, 128], sizes = [1, 128], strides = [1, 1]} : vector<1x384xf32> to vector<1x128xf32>
    %133 = vector.extract_strided_slice %123 {offsets = [0, 128], sizes = [1, 128], strides = [1, 1]} : vector<1x384xf32> to vector<1x128xf32>
    %134 = arith.addf %132, %133 : vector<1x128xf32>
    %135 = arith.negf %134 : vector<1x128xf32>
    %136 = math.exp %135 : vector<1x128xf32>
    %cst_40 = arith.constant 1.000000e+00 : f32
    %137 = vector.broadcast %cst_40 : f32 to vector<1x128xf32>
    %138 = arith.addf %137, %136 : vector<1x128xf32>
    %139 = arith.divf %137, %138 : vector<1x128xf32>
    %140 = vector.extract_strided_slice %121 {offsets = [0, 256], sizes = [1, 128], strides = [1, 1]} : vector<1x384xf32> to vector<1x128xf32>
    %141 = vector.extract_strided_slice %123 {offsets = [0, 256], sizes = [1, 128], strides = [1, 1]} : vector<1x384xf32> to vector<1x128xf32>
    %142 = arith.addf %141, %19 : vector<1x128xf32>
    %143 = arith.mulf %131, %142 : vector<1x128xf32>
    %144 = arith.addf %140, %143 : vector<1x128xf32>
    %145 = math.tanh %144 : vector<1x128xf32>
    %cst_41 = arith.constant 1.000000e+00 : f32
    %146 = vector.broadcast %cst_41 : f32 to vector<1x128xf32>
    %147 = arith.subf %146, %139 : vector<1x128xf32>
    %148 = arith.mulf %147, %145 : vector<1x128xf32>
    %149 = arith.mulf %139, %118 : vector<1x128xf32>
    %150 = arith.addf %148, %149 : vector<1x128xf32>
    %c4_i32 = arith.constant 4 : i32
    %151 = arith.addi %22, %c4_i32 : i32
    %152 = arith.index_cast %151 : i32 to index
    %c0_42 = arith.constant 0 : index
    %153 = vector.load %arg12[%152, %c0_42] : memref<16x384xf32, #tpu.memory_space<vmem>>, vector<1x384xf32>
    %154 = arith.truncf %150 : vector<1x128xf32> to vector<1x128xbf16>
    %cst_43 = arith.constant dense<0.000000e+00> : vector<1x384xf32>
    %155 = tpu.matmul %154, %18, %cst_43 {dimension_numbers = #tpu.dot_dimension_numbers<[1], [0], [0], [1], [0, 0, 1, 1], [], []>} : vector<1x128xbf16>, vector<128x384xbf16>, vector<1x384xf32> -> vector<1x384xf32>
    %156 = vector.extract_strided_slice %153 {offsets = [0, 0], sizes = [1, 128], strides = [1, 1]} : vector<1x384xf32> to vector<1x128xf32>
    %157 = vector.extract_strided_slice %155 {offsets = [0, 0], sizes = [1, 128], strides = [1, 1]} : vector<1x384xf32> to vector<1x128xf32>
    %158 = arith.addf %156, %157 : vector<1x128xf32>
    %159 = arith.negf %158 : vector<1x128xf32>
    %160 = math.exp %159 : vector<1x128xf32>
    %cst_44 = arith.constant 1.000000e+00 : f32
    %161 = vector.broadcast %cst_44 : f32 to vector<1x128xf32>
    %162 = arith.addf %161, %160 : vector<1x128xf32>
    %163 = arith.divf %161, %162 : vector<1x128xf32>
    %164 = vector.extract_strided_slice %153 {offsets = [0, 128], sizes = [1, 128], strides = [1, 1]} : vector<1x384xf32> to vector<1x128xf32>
    %165 = vector.extract_strided_slice %155 {offsets = [0, 128], sizes = [1, 128], strides = [1, 1]} : vector<1x384xf32> to vector<1x128xf32>
    %166 = arith.addf %164, %165 : vector<1x128xf32>
    %167 = arith.negf %166 : vector<1x128xf32>
    %168 = math.exp %167 : vector<1x128xf32>
    %cst_45 = arith.constant 1.000000e+00 : f32
    %169 = vector.broadcast %cst_45 : f32 to vector<1x128xf32>
    %170 = arith.addf %169, %168 : vector<1x128xf32>
    %171 = arith.divf %169, %170 : vector<1x128xf32>
    %172 = vector.extract_strided_slice %153 {offsets = [0, 256], sizes = [1, 128], strides = [1, 1]} : vector<1x384xf32> to vector<1x128xf32>
    %173 = vector.extract_strided_slice %155 {offsets = [0, 256], sizes = [1, 128], strides = [1, 1]} : vector<1x384xf32> to vector<1x128xf32>
    %174 = arith.addf %173, %19 : vector<1x128xf32>
    %175 = arith.mulf %163, %174 : vector<1x128xf32>
    %176 = arith.addf %172, %175 : vector<1x128xf32>
    %177 = math.tanh %176 : vector<1x128xf32>
    %cst_46 = arith.constant 1.000000e+00 : f32
    %178 = vector.broadcast %cst_46 : f32 to vector<1x128xf32>
    %179 = arith.subf %178, %171 : vector<1x128xf32>
    %180 = arith.mulf %179, %177 : vector<1x128xf32>
    %181 = arith.mulf %171, %150 : vector<1x128xf32>
    %182 = arith.addf %180, %181 : vector<1x128xf32>
    %c5_i32 = arith.constant 5 : i32
    %183 = arith.addi %22, %c5_i32 : i32
    %184 = arith.index_cast %183 : i32 to index
    %c0_47 = arith.constant 0 : index
    %185 = vector.load %arg12[%184, %c0_47] : memref<16x384xf32, #tpu.memory_space<vmem>>, vector<1x384xf32>
    %186 = arith.truncf %182 : vector<1x128xf32> to vector<1x128xbf16>
    %cst_48 = arith.constant dense<0.000000e+00> : vector<1x384xf32>
    %187 = tpu.matmul %186, %18, %cst_48 {dimension_numbers = #tpu.dot_dimension_numbers<[1], [0], [0], [1], [0, 0, 1, 1], [], []>} : vector<1x128xbf16>, vector<128x384xbf16>, vector<1x384xf32> -> vector<1x384xf32>
    %188 = vector.extract_strided_slice %185 {offsets = [0, 0], sizes = [1, 128], strides = [1, 1]} : vector<1x384xf32> to vector<1x128xf32>
    %189 = vector.extract_strided_slice %187 {offsets = [0, 0], sizes = [1, 128], strides = [1, 1]} : vector<1x384xf32> to vector<1x128xf32>
    %190 = arith.addf %188, %189 : vector<1x128xf32>
    %191 = arith.negf %190 : vector<1x128xf32>
    %192 = math.exp %191 : vector<1x128xf32>
    %cst_49 = arith.constant 1.000000e+00 : f32
    %193 = vector.broadcast %cst_49 : f32 to vector<1x128xf32>
    %194 = arith.addf %193, %192 : vector<1x128xf32>
    %195 = arith.divf %193, %194 : vector<1x128xf32>
    %196 = vector.extract_strided_slice %185 {offsets = [0, 128], sizes = [1, 128], strides = [1, 1]} : vector<1x384xf32> to vector<1x128xf32>
    %197 = vector.extract_strided_slice %187 {offsets = [0, 128], sizes = [1, 128], strides = [1, 1]} : vector<1x384xf32> to vector<1x128xf32>
    %198 = arith.addf %196, %197 : vector<1x128xf32>
    %199 = arith.negf %198 : vector<1x128xf32>
    %200 = math.exp %199 : vector<1x128xf32>
    %cst_50 = arith.constant 1.000000e+00 : f32
    %201 = vector.broadcast %cst_50 : f32 to vector<1x128xf32>
    %202 = arith.addf %201, %200 : vector<1x128xf32>
    %203 = arith.divf %201, %202 : vector<1x128xf32>
    %204 = vector.extract_strided_slice %185 {offsets = [0, 256], sizes = [1, 128], strides = [1, 1]} : vector<1x384xf32> to vector<1x128xf32>
    %205 = vector.extract_strided_slice %187 {offsets = [0, 256], sizes = [1, 128], strides = [1, 1]} : vector<1x384xf32> to vector<1x128xf32>
    %206 = arith.addf %205, %19 : vector<1x128xf32>
    %207 = arith.mulf %195, %206 : vector<1x128xf32>
    %208 = arith.addf %204, %207 : vector<1x128xf32>
    %209 = math.tanh %208 : vector<1x128xf32>
    %cst_51 = arith.constant 1.000000e+00 : f32
    %210 = vector.broadcast %cst_51 : f32 to vector<1x128xf32>
    %211 = arith.subf %210, %203 : vector<1x128xf32>
    %212 = arith.mulf %211, %209 : vector<1x128xf32>
    %213 = arith.mulf %203, %182 : vector<1x128xf32>
    %214 = arith.addf %212, %213 : vector<1x128xf32>
    %c6_i32 = arith.constant 6 : i32
    %215 = arith.addi %22, %c6_i32 : i32
    %216 = arith.index_cast %215 : i32 to index
    %c0_52 = arith.constant 0 : index
    %217 = vector.load %arg12[%216, %c0_52] : memref<16x384xf32, #tpu.memory_space<vmem>>, vector<1x384xf32>
    %218 = arith.truncf %214 : vector<1x128xf32> to vector<1x128xbf16>
    %cst_53 = arith.constant dense<0.000000e+00> : vector<1x384xf32>
    %219 = tpu.matmul %218, %18, %cst_53 {dimension_numbers = #tpu.dot_dimension_numbers<[1], [0], [0], [1], [0, 0, 1, 1], [], []>} : vector<1x128xbf16>, vector<128x384xbf16>, vector<1x384xf32> -> vector<1x384xf32>
    %220 = vector.extract_strided_slice %217 {offsets = [0, 0], sizes = [1, 128], strides = [1, 1]} : vector<1x384xf32> to vector<1x128xf32>
    %221 = vector.extract_strided_slice %219 {offsets = [0, 0], sizes = [1, 128], strides = [1, 1]} : vector<1x384xf32> to vector<1x128xf32>
    %222 = arith.addf %220, %221 : vector<1x128xf32>
    %223 = arith.negf %222 : vector<1x128xf32>
    %224 = math.exp %223 : vector<1x128xf32>
    %cst_54 = arith.constant 1.000000e+00 : f32
    %225 = vector.broadcast %cst_54 : f32 to vector<1x128xf32>
    %226 = arith.addf %225, %224 : vector<1x128xf32>
    %227 = arith.divf %225, %226 : vector<1x128xf32>
    %228 = vector.extract_strided_slice %217 {offsets = [0, 128], sizes = [1, 128], strides = [1, 1]} : vector<1x384xf32> to vector<1x128xf32>
    %229 = vector.extract_strided_slice %219 {offsets = [0, 128], sizes = [1, 128], strides = [1, 1]} : vector<1x384xf32> to vector<1x128xf32>
    %230 = arith.addf %228, %229 : vector<1x128xf32>
    %231 = arith.negf %230 : vector<1x128xf32>
    %232 = math.exp %231 : vector<1x128xf32>
    %cst_55 = arith.constant 1.000000e+00 : f32
    %233 = vector.broadcast %cst_55 : f32 to vector<1x128xf32>
    %234 = arith.addf %233, %232 : vector<1x128xf32>
    %235 = arith.divf %233, %234 : vector<1x128xf32>
    %236 = vector.extract_strided_slice %217 {offsets = [0, 256], sizes = [1, 128], strides = [1, 1]} : vector<1x384xf32> to vector<1x128xf32>
    %237 = vector.extract_strided_slice %219 {offsets = [0, 256], sizes = [1, 128], strides = [1, 1]} : vector<1x384xf32> to vector<1x128xf32>
    %238 = arith.addf %237, %19 : vector<1x128xf32>
    %239 = arith.mulf %227, %238 : vector<1x128xf32>
    %240 = arith.addf %236, %239 : vector<1x128xf32>
    %241 = math.tanh %240 : vector<1x128xf32>
    %cst_56 = arith.constant 1.000000e+00 : f32
    %242 = vector.broadcast %cst_56 : f32 to vector<1x128xf32>
    %243 = arith.subf %242, %235 : vector<1x128xf32>
    %244 = arith.mulf %243, %241 : vector<1x128xf32>
    %245 = arith.mulf %235, %214 : vector<1x128xf32>
    %246 = arith.addf %244, %245 : vector<1x128xf32>
    %c7_i32 = arith.constant 7 : i32
    %247 = arith.addi %22, %c7_i32 : i32
    %248 = arith.index_cast %247 : i32 to index
    %c0_57 = arith.constant 0 : index
    %249 = vector.load %arg12[%248, %c0_57] : memref<16x384xf32, #tpu.memory_space<vmem>>, vector<1x384xf32>
    %250 = arith.truncf %246 : vector<1x128xf32> to vector<1x128xbf16>
    %cst_58 = arith.constant dense<0.000000e+00> : vector<1x384xf32>
    %251 = tpu.matmul %250, %18, %cst_58 {dimension_numbers = #tpu.dot_dimension_numbers<[1], [0], [0], [1], [0, 0, 1, 1], [], []>} : vector<1x128xbf16>, vector<128x384xbf16>, vector<1x384xf32> -> vector<1x384xf32>
    %252 = vector.extract_strided_slice %249 {offsets = [0, 0], sizes = [1, 128], strides = [1, 1]} : vector<1x384xf32> to vector<1x128xf32>
    %253 = vector.extract_strided_slice %251 {offsets = [0, 0], sizes = [1, 128], strides = [1, 1]} : vector<1x384xf32> to vector<1x128xf32>
    %254 = arith.addf %252, %253 : vector<1x128xf32>
    %255 = arith.negf %254 : vector<1x128xf32>
    %256 = math.exp %255 : vector<1x128xf32>
    %cst_59 = arith.constant 1.000000e+00 : f32
    %257 = vector.broadcast %cst_59 : f32 to vector<1x128xf32>
    %258 = arith.addf %257, %256 : vector<1x128xf32>
    %259 = arith.divf %257, %258 : vector<1x128xf32>
    %260 = vector.extract_strided_slice %249 {offsets = [0, 128], sizes = [1, 128], strides = [1, 1]} : vector<1x384xf32> to vector<1x128xf32>
    %261 = vector.extract_strided_slice %251 {offsets = [0, 128], sizes = [1, 128], strides = [1, 1]} : vector<1x384xf32> to vector<1x128xf32>
    %262 = arith.addf %260, %261 : vector<1x128xf32>
    %263 = arith.negf %262 : vector<1x128xf32>
    %264 = math.exp %263 : vector<1x128xf32>
    %cst_60 = arith.constant 1.000000e+00 : f32
    %265 = vector.broadcast %cst_60 : f32 to vector<1x128xf32>
    %266 = arith.addf %265, %264 : vector<1x128xf32>
    %267 = arith.divf %265, %266 : vector<1x128xf32>
    %268 = vector.extract_strided_slice %249 {offsets = [0, 256], sizes = [1, 128], strides = [1, 1]} : vector<1x384xf32> to vector<1x128xf32>
    %269 = vector.extract_strided_slice %251 {offsets = [0, 256], sizes = [1, 128], strides = [1, 1]} : vector<1x384xf32> to vector<1x128xf32>
    %270 = arith.addf %269, %19 : vector<1x128xf32>
    %271 = arith.mulf %259, %270 : vector<1x128xf32>
    %272 = arith.addf %268, %271 : vector<1x128xf32>
    %273 = math.tanh %272 : vector<1x128xf32>
    %cst_61 = arith.constant 1.000000e+00 : f32
    %274 = vector.broadcast %cst_61 : f32 to vector<1x128xf32>
    %275 = arith.subf %274, %267 : vector<1x128xf32>
    %276 = arith.mulf %275, %273 : vector<1x128xf32>
    %277 = arith.mulf %267, %246 : vector<1x128xf32>
    %278 = arith.addf %276, %277 : vector<1x128xf32>
    %279 = tpu.concatenate %54, %86, %118, %150, %182, %214, %246, %278 in 0 : vector<1x128xf32>, vector<1x128xf32>, vector<1x128xf32>, vector<1x128xf32>, vector<1x128xf32>, vector<1x128xf32>, vector<1x128xf32>, vector<1x128xf32> -> vector<8x128xf32>
    %280 = arith.index_cast %22 : i32 to index
    %c0_62 = arith.constant 0 : index
    %281 = vector.load %arg10[%280, %c0_62] : memref<16x128xf32, #tpu.memory_space<vmem>>, vector<8x128xf32>
    tpu.vector_store %arg10[%280, %c0_62], %279 {strides = array<i32>} : memref<16x128xf32, #tpu.memory_space<vmem>>, vector<8x128xf32>,
    %c1_i32_63 = arith.constant 1 : i32
    %c8_i32_64 = arith.constant 8 : i32
    %282 = arith.muli %c1_i32_63, %c8_i32_64 : i32
    %283 = tpu.assume_multiple %282, 8 : i32
    %c0_i32_65 = arith.constant 0 : i32
    %284 = arith.addi %283, %c0_i32_65 : i32
    %285 = arith.index_cast %284 : i32 to index
    %c0_66 = arith.constant 0 : index
    %286 = vector.load %arg12[%285, %c0_66] : memref<16x384xf32, #tpu.memory_space<vmem>>, vector<1x384xf32>
    %287 = arith.truncf %278 : vector<1x128xf32> to vector<1x128xbf16>
    %cst_67 = arith.constant dense<0.000000e+00> : vector<1x384xf32>
    %288 = tpu.matmul %287, %18, %cst_67 {dimension_numbers = #tpu.dot_dimension_numbers<[1], [0], [0], [1], [0, 0, 1, 1], [], []>} : vector<1x128xbf16>, vector<128x384xbf16>, vector<1x384xf32> -> vector<1x384xf32>
    %289 = vector.extract_strided_slice %286 {offsets = [0, 0], sizes = [1, 128], strides = [1, 1]} : vector<1x384xf32> to vector<1x128xf32>
    %290 = vector.extract_strided_slice %288 {offsets = [0, 0], sizes = [1, 128], strides = [1, 1]} : vector<1x384xf32> to vector<1x128xf32>
    %291 = arith.addf %289, %290 : vector<1x128xf32>
    %292 = arith.negf %291 : vector<1x128xf32>
    %293 = math.exp %292 : vector<1x128xf32>
    %cst_68 = arith.constant 1.000000e+00 : f32
    %294 = vector.broadcast %cst_68 : f32 to vector<1x128xf32>
    %295 = arith.addf %294, %293 : vector<1x128xf32>
    %296 = arith.divf %294, %295 : vector<1x128xf32>
    %297 = vector.extract_strided_slice %286 {offsets = [0, 128], sizes = [1, 128], strides = [1, 1]} : vector<1x384xf32> to vector<1x128xf32>
    %298 = vector.extract_strided_slice %288 {offsets = [0, 128], sizes = [1, 128], strides = [1, 1]} : vector<1x384xf32> to vector<1x128xf32>
    %299 = arith.addf %297, %298 : vector<1x128xf32>
    %300 = arith.negf %299 : vector<1x128xf32>
    %301 = math.exp %300 : vector<1x128xf32>
    %cst_69 = arith.constant 1.000000e+00 : f32
    %302 = vector.broadcast %cst_69 : f32 to vector<1x128xf32>
    %303 = arith.addf %302, %301 : vector<1x128xf32>
    %304 = arith.divf %302, %303 : vector<1x128xf32>
    %305 = vector.extract_strided_slice %286 {offsets = [0, 256], sizes = [1, 128], strides = [1, 1]} : vector<1x384xf32> to vector<1x128xf32>
    %306 = vector.extract_strided_slice %288 {offsets = [0, 256], sizes = [1, 128], strides = [1, 1]} : vector<1x384xf32> to vector<1x128xf32>
    %307 = arith.addf %306, %19 : vector<1x128xf32>
    %308 = arith.mulf %296, %307 : vector<1x128xf32>
    %309 = arith.addf %305, %308 : vector<1x128xf32>
    %310 = math.tanh %309 : vector<1x128xf32>
    %cst_70 = arith.constant 1.000000e+00 : f32
    %311 = vector.broadcast %cst_70 : f32 to vector<1x128xf32>
    %312 = arith.subf %311, %304 : vector<1x128xf32>
    %313 = arith.mulf %312, %310 : vector<1x128xf32>
    %314 = arith.mulf %304, %278 : vector<1x128xf32>
    %315 = arith.addf %313, %314 : vector<1x128xf32>
    %c1_i32_71 = arith.constant 1 : i32
    %316 = arith.addi %283, %c1_i32_71 : i32
    %317 = arith.index_cast %316 : i32 to index
    %c0_72 = arith.constant 0 : index
    %318 = vector.load %arg12[%317, %c0_72] : memref<16x384xf32, #tpu.memory_space<vmem>>, vector<1x384xf32>
    %319 = arith.truncf %315 : vector<1x128xf32> to vector<1x128xbf16>
    %cst_73 = arith.constant dense<0.000000e+00> : vector<1x384xf32>
    %320 = tpu.matmul %319, %18, %cst_73 {dimension_numbers = #tpu.dot_dimension_numbers<[1], [0], [0], [1], [0, 0, 1, 1], [], []>} : vector<1x128xbf16>, vector<128x384xbf16>, vector<1x384xf32> -> vector<1x384xf32>
    %321 = vector.extract_strided_slice %318 {offsets = [0, 0], sizes = [1, 128], strides = [1, 1]} : vector<1x384xf32> to vector<1x128xf32>
    %322 = vector.extract_strided_slice %320 {offsets = [0, 0], sizes = [1, 128], strides = [1, 1]} : vector<1x384xf32> to vector<1x128xf32>
    %323 = arith.addf %321, %322 : vector<1x128xf32>
    %324 = arith.negf %323 : vector<1x128xf32>
    %325 = math.exp %324 : vector<1x128xf32>
    %cst_74 = arith.constant 1.000000e+00 : f32
    %326 = vector.broadcast %cst_74 : f32 to vector<1x128xf32>
    %327 = arith.addf %326, %325 : vector<1x128xf32>
    %328 = arith.divf %326, %327 : vector<1x128xf32>
    %329 = vector.extract_strided_slice %318 {offsets = [0, 128], sizes = [1, 128], strides = [1, 1]} : vector<1x384xf32> to vector<1x128xf32>
    %330 = vector.extract_strided_slice %320 {offsets = [0, 128], sizes = [1, 128], strides = [1, 1]} : vector<1x384xf32> to vector<1x128xf32>
    %331 = arith.addf %329, %330 : vector<1x128xf32>
    %332 = arith.negf %331 : vector<1x128xf32>
    %333 = math.exp %332 : vector<1x128xf32>
    %cst_75 = arith.constant 1.000000e+00 : f32
    %334 = vector.broadcast %cst_75 : f32 to vector<1x128xf32>
    %335 = arith.addf %334, %333 : vector<1x128xf32>
    %336 = arith.divf %334, %335 : vector<1x128xf32>
    %337 = vector.extract_strided_slice %318 {offsets = [0, 256], sizes = [1, 128], strides = [1, 1]} : vector<1x384xf32> to vector<1x128xf32>
    %338 = vector.extract_strided_slice %320 {offsets = [0, 256], sizes = [1, 128], strides = [1, 1]} : vector<1x384xf32> to vector<1x128xf32>
    %339 = arith.addf %338, %19 : vector<1x128xf32>
    %340 = arith.mulf %328, %339 : vector<1x128xf32>
    %341 = arith.addf %337, %340 : vector<1x128xf32>
    %342 = math.tanh %341 : vector<1x128xf32>
    %cst_76 = arith.constant 1.000000e+00 : f32
    %343 = vector.broadcast %cst_76 : f32 to vector<1x128xf32>
    %344 = arith.subf %343, %336 : vector<1x128xf32>
    %345 = arith.mulf %344, %342 : vector<1x128xf32>
    %346 = arith.mulf %336, %315 : vector<1x128xf32>
    %347 = arith.addf %345, %346 : vector<1x128xf32>
    %c2_i32_77 = arith.constant 2 : i32
    %348 = arith.addi %283, %c2_i32_77 : i32
    %349 = arith.index_cast %348 : i32 to index
    %c0_78 = arith.constant 0 : index
    %350 = vector.load %arg12[%349, %c0_78] : memref<16x384xf32, #tpu.memory_space<vmem>>, vector<1x384xf32>
    %351 = arith.truncf %347 : vector<1x128xf32> to vector<1x128xbf16>
    %cst_79 = arith.constant dense<0.000000e+00> : vector<1x384xf32>
    %352 = tpu.matmul %351, %18, %cst_79 {dimension_numbers = #tpu.dot_dimension_numbers<[1], [0], [0], [1], [0, 0, 1, 1], [], []>} : vector<1x128xbf16>, vector<128x384xbf16>, vector<1x384xf32> -> vector<1x384xf32>
    %353 = vector.extract_strided_slice %350 {offsets = [0, 0], sizes = [1, 128], strides = [1, 1]} : vector<1x384xf32> to vector<1x128xf32>
    %354 = vector.extract_strided_slice %352 {offsets = [0, 0], sizes = [1, 128], strides = [1, 1]} : vector<1x384xf32> to vector<1x128xf32>
    %355 = arith.addf %353, %354 : vector<1x128xf32>
    %356 = arith.negf %355 : vector<1x128xf32>
    %357 = math.exp %356 : vector<1x128xf32>
    %cst_80 = arith.constant 1.000000e+00 : f32
    %358 = vector.broadcast %cst_80 : f32 to vector<1x128xf32>
    %359 = arith.addf %358, %357 : vector<1x128xf32>
    %360 = arith.divf %358, %359 : vector<1x128xf32>
    %361 = vector.extract_strided_slice %350 {offsets = [0, 128], sizes = [1, 128], strides = [1, 1]} : vector<1x384xf32> to vector<1x128xf32>
    %362 = vector.extract_strided_slice %352 {offsets = [0, 128], sizes = [1, 128], strides = [1, 1]} : vector<1x384xf32> to vector<1x128xf32>
    %363 = arith.addf %361, %362 : vector<1x128xf32>
    %364 = arith.negf %363 : vector<1x128xf32>
    %365 = math.exp %364 : vector<1x128xf32>
    %cst_81 = arith.constant 1.000000e+00 : f32
    %366 = vector.broadcast %cst_81 : f32 to vector<1x128xf32>
    %367 = arith.addf %366, %365 : vector<1x128xf32>
    %368 = arith.divf %366, %367 : vector<1x128xf32>
    %369 = vector.extract_strided_slice %350 {offsets = [0, 256], sizes = [1, 128], strides = [1, 1]} : vector<1x384xf32> to vector<1x128xf32>
    %370 = vector.extract_strided_slice %352 {offsets = [0, 256], sizes = [1, 128], strides = [1, 1]} : vector<1x384xf32> to vector<1x128xf32>
    %371 = arith.addf %370, %19 : vector<1x128xf32>
    %372 = arith.mulf %360, %371 : vector<1x128xf32>
    %373 = arith.addf %369, %372 : vector<1x128xf32>
    %374 = math.tanh %373 : vector<1x128xf32>
    %cst_82 = arith.constant 1.000000e+00 : f32
    %375 = vector.broadcast %cst_82 : f32 to vector<1x128xf32>
    %376 = arith.subf %375, %368 : vector<1x128xf32>
    %377 = arith.mulf %376, %374 : vector<1x128xf32>
    %378 = arith.mulf %368, %347 : vector<1x128xf32>
    %379 = arith.addf %377, %378 : vector<1x128xf32>
    %c3_i32_83 = arith.constant 3 : i32
    %380 = arith.addi %283, %c3_i32_83 : i32
    %381 = arith.index_cast %380 : i32 to index
    %c0_84 = arith.constant 0 : index
    %382 = vector.load %arg12[%381, %c0_84] : memref<16x384xf32, #tpu.memory_space<vmem>>, vector<1x384xf32>
    %383 = arith.truncf %379 : vector<1x128xf32> to vector<1x128xbf16>
    %cst_85 = arith.constant dense<0.000000e+00> : vector<1x384xf32>
    %384 = tpu.matmul %383, %18, %cst_85 {dimension_numbers = #tpu.dot_dimension_numbers<[1], [0], [0], [1], [0, 0, 1, 1], [], []>} : vector<1x128xbf16>, vector<128x384xbf16>, vector<1x384xf32> -> vector<1x384xf32>
    %385 = vector.extract_strided_slice %382 {offsets = [0, 0], sizes = [1, 128], strides = [1, 1]} : vector<1x384xf32> to vector<1x128xf32>
    %386 = vector.extract_strided_slice %384 {offsets = [0, 0], sizes = [1, 128], strides = [1, 1]} : vector<1x384xf32> to vector<1x128xf32>
    %387 = arith.addf %385, %386 : vector<1x128xf32>
    %388 = arith.negf %387 : vector<1x128xf32>
    %389 = math.exp %388 : vector<1x128xf32>
    %cst_86 = arith.constant 1.000000e+00 : f32
    %390 = vector.broadcast %cst_86 : f32 to vector<1x128xf32>
    %391 = arith.addf %390, %389 : vector<1x128xf32>
    %392 = arith.divf %390, %391 : vector<1x128xf32>
    %393 = vector.extract_strided_slice %382 {offsets = [0, 128], sizes = [1, 128], strides = [1, 1]} : vector<1x384xf32> to vector<1x128xf32>
    %394 = vector.extract_strided_slice %384 {offsets = [0, 128], sizes = [1, 128], strides = [1, 1]} : vector<1x384xf32> to vector<1x128xf32>
    %395 = arith.addf %393, %394 : vector<1x128xf32>
    %396 = arith.negf %395 : vector<1x128xf32>
    %397 = math.exp %396 : vector<1x128xf32>
    %cst_87 = arith.constant 1.000000e+00 : f32
    %398 = vector.broadcast %cst_87 : f32 to vector<1x128xf32>
    %399 = arith.addf %398, %397 : vector<1x128xf32>
    %400 = arith.divf %398, %399 : vector<1x128xf32>
    %401 = vector.extract_strided_slice %382 {offsets = [0, 256], sizes = [1, 128], strides = [1, 1]} : vector<1x384xf32> to vector<1x128xf32>
    %402 = vector.extract_strided_slice %384 {offsets = [0, 256], sizes = [1, 128], strides = [1, 1]} : vector<1x384xf32> to vector<1x128xf32>
    %403 = arith.addf %402, %19 : vector<1x128xf32>
    %404 = arith.mulf %392, %403 : vector<1x128xf32>
    %405 = arith.addf %401, %404 : vector<1x128xf32>
    %406 = math.tanh %405 : vector<1x128xf32>
    %cst_88 = arith.constant 1.000000e+00 : f32
    %407 = vector.broadcast %cst_88 : f32 to vector<1x128xf32>
    %408 = arith.subf %407, %400 : vector<1x128xf32>
    %409 = arith.mulf %408, %406 : vector<1x128xf32>
    %410 = arith.mulf %400, %379 : vector<1x128xf32>
    %411 = arith.addf %409, %410 : vector<1x128xf32>
    %c4_i32_89 = arith.constant 4 : i32
    %412 = arith.addi %283, %c4_i32_89 : i32
    %413 = arith.index_cast %412 : i32 to index
    %c0_90 = arith.constant 0 : index
    %414 = vector.load %arg12[%413, %c0_90] : memref<16x384xf32, #tpu.memory_space<vmem>>, vector<1x384xf32>
    %415 = arith.truncf %411 : vector<1x128xf32> to vector<1x128xbf16>
    %cst_91 = arith.constant dense<0.000000e+00> : vector<1x384xf32>
    %416 = tpu.matmul %415, %18, %cst_91 {dimension_numbers = #tpu.dot_dimension_numbers<[1], [0], [0], [1], [0, 0, 1, 1], [], []>} : vector<1x128xbf16>, vector<128x384xbf16>, vector<1x384xf32> -> vector<1x384xf32>
    %417 = vector.extract_strided_slice %414 {offsets = [0, 0], sizes = [1, 128], strides = [1, 1]} : vector<1x384xf32> to vector<1x128xf32>
    %418 = vector.extract_strided_slice %416 {offsets = [0, 0], sizes = [1, 128], strides = [1, 1]} : vector<1x384xf32> to vector<1x128xf32>
    %419 = arith.addf %417, %418 : vector<1x128xf32>
    %420 = arith.negf %419 : vector<1x128xf32>
    %421 = math.exp %420 : vector<1x128xf32>
    %cst_92 = arith.constant 1.000000e+00 : f32
    %422 = vector.broadcast %cst_92 : f32 to vector<1x128xf32>
    %423 = arith.addf %422, %421 : vector<1x128xf32>
    %424 = arith.divf %422, %423 : vector<1x128xf32>
    %425 = vector.extract_strided_slice %414 {offsets = [0, 128], sizes = [1, 128], strides = [1, 1]} : vector<1x384xf32> to vector<1x128xf32>
    %426 = vector.extract_strided_slice %416 {offsets = [0, 128], sizes = [1, 128], strides = [1, 1]} : vector<1x384xf32> to vector<1x128xf32>
    %427 = arith.addf %425, %426 : vector<1x128xf32>
    %428 = arith.negf %427 : vector<1x128xf32>
    %429 = math.exp %428 : vector<1x128xf32>
    %cst_93 = arith.constant 1.000000e+00 : f32
    %430 = vector.broadcast %cst_93 : f32 to vector<1x128xf32>
    %431 = arith.addf %430, %429 : vector<1x128xf32>
    %432 = arith.divf %430, %431 : vector<1x128xf32>
    %433 = vector.extract_strided_slice %414 {offsets = [0, 256], sizes = [1, 128], strides = [1, 1]} : vector<1x384xf32> to vector<1x128xf32>
    %434 = vector.extract_strided_slice %416 {offsets = [0, 256], sizes = [1, 128], strides = [1, 1]} : vector<1x384xf32> to vector<1x128xf32>
    %435 = arith.addf %434, %19 : vector<1x128xf32>
    %436 = arith.mulf %424, %435 : vector<1x128xf32>
    %437 = arith.addf %433, %436 : vector<1x128xf32>
    %438 = math.tanh %437 : vector<1x128xf32>
    %cst_94 = arith.constant 1.000000e+00 : f32
    %439 = vector.broadcast %cst_94 : f32 to vector<1x128xf32>
    %440 = arith.subf %439, %432 : vector<1x128xf32>
    %441 = arith.mulf %440, %438 : vector<1x128xf32>
    %442 = arith.mulf %432, %411 : vector<1x128xf32>
    %443 = arith.addf %441, %442 : vector<1x128xf32>
    %c5_i32_95 = arith.constant 5 : i32
    %444 = arith.addi %283, %c5_i32_95 : i32
    %445 = arith.index_cast %444 : i32 to index
    %c0_96 = arith.constant 0 : index
    %446 = vector.load %arg12[%445, %c0_96] : memref<16x384xf32, #tpu.memory_space<vmem>>, vector<1x384xf32>
    %447 = arith.truncf %443 : vector<1x128xf32> to vector<1x128xbf16>
    %cst_97 = arith.constant dense<0.000000e+00> : vector<1x384xf32>
    %448 = tpu.matmul %447, %18, %cst_97 {dimension_numbers = #tpu.dot_dimension_numbers<[1], [0], [0], [1], [0, 0, 1, 1], [], []>} : vector<1x128xbf16>, vector<128x384xbf16>, vector<1x384xf32> -> vector<1x384xf32>
    %449 = vector.extract_strided_slice %446 {offsets = [0, 0], sizes = [1, 128], strides = [1, 1]} : vector<1x384xf32> to vector<1x128xf32>
    %450 = vector.extract_strided_slice %448 {offsets = [0, 0], sizes = [1, 128], strides = [1, 1]} : vector<1x384xf32> to vector<1x128xf32>
    %451 = arith.addf %449, %450 : vector<1x128xf32>
    %452 = arith.negf %451 : vector<1x128xf32>
    %453 = math.exp %452 : vector<1x128xf32>
    %cst_98 = arith.constant 1.000000e+00 : f32
    %454 = vector.broadcast %cst_98 : f32 to vector<1x128xf32>
    %455 = arith.addf %454, %453 : vector<1x128xf32>
    %456 = arith.divf %454, %455 : vector<1x128xf32>
    %457 = vector.extract_strided_slice %446 {offsets = [0, 128], sizes = [1, 128], strides = [1, 1]} : vector<1x384xf32> to vector<1x128xf32>
    %458 = vector.extract_strided_slice %448 {offsets = [0, 128], sizes = [1, 128], strides = [1, 1]} : vector<1x384xf32> to vector<1x128xf32>
    %459 = arith.addf %457, %458 : vector<1x128xf32>
    %460 = arith.negf %459 : vector<1x128xf32>
    %461 = math.exp %460 : vector<1x128xf32>
    %cst_99 = arith.constant 1.000000e+00 : f32
    %462 = vector.broadcast %cst_99 : f32 to vector<1x128xf32>
    %463 = arith.addf %462, %461 : vector<1x128xf32>
    %464 = arith.divf %462, %463 : vector<1x128xf32>
    %465 = vector.extract_strided_slice %446 {offsets = [0, 256], sizes = [1, 128], strides = [1, 1]} : vector<1x384xf32> to vector<1x128xf32>
    %466 = vector.extract_strided_slice %448 {offsets = [0, 256], sizes = [1, 128], strides = [1, 1]} : vector<1x384xf32> to vector<1x128xf32>
    %467 = arith.addf %466, %19 : vector<1x128xf32>
    %468 = arith.mulf %456, %467 : vector<1x128xf32>
    %469 = arith.addf %465, %468 : vector<1x128xf32>
    %470 = math.tanh %469 : vector<1x128xf32>
    %cst_100 = arith.constant 1.000000e+00 : f32
    %471 = vector.broadcast %cst_100 : f32 to vector<1x128xf32>
    %472 = arith.subf %471, %464 : vector<1x128xf32>
    %473 = arith.mulf %472, %470 : vector<1x128xf32>
    %474 = arith.mulf %464, %443 : vector<1x128xf32>
    %475 = arith.addf %473, %474 : vector<1x128xf32>
    %c6_i32_101 = arith.constant 6 : i32
    %476 = arith.addi %283, %c6_i32_101 : i32
    %477 = arith.index_cast %476 : i32 to index
    %c0_102 = arith.constant 0 : index
    %478 = vector.load %arg12[%477, %c0_102] : memref<16x384xf32, #tpu.memory_space<vmem>>, vector<1x384xf32>
    %479 = arith.truncf %475 : vector<1x128xf32> to vector<1x128xbf16>
    %cst_103 = arith.constant dense<0.000000e+00> : vector<1x384xf32>
    %480 = tpu.matmul %479, %18, %cst_103 {dimension_numbers = #tpu.dot_dimension_numbers<[1], [0], [0], [1], [0, 0, 1, 1], [], []>} : vector<1x128xbf16>, vector<128x384xbf16>, vector<1x384xf32> -> vector<1x384xf32>
    %481 = vector.extract_strided_slice %478 {offsets = [0, 0], sizes = [1, 128], strides = [1, 1]} : vector<1x384xf32> to vector<1x128xf32>
    %482 = vector.extract_strided_slice %480 {offsets = [0, 0], sizes = [1, 128], strides = [1, 1]} : vector<1x384xf32> to vector<1x128xf32>
    %483 = arith.addf %481, %482 : vector<1x128xf32>
    %484 = arith.negf %483 : vector<1x128xf32>
    %485 = math.exp %484 : vector<1x128xf32>
    %cst_104 = arith.constant 1.000000e+00 : f32
    %486 = vector.broadcast %cst_104 : f32 to vector<1x128xf32>
    %487 = arith.addf %486, %485 : vector<1x128xf32>
    %488 = arith.divf %486, %487 : vector<1x128xf32>
    %489 = vector.extract_strided_slice %478 {offsets = [0, 128], sizes = [1, 128], strides = [1, 1]} : vector<1x384xf32> to vector<1x128xf32>
    %490 = vector.extract_strided_slice %480 {offsets = [0, 128], sizes = [1, 128], strides = [1, 1]} : vector<1x384xf32> to vector<1x128xf32>
    %491 = arith.addf %489, %490 : vector<1x128xf32>
    %492 = arith.negf %491 : vector<1x128xf32>
    %493 = math.exp %492 : vector<1x128xf32>
    %cst_105 = arith.constant 1.000000e+00 : f32
    %494 = vector.broadcast %cst_105 : f32 to vector<1x128xf32>
    %495 = arith.addf %494, %493 : vector<1x128xf32>
    %496 = arith.divf %494, %495 : vector<1x128xf32>
    %497 = vector.extract_strided_slice %478 {offsets = [0, 256], sizes = [1, 128], strides = [1, 1]} : vector<1x384xf32> to vector<1x128xf32>
    %498 = vector.extract_strided_slice %480 {offsets = [0, 256], sizes = [1, 128], strides = [1, 1]} : vector<1x384xf32> to vector<1x128xf32>
    %499 = arith.addf %498, %19 : vector<1x128xf32>
    %500 = arith.mulf %488, %499 : vector<1x128xf32>
    %501 = arith.addf %497, %500 : vector<1x128xf32>
    %502 = math.tanh %501 : vector<1x128xf32>
    %cst_106 = arith.constant 1.000000e+00 : f32
    %503 = vector.broadcast %cst_106 : f32 to vector<1x128xf32>
    %504 = arith.subf %503, %496 : vector<1x128xf32>
    %505 = arith.mulf %504, %502 : vector<1x128xf32>
    %506 = arith.mulf %496, %475 : vector<1x128xf32>
    %507 = arith.addf %505, %506 : vector<1x128xf32>
    %c7_i32_107 = arith.constant 7 : i32
    %508 = arith.addi %283, %c7_i32_107 : i32
    %509 = arith.index_cast %508 : i32 to index
    %c0_108 = arith.constant 0 : index
    %510 = vector.load %arg12[%509, %c0_108] : memref<16x384xf32, #tpu.memory_space<vmem>>, vector<1x384xf32>
    %511 = arith.truncf %507 : vector<1x128xf32> to vector<1x128xbf16>
    %cst_109 = arith.constant dense<0.000000e+00> : vector<1x384xf32>
    %512 = tpu.matmul %511, %18, %cst_109 {dimension_numbers = #tpu.dot_dimension_numbers<[1], [0], [0], [1], [0, 0, 1, 1], [], []>} : vector<1x128xbf16>, vector<128x384xbf16>, vector<1x384xf32> -> vector<1x384xf32>
    %513 = vector.extract_strided_slice %510 {offsets = [0, 0], sizes = [1, 128], strides = [1, 1]} : vector<1x384xf32> to vector<1x128xf32>
    %514 = vector.extract_strided_slice %512 {offsets = [0, 0], sizes = [1, 128], strides = [1, 1]} : vector<1x384xf32> to vector<1x128xf32>
    %515 = arith.addf %513, %514 : vector<1x128xf32>
    %516 = arith.negf %515 : vector<1x128xf32>
    %517 = math.exp %516 : vector<1x128xf32>
    %cst_110 = arith.constant 1.000000e+00 : f32
    %518 = vector.broadcast %cst_110 : f32 to vector<1x128xf32>
    %519 = arith.addf %518, %517 : vector<1x128xf32>
    %520 = arith.divf %518, %519 : vector<1x128xf32>
    %521 = vector.extract_strided_slice %510 {offsets = [0, 128], sizes = [1, 128], strides = [1, 1]} : vector<1x384xf32> to vector<1x128xf32>
    %522 = vector.extract_strided_slice %512 {offsets = [0, 128], sizes = [1, 128], strides = [1, 1]} : vector<1x384xf32> to vector<1x128xf32>
    %523 = arith.addf %521, %522 : vector<1x128xf32>
    %524 = arith.negf %523 : vector<1x128xf32>
    %525 = math.exp %524 : vector<1x128xf32>
    %cst_111 = arith.constant 1.000000e+00 : f32
    %526 = vector.broadcast %cst_111 : f32 to vector<1x128xf32>
    %527 = arith.addf %526, %525 : vector<1x128xf32>
    %528 = arith.divf %526, %527 : vector<1x128xf32>
    %529 = vector.extract_strided_slice %510 {offsets = [0, 256], sizes = [1, 128], strides = [1, 1]} : vector<1x384xf32> to vector<1x128xf32>
    %530 = vector.extract_strided_slice %512 {offsets = [0, 256], sizes = [1, 128], strides = [1, 1]} : vector<1x384xf32> to vector<1x128xf32>
    %531 = arith.addf %530, %19 : vector<1x128xf32>
    %532 = arith.mulf %520, %531 : vector<1x128xf32>
    %533 = arith.addf %529, %532 : vector<1x128xf32>
    %534 = math.tanh %533 : vector<1x128xf32>
    %cst_112 = arith.constant 1.000000e+00 : f32
    %535 = vector.broadcast %cst_112 : f32 to vector<1x128xf32>
    %536 = arith.subf %535, %528 : vector<1x128xf32>
    %537 = arith.mulf %536, %534 : vector<1x128xf32>
    %538 = arith.mulf %528, %507 : vector<1x128xf32>
    %539 = arith.addf %537, %538 : vector<1x128xf32>
    %540 = tpu.concatenate %315, %347, %379, %411, %443, %475, %507, %539 in 0 : vector<1x128xf32>, vector<1x128xf32>, vector<1x128xf32>, vector<1x128xf32>, vector<1x128xf32>, vector<1x128xf32>, vector<1x128xf32>, vector<1x128xf32> -> vector<8x128xf32>
    %541 = arith.index_cast %283 : i32 to index
    %c0_113 = arith.constant 0 : index
    %542 = vector.load %arg10[%541, %c0_113] : memref<16x128xf32, #tpu.memory_space<vmem>>, vector<8x128xf32>
    tpu.vector_store %arg10[%541, %c0_113], %540 {strides = array<i32>} : memref<16x128xf32, #tpu.memory_space<vmem>>, vector<8x128xf32>,
    %c2_i32_114 = arith.constant 2 : i32
    %c0_115 = arith.constant 0 : index
    %c0_116 = arith.constant 0 : index
    %543 = vector.load %arg11[%c0_115, %c0_116] : memref<1x128xf32, #tpu.memory_space<vmem>>, vector<1x128xf32>
    tpu.vector_store %arg11[%c0_115, %c0_116], %539 {strides = array<i32>} : memref<1x128xf32, #tpu.memory_space<vmem>>, vector<1x128xf32>,
    return
  }
  func.func @transform_0(%arg0: i32) -> (i32, i32) {
    %c0_i32 = arith.constant 0 : i32
    %c0_i32_0 = arith.constant 0 : i32
    %c0_i32_1 = arith.constant 0 : i32
    return %c0_i32, %c0_i32_0 : i32, i32
  }
  func.func @transform_1(%arg0: i32) -> (i32, i32) {
    %c0_i32 = arith.constant 0 : i32
    %c0_i32_0 = arith.constant 0 : i32
    %c0_i32_1 = arith.constant 0 : i32
    return %c0_i32, %c0_i32_0 : i32, i32
  }
  func.func @transform_2(%arg0: i32) -> (i32, i32) {
    %c0_i32 = arith.constant 0 : i32
    %c0_i32_0 = arith.constant 0 : i32
    %c0_i32_1 = arith.constant 0 : i32
    return %c0_i32, %c0_i32_0 : i32, i32
  }
  func.func @transform_3(%arg0: i32) -> (i32, i32) {
    %c0_i32 = arith.constant 0 : i32
    %c0_i32_0 = arith.constant 0 : i32
    %c0_i32_1 = arith.constant 0 : i32
    return %c0_i32, %c0_i32_0 : i32, i32
  }
  func.func @transform_4(%arg0: i32) -> (i32, i32) {
    %c0_i32 = arith.constant 0 : i32
    %c0_i32_0 = arith.constant 0 : i32
    %c0_i32_1 = arith.constant 0 : i32
    return %c0_i32, %c0_i32_0 : i32, i32
  }
  func.func @transform_5(%arg0: i32) -> (i32, i32) {
    %c0_i32 = arith.constant 0 : i32
    %c0_i32_0 = arith.constant 0 : i32
    %c0_i32_1 = arith.constant 0 : i32
    return %c0_i32, %c0_i32_0 : i32, i32
  }
  func.func @transform_6(%arg0: i32) -> (i32, i32) {
    %c0_i32 = arith.constant 0 : i32
    %c0_i32_0 = arith.constant 0 : i32
    %c0_i32_1 = arith.constant 0 : i32
    return %c0_i32, %c0_i32_0 : i32, i32
  }
  func.func @transform_7(%arg0: i32) -> (i32, i32) {
    %c0_i32 = arith.constant 0 : i32
    %c0_i32_0 = arith.constant 0 : i32
    %c0_i32_1 = arith.constant 0 : i32
    return %c0_i32, %c0_i32_0 : i32, i32
  }
  func.func @transform_8(%arg0: i32) -> (i32, i32) {
    %c0_i32 = arith.constant 0 : i32
    %c0_i32_0 = arith.constant 0 : i32
    %c0_i32_1 = arith.constant 0 : i32
    return %c0_i32, %c0_i32_0 : i32, i32
  }
  func.func @transform_9(%arg0: i32) -> (i32, i32) {
    %c0_i32 = arith.constant 0 : i32
    %c0_i32_0 = arith.constant 0 : i32
    %c0_i32_1 = arith.constant 0 : i32
    return %c0_i32, %c0_i32_0 : i32, i32
  }
  func.func @transform_10(%arg0: i32) -> (i32, i32) {
    %c0_i32 = arith.constant 0 : i32
    %c0_i32_0 = arith.constant 0 : i32
    %c0_i32_1 = arith.constant 0 : i32
    return %c0_i32, %c0_i32_0 : i32, i32
  }
}

</mosaic_0001>

<llo_original>
// kernel: tgcn_forward.1
$region0: #{tgcn_forward.1}
  #allocation0 [shape = 'u32[]', space=smem, size = 0x4, offset = 0x4, fixed_abs, tag = 'smem constant byte address 0x4 - core index']
  #allocation1 [shape = 'u32[144,128]{1,0:T(1,128)}', space=vmem, size = 0x12000, scoped, tag = 'internal scratch']
  #allocation2 [shape = 'f32[16,384]{1,0:T(8,128)}', space=vmem, size = 0x6000, scoped, tag = 'scratch operand']
  %s0 = inlined_call_operand.vmem [shape: f32[16,16], index: 0, kind: input, shape index: {}]
  %s1 = inlined_call_operand.vmem [shape: f32[16,8], index: 1, kind: input, shape index: {}]
  %s2 = inlined_call_operand.vmem [shape: bf16[8,128], index: 2, kind: input, shape index: {}]
  %s3 = inlined_call_operand.vmem [shape: f32[1,128], index: 3, kind: input, shape index: {}]
  %s4 = inlined_call_operand.vmem [shape: f32[1,128], index: 4, kind: input, shape index: {}]
  %s5 = inlined_call_operand.vmem [shape: bf16[128,384], index: 5, kind: input, shape index: {}]
  %s6 = inlined_call_operand.vmem [shape: bf16[128,384], index: 6, kind: input, shape index: {}]
  %s7 = inlined_call_operand.vmem [shape: f32[1,384], index: 7, kind: input, shape index: {}]
  %s8 = inlined_call_operand.vmem [shape: f32[1,128], index: 8, kind: input, shape index: {}]
  %s9 = inlined_call_operand.vmem [shape: f32[16,128], index: 9, kind: output, shape index: {0}]
  %s10 = inlined_call_operand.vmem [shape: f32[1,128], index: 10, kind: output, shape index: {1}]
  %11 = xla_tuple %s9, %s10
  %s12 = sld [smem:[#allocation0]]
  $region54: #{tgcn_forward.1} parent=0
    _
  %s14 = ssub.s32 1, %s12
  %s15 = scalar_select 0, %s14, %s12
  // Predicated region
  $region2: #{tgcn_forward.1} parent=0 // pred_check
    _
  $region3: #{tgcn_forward.1} parent=0 // pred_check_branch
    %17 = sbr.rel (0) target = $region5
  $region4: #{tgcn_forward.1} parent=0 // pred_region
    _
  $region5: #{tgcn_forward.1} parent=0 // pred_fallthru
    _
  // Predicated region
  $region6: #{tgcn_forward.1} parent=0 // pred_check
    _
  $region7: #{tgcn_forward.1} parent=0 // pred_check_branch
    %19 = sbr.rel (0) target = $region9
  $region8: #{tgcn_forward.1} parent=0 // pred_region
    _
  $region9: #{tgcn_forward.1} parent=0 // pred_fallthru
    _
  // Predicated region
  $region10: #{tgcn_forward.1} parent=0 // pred_check
    _
  $region11: #{tgcn_forward.1} parent=0 // pred_check_branch
    %21 = sbr.rel (0) target = $region13
  $region12: #{tgcn_forward.1} parent=0 // pred_region
    _
  $region13: #{tgcn_forward.1} parent=0 // pred_fallthru
    _
  // Predicated region
  $region14: #{tgcn_forward.1} parent=0 // pred_check
    _
  $region15: #{tgcn_forward.1} parent=0 // pred_check_branch
    %23 = sbr.rel (0) target = $region17
  $region16: #{tgcn_forward.1} parent=0 // pred_region
    _
  $region17: #{tgcn_forward.1} parent=0 // pred_fallthru
    _
  // Predicated region
  $region18: #{tgcn_forward.1} parent=0 // pred_check
    _
  $region19: #{tgcn_forward.1} parent=0 // pred_check_branch
    %25 = sbr.rel (0) target = $region21
  $region20: #{tgcn_forward.1} parent=0 // pred_region
    _
  $region21: #{tgcn_forward.1} parent=0 // pred_fallthru
    _
  // Predicated region
  $region22: #{tgcn_forward.1} parent=0 // pred_check
    _
  $region23: #{tgcn_forward.1} parent=0 // pred_check_branch
    %27 = sbr.rel (0) target = $region25
  $region24: #{tgcn_forward.1} parent=0 // pred_region
    _
  $region25: #{tgcn_forward.1} parent=0 // pred_fallthru
    _
  // Predicated region
  $region26: #{tgcn_forward.1} parent=0 // pred_check
    _
  $region27: #{tgcn_forward.1} parent=0 // pred_check_branch
    %29 = sbr.rel (0) target = $region29
  $region28: #{tgcn_forward.1} parent=0 // pred_region
    _
  $region29: #{tgcn_forward.1} parent=0 // pred_fallthru
    _
  // Predicated region
  $region30: #{tgcn_forward.1} parent=0 // pred_check
    _
  $region31: #{tgcn_forward.1} parent=0 // pred_check_branch
    %31 = sbr.rel (0) target = $region33
  $region32: #{tgcn_forward.1} parent=0 // pred_region
    _
  $region33: #{tgcn_forward.1} parent=0 // pred_fallthru
    _
  // Predicated region
  $region34: #{tgcn_forward.1} parent=0 // pred_check
    _
  $region35: #{tgcn_forward.1} parent=0 // pred_check_branch
    %33 = sbr.rel (0) target = $region37
  $region36: #{tgcn_forward.1} parent=0 // pred_region
    _
  $region37: #{tgcn_forward.1} parent=0 // pred_fallthru
    _
  %v35 = vld [vmem:[%s1] sm:$0xff]
  %v36 = vld [vmem:[%s1 + $0x8] sm:$0xff]
  %v37 = vpack.c.bf16 %v36, %v35
  %v38 = vld [vmem:[%s2] sm:$0xf]
  %vm39 = vcmask 64512
  %v41 = vsel %vm39, %v37, 0
  %vm43 = vcmask 1043456
  %v45 = vsel %vm43, %v38, 0
  %47 = vmatprep.subr.bf16.mxu0 0
  %48 = vmatpush1.bf16.msra.mxu0 0
  %49 = vmatprep.subr.bf16.mxu0 0
  %50 = vmatpush1.bf16.msra.mxu0 0
  %51 = vmatprep.subr.bf16.mxu0 0
  %52 = vmatpush1.bf16.msra.mxu0 0
  %53 = vmatprep.subr.bf16.mxu0 0
  %54 = vmatpush1.bf16.msra.mxu0 0
  %55 = vmatprep.subr.bf16.mxu0 0
  %56 = vmatpush1.bf16.msra.mxu0 0
  %57 = vmatprep.subr.bf16.mxu0 0
  %58 = vmatpush1.bf16.msra.mxu0 0
  %59 = vmatprep.subr.bf16.mxu0 0
  %60 = vmatpush1.bf16.msra.mxu0 0
  %61 = vmatprep.subr.bf16.mxu0 0
  %62 = vmatpush1.bf16.msra.mxu0 %v45
  %63 = vmatprep.subr.bf16.mxu0 0
  %64 = vmatpush2.bf16.msra.mxu0 0
  %65 = vmatprep.subr.bf16.mxu0 0
  %66 = vmatpush2.bf16.msra.mxu0 0
  %67 = vmatprep.subr.bf16.mxu0 0
  %68 = vmatpush2.bf16.msra.mxu0 0
  %69 = vmatprep.subr.bf16.mxu0 0
  %70 = vmatpush2.bf16.msra.mxu0 0
  %71 = vmatprep.subr.bf16.mxu0 0
  %72 = vmatpush2.bf16.msra.mxu0 0
  %73 = vmatprep.subr.bf16.mxu0 0
  %74 = vmatpush2.bf16.msra.mxu0 0
  %75 = vmatprep.subr.bf16.mxu0 0
  %76 = vmatpush2.bf16.msra.mxu0 0
  %77 = vmatprep.subr.bf16.mxu0 0
  %78 = vmatpush2.bf16.msra.mxu0 0
  %79 = vmatprep.mubr.bf16.mxu0 0
  %80 = vmatmul.mubr.bf16.gmra.mxu0 %v41
  %v81 = vpop.f32.mrf.mxu0
  %v82 = vadd.f32 0.0, %v81
  %v83 = vpop.f32.mrf.mxu0
  %v84 = vpop.f32.mrf.mxu0
  %v85 = vadd.f32 0.0, %v84
  %v86 = vpop.f32.mrf.mxu0
  %87 = vdwg.mxu0
  %v88 = vld [vmem:[%s0] sm:$0xff]
  %v89 = vld [vmem:[%s0 + $0x8] sm:$0xff]
  %v90 = vpack.c.bf16 %v89, %v88
  %v91 = vpack.c.bf16 %v85, %v82
  %v92 = vld [vmem:[%s3] sm:$0x1]
  %v94 = vlaneseq
  %v95 = vshrl.u32 %v94, 7
  %v96 = vsub.s32 0, %v95
  %v97 = vrot.slane %v92, %v96
  %vm99 = vcmask 130048
  %v101 = vsel %vm99, %v90, 0
  %103 = vmatprep.subr.bf16.mxu0 0
  %104 = vmatpush1.bf16.msra.mxu0 0
  %105 = vmatprep.subr.bf16.mxu0 0
  %106 = vmatpush1.bf16.msra.mxu0 0
  %107 = vmatprep.subr.bf16.mxu0 0
  %108 = vmatpush1.bf16.msra.mxu0 0
  %109 = vmatprep.subr.bf16.mxu0 0
  %110 = vmatpush1.bf16.msra.mxu0 0
  %111 = vmatprep.subr.bf16.mxu0 0
  %112 = vmatpush1.bf16.msra.mxu0 0
  %113 = vmatprep.subr.bf16.mxu0 0
  %114 = vmatpush1.bf16.msra.mxu0 0
  %115 = vmatprep.subr.bf16.mxu0 0
  %116 = vmatpush1.bf16.msra.mxu0 0
  %117 = vmatprep.subr.bf16.mxu0 0
  %118 = vmatpush1.bf16.msra.mxu0 %v91
  %119 = vmatprep.subr.bf16.mxu0 0
  %120 = vmatpush2.bf16.msra.mxu0 0
  %121 = vmatprep.subr.bf16.mxu0 0
  %122 = vmatpush2.bf16.msra.mxu0 0
  %123 = vmatprep.subr.bf16.mxu0 0
  %124 = vmatpush2.bf16.msra.mxu0 0
  %125 = vmatprep.subr.bf16.mxu0 0
  %126 = vmatpush2.bf16.msra.mxu0 0
  %127 = vmatprep.subr.bf16.mxu0 0
  %128 = vmatpush2.bf16.msra.mxu0 0
  %129 = vmatprep.subr.bf16.mxu0 0
  %130 = vmatpush2.bf16.msra.mxu0 0
  %131 = vmatprep.subr.bf16.mxu0 0
  %132 = vmatpush2.bf16.msra.mxu0 0
  %133 = vmatprep.subr.bf16.mxu0 0
  %134 = vmatpush2.bf16.msra.mxu0 0
  %135 = vmatprep.mubr.bf16.mxu0 0
  %136 = vmatmul.mubr.bf16.gmra.mxu0 %v101
  %v137 = vpop.f32.mrf.mxu0
  %v138 = vadd.f32 %v97, %v137
  %v139 = vpop.f32.mrf.mxu0
  %v140 = vpop.f32.mrf.mxu0
  %v141 = vadd.f32 %v97, %v140
  %v142 = vpop.f32.mrf.mxu0
  %143 = vdwg.mxu0
  %v144 = vpack.c.bf16 %v141, %v138
  %v145 = vld [vmem:[%s5] sm:$0xff]
  %v146 = vld [vmem:[%s5 + $0x8] sm:$0xf]
  %v147 = vld [vmem:[%s5 + $0xc] sm:$0xff]
  %v148 = vld [vmem:[%s5 + $0x14] sm:$0xf]
  %v149 = vld [vmem:[%s5 + $0x18] sm:$0xff]
  %v150 = vld [vmem:[%s5 + $0x20] sm:$0xf]
  %v151 = vld [vmem:[%s5 + $0x24] sm:$0xff]
  %v152 = vld [vmem:[%s5 + $0x2c] sm:$0xf]
  %v153 = vld [vmem:[%s5 + $0x30] sm:$0xff]
  %v154 = vld [vmem:[%s5 + $0x38] sm:$0xf]
  %v155 = vld [vmem:[%s5 + $0x3c] sm:$0xff]
  %v156 = vld [vmem:[%s5 + $0x44] sm:$0xf]
  %v157 = vld [vmem:[%s5 + $0x48] sm:$0xff]
  %v158 = vld [vmem:[%s5 + $0x50] sm:$0xf]
  %v159 = vld [vmem:[%s5 + $0x54] sm:$0xff]
  %v160 = vld [vmem:[%s5 + $0x5c] sm:$0xf]
  %v161 = vld [vmem:[%s5 + $0x60] sm:$0xff]
  %v162 = vld [vmem:[%s5 + $0x68] sm:$0xf]
  %v163 = vld [vmem:[%s5 + $0x6c] sm:$0xff]
  %v164 = vld [vmem:[%s5 + $0x74] sm:$0xf]
  %v165 = vld [vmem:[%s5 + $0x78] sm:$0xff]
  %v166 = vld [vmem:[%s5 + $0x80] sm:$0xf]
  %v167 = vld [vmem:[%s5 + $0x84] sm:$0xff]
  %v168 = vld [vmem:[%s5 + $0x8c] sm:$0xf]
  %v169 = vld [vmem:[%s5 + $0x90] sm:$0xff]
  %v170 = vld [vmem:[%s5 + $0x98] sm:$0xf]
  %v171 = vld [vmem:[%s5 + $0x9c] sm:$0xff]
  %v172 = vld [vmem:[%s5 + $0xa4] sm:$0xf]
  %v173 = vld [vmem:[%s5 + $0xa8] sm:$0xff]
  %v174 = vld [vmem:[%s5 + $0xb0] sm:$0xf]
  %v175 = vld [vmem:[%s5 + $0xb4] sm:$0xff]
  %v176 = vld [vmem:[%s5 + $0xbc] sm:$0xf]
  %v177 = vld [vmem:[%s7] sm:$0x7]
  %v179 = vlaneseq
  %v180 = vshrl.u32 %v179, 7
  %v181 = vsub.s32 0, %v180
  %v182 = vrot.slane %v177, %v181
  %v183 = vlaneseq
  %v184 = vshrl.u32 %v183, 7
  %v185 = vsub.s32 1, %v184
  %v186 = vrot.slane %v177, %v185
  %v187 = vlaneseq
  %v188 = vshrl.u32 %v187, 7
  %v189 = vsub.s32 2, %v188
  %v190 = vrot.slane %v177, %v189
  %v226 = vunpack.c.l.b16 %v145
  %v227 = vunpack.c.h.b16 %v145
  %v228 = vunpack.c.l.b16 %v146
  %v229 = vunpack.c.l.b16 %v147
  %v230 = vunpack.c.h.b16 %v147
  %v231 = vunpack.c.l.b16 %v148
  %v232 = vunpack.c.l.b16 %v149
  %v233 = vunpack.c.h.b16 %v149
  %v234 = vunpack.c.l.b16 %v150
  %v235 = vunpack.c.l.b16 %v151
  %v236 = vunpack.c.h.b16 %v151
  %v237 = vunpack.c.l.b16 %v152
  %v238 = vunpack.c.l.b16 %v153
  %v239 = vunpack.c.h.b16 %v153
  %v240 = vunpack.c.l.b16 %v154
  %v241 = vunpack.c.l.b16 %v155
  %v242 = vunpack.c.h.b16 %v155
  %v243 = vunpack.c.l.b16 %v156
  %v244 = vunpack.c.l.b16 %v157
  %v245 = vunpack.c.h.b16 %v157
  %v246 = vunpack.c.l.b16 %v158
  %v247 = vunpack.c.l.b16 %v159
  %v248 = vunpack.c.h.b16 %v159
  %v249 = vunpack.c.l.b16 %v160
  %v250 = vunpack.c.l.b16 %v161
  %v251 = vunpack.c.h.b16 %v161
  %v252 = vunpack.c.l.b16 %v162
  %v253 = vunpack.c.l.b16 %v163
  %v254 = vunpack.c.h.b16 %v163
  %v255 = vunpack.c.l.b16 %v164
  %v256 = vunpack.c.l.b16 %v165
  %v257 = vunpack.c.h.b16 %v165
  %v258 = vunpack.c.l.b16 %v166
  %v259 = vunpack.c.l.b16 %v167
  %v260 = vunpack.c.h.b16 %v167
  %v261 = vunpack.c.l.b16 %v168
  %v262 = vunpack.c.l.b16 %v169
  %v263 = vunpack.c.h.b16 %v169
  %v264 = vunpack.c.l.b16 %v170
  %v265 = vunpack.c.l.b16 %v171
  %v266 = vunpack.c.h.b16 %v171
  %v267 = vunpack.c.l.b16 %v172
  %v268 = vunpack.c.l.b16 %v173
  %v269 = vunpack.c.h.b16 %v173
  %v270 = vunpack.c.l.b16 %v174
  %v271 = vunpack.c.l.b16 %v175
  %v272 = vunpack.c.h.b16 %v175
  %v273 = vunpack.c.l.b16 %v176
  %v274 = vpack.c.b16 %v229, %v226
  %v275 = vpack.c.b16 %v230, %v227
  %v276 = vpack.c.b16 %v231, %v228
  %v277 = vpack.c.b16 %v235, %v232
  %v278 = vpack.c.b16 %v236, %v233
  %v279 = vpack.c.b16 %v237, %v234
  %v280 = vpack.c.b16 %v241, %v238
  %v281 = vpack.c.b16 %v242, %v239
  %v282 = vpack.c.b16 %v243, %v240
  %v283 = vpack.c.b16 %v247, %v244
  %v284 = vpack.c.b16 %v248, %v245
  %v285 = vpack.c.b16 %v249, %v246
  %v286 = vpack.c.b16 %v253, %v250
  %v287 = vpack.c.b16 %v254, %v251
  %v288 = vpack.c.b16 %v255, %v252
  %v289 = vpack.c.b16 %v259, %v256
  %v290 = vpack.c.b16 %v260, %v257
  %v291 = vpack.c.b16 %v261, %v258
  %v292 = vpack.c.b16 %v265, %v262
  %v293 = vpack.c.b16 %v266, %v263
  %v294 = vpack.c.b16 %v267, %v264
  %v295 = vpack.c.b16 %v271, %v268
  %v296 = vpack.c.b16 %v272, %v269
  %v297 = vpack.c.b16 %v273, %v270
  %322 = vmatprep.subr.bf16.mxu0 %v296
  %323 = vmatpush1.bf16.msra.mxu0 %v295
  %324 = vmatprep.subr.bf16.mxu0 %v293
  %325 = vmatpush1.bf16.msra.mxu0 %v292
  %326 = vmatprep.subr.bf16.mxu0 %v290
  %327 = vmatpush1.bf16.msra.mxu0 %v289
  %328 = vmatprep.subr.bf16.mxu0 %v287
  %329 = vmatpush1.bf16.msra.mxu0 %v286
  %330 = vmatprep.subr.bf16.mxu0 %v284
  %331 = vmatpush1.bf16.msra.mxu0 %v283
  %332 = vmatprep.subr.bf16.mxu0 %v281
  %333 = vmatpush1.bf16.msra.mxu0 %v280
  %334 = vmatprep.subr.bf16.mxu0 %v278
  %335 = vmatpush1.bf16.msra.mxu0 %v277
  %336 = vmatprep.subr.bf16.mxu0 %v275
  %337 = vmatpush1.bf16.msra.mxu0 %v274
  %338 = vmatprep.subr.bf16.mxu0 0
  %339 = vmatpush2.bf16.msra.mxu0 0
  %340 = vmatprep.subr.bf16.mxu0 0
  %341 = vmatpush2.bf16.msra.mxu0 0
  %342 = vmatprep.subr.bf16.mxu0 0
  %343 = vmatpush2.bf16.msra.mxu0 0
  %344 = vmatprep.subr.bf16.mxu0 0
  %345 = vmatpush2.bf16.msra.mxu0 0
  %346 = vmatprep.subr.bf16.mxu0 0
  %347 = vmatpush2.bf16.msra.mxu0 0
  %348 = vmatprep.subr.bf16.mxu0 0
  %349 = vmatpush2.bf16.msra.mxu0 0
  %350 = vmatprep.subr.bf16.mxu0 0
  %351 = vmatpush2.bf16.msra.mxu0 0
  %352 = vmatprep.subr.bf16.mxu0 0
  %353 = vmatpush2.bf16.msra.mxu0 0
  %354 = vmatprep.mubr.bf16.mxu0 0
  %355 = vmatmul.mubr.bf16.gmra.mxu0 %v144
  %v356 = vpop.f32.mrf.mxu0
  %v357 = vadd.f32 %v182, %v356
  %v358 = vpop.f32.mrf.mxu0
  %v359 = vadd.f32 %v186, %v358
  %v360 = vpop.f32.mrf.mxu0
  %v361 = vadd.f32 %v182, %v360
  %v362 = vpop.f32.mrf.mxu0
  %v363 = vadd.f32 %v186, %v362
  %364 = vdwg.mxu0
  %365 = vmatprep.subr.bf16.mxu0 0
  %366 = vmatpush1.bf16.msra.mxu0 %v297
  %367 = vmatprep.subr.bf16.mxu0 0
  %368 = vmatpush1.bf16.msra.mxu0 %v294
  %369 = vmatprep.subr.bf16.mxu0 0
  %370 = vmatpush1.bf16.msra.mxu0 %v291
  %371 = vmatprep.subr.bf16.mxu0 0
  %372 = vmatpush1.bf16.msra.mxu0 %v288
  %373 = vmatprep.subr.bf16.mxu0 0
  %374 = vmatpush1.bf16.msra.mxu0 %v285
  %375 = vmatprep.subr.bf16.mxu0 0
  %376 = vmatpush1.bf16.msra.mxu0 %v282
  %377 = vmatprep.subr.bf16.mxu0 0
  %378 = vmatpush1.bf16.msra.mxu0 %v279
  %379 = vmatprep.subr.bf16.mxu0 0
  %380 = vmatpush1.bf16.msra.mxu0 %v276
  %381 = vmatprep.subr.bf16.mxu0 0
  %382 = vmatpush2.bf16.msra.mxu0 0
  %383 = vmatprep.subr.bf16.mxu0 0
  %384 = vmatpush2.bf16.msra.mxu0 0
  %385 = vmatprep.subr.bf16.mxu0 0
  %386 = vmatpush2.bf16.msra.mxu0 0
  %387 = vmatprep.subr.bf16.mxu0 0
  %388 = vmatpush2.bf16.msra.mxu0 0
  %389 = vmatprep.subr.bf16.mxu0 0
  %390 = vmatpush2.bf16.msra.mxu0 0
  %391 = vmatprep.subr.bf16.mxu0 0
  %392 = vmatpush2.bf16.msra.mxu0 0
  %393 = vmatprep.subr.bf16.mxu0 0
  %394 = vmatpush2.bf16.msra.mxu0 0
  %395 = vmatprep.subr.bf16.mxu0 0
  %396 = vmatpush2.bf16.msra.mxu0 0
  %397 = vmatprep.mubr.bf16.mxu0 0
  %398 = vmatmul.mubr.bf16.gmra.mxu0 %v144
  %v399 = vpop.f32.mrf.mxu0
  %v400 = vadd.f32 %v190, %v399
  %v401 = vpop.f32.mrf.mxu0
  %v402 = vpop.f32.mrf.mxu0
  %v403 = vadd.f32 %v190, %v402
  %v404 = vpop.f32.mrf.mxu0
  %405 = vdwg.mxu0
  %406 = vst [vmem:[#allocation2] sm:$0xff] %v357
  %407 = vst [vmem:[#allocation2 + $0x8] sm:$0xff] %v359
  %408 = vst [vmem:[#allocation2 + $0x10] sm:$0xff] %v400
  %409 = vst [vmem:[#allocation2 + $0x18] sm:$0xff] %v361
  %410 = vst [vmem:[#allocation2 + $0x20] sm:$0xff] %v363
  %411 = vst [vmem:[#allocation2 + $0x28] sm:$0xff] %v403
  %v412 = vld [vmem:[%s6] sm:$0xff]
  %v413 = vld [vmem:[%s6 + $0x8] sm:$0xf]
  %v414 = vld [vmem:[%s6 + $0xc] sm:$0xff]
  %v415 = vld [vmem:[%s6 + $0x14] sm:$0xf]
  %v416 = vld [vmem:[%s6 + $0x18] sm:$0xff]
  %v417 = vld [vmem:[%s6 + $0x20] sm:$0xf]
  %v418 = vld [vmem:[%s6 + $0x24] sm:$0xff]
  %v419 = vld [vmem:[%s6 + $0x2c] sm:$0xf]
  %v420 = vld [vmem:[%s6 + $0x30] sm:$0xff]
  %v421 = vld [vmem:[%s6 + $0x38] sm:$0xf]
  %v422 = vld [vmem:[%s6 + $0x3c] sm:$0xff]
  %v423 = vld [vmem:[%s6 + $0x44] sm:$0xf]
  %v424 = vld [vmem:[%s6 + $0x48] sm:$0xff]
  %v425 = vld [vmem:[%s6 + $0x50] sm:$0xf]
  %v426 = vld [vmem:[%s6 + $0x54] sm:$0xff]
  %v427 = vld [vmem:[%s6 + $0x5c] sm:$0xf]
  %v428 = vld [vmem:[%s6 + $0x60] sm:$0xff]
  %v429 = vld [vmem:[%s6 + $0x68] sm:$0xf]
  %v430 = vld [vmem:[%s6 + $0x6c] sm:$0xff]
  %v431 = vld [vmem:[%s6 + $0x74] sm:$0xf]
  %v432 = vld [vmem:[%s6 + $0x78] sm:$0xff]
  %v433 = vld [vmem:[%s6 + $0x80] sm:$0xf]
  %v434 = vld [vmem:[%s6 + $0x84] sm:$0xff]
  %v435 = vld [vmem:[%s6 + $0x8c] sm:$0xf]
  %v436 = vld [vmem:[%s6 + $0x90] sm:$0xff]
  %v437 = vld [vmem:[%s6 + $0x98] sm:$0xf]
  %v438 = vld [vmem:[%s6 + $0x9c] sm:$0xff]
  %v439 = vld [vmem:[%s6 + $0xa4] sm:$0xf]
  %v440 = vld [vmem:[%s6 + $0xa8] sm:$0xff]
  %v441 = vld [vmem:[%s6 + $0xb0] sm:$0xf]
  %v442 = vld [vmem:[%s6 + $0xb4] sm:$0xff]
  %v443 = vld [vmem:[%s6 + $0xbc] sm:$0xf]
  %v444 = vld [vmem:[%s8] sm:$0x1]
  %v445 = vld [vmem:[%s4] sm:$0x1]
  %s446 = smul.u32 0, 3
  %s447 = smul.addr %s446, 8
  %s448 = scalar_lea.vmem [#allocation2], %s447
  %v449 = vld [vmem:[%s448] ss:$8 sm:$0x7]
  %v450 = vpack.c.bf16 %v445, %v445
  %v483 = vunpack.c.l.b16 %v412
  %v484 = vunpack.c.h.b16 %v412
  %v485 = vunpack.c.l.b16 %v413
  %v486 = vunpack.c.l.b16 %v414
  %v487 = vunpack.c.h.b16 %v414
  %v488 = vunpack.c.l.b16 %v415
  %v489 = vunpack.c.l.b16 %v416
  %v490 = vunpack.c.h.b16 %v416
  %v491 = vunpack.c.l.b16 %v417
  %v492 = vunpack.c.l.b16 %v418
  %v493 = vunpack.c.h.b16 %v418
  %v494 = vunpack.c.l.b16 %v419
  %v495 = vunpack.c.l.b16 %v420
  %v496 = vunpack.c.h.b16 %v420
  %v497 = vunpack.c.l.b16 %v421
  %v498 = vunpack.c.l.b16 %v422
  %v499 = vunpack.c.h.b16 %v422
  %v500 = vunpack.c.l.b16 %v423
  %v501 = vunpack.c.l.b16 %v424
  %v502 = vunpack.c.h.b16 %v424
  %v503 = vunpack.c.l.b16 %v425
  %v504 = vunpack.c.l.b16 %v426
  %v505 = vunpack.c.h.b16 %v426
  %v506 = vunpack.c.l.b16 %v427
  %v507 = vunpack.c.l.b16 %v428
  %v508 = vunpack.c.h.b16 %v428
  %v509 = vunpack.c.l.b16 %v429
  %v510 = vunpack.c.l.b16 %v430
  %v511 = vunpack.c.h.b16 %v430
  %v512 = vunpack.c.l.b16 %v431
  %v513 = vunpack.c.l.b16 %v432
  %v514 = vunpack.c.h.b16 %v432
  %v515 = vunpack.c.l.b16 %v433
  %v516 = vunpack.c.l.b16 %v434
  %v517 = vunpack.c.h.b16 %v434
  %v518 = vunpack.c.l.b16 %v435
  %v519 = vunpack.c.l.b16 %v436
  %v520 = vunpack.c.h.b16 %v436
  %v521 = vunpack.c.l.b16 %v437
  %v522 = vunpack.c.l.b16 %v438
  %v523 = vunpack.c.h.b16 %v438
  %v524 = vunpack.c.l.b16 %v439
  %v525 = vunpack.c.l.b16 %v440
  %v526 = vunpack.c.h.b16 %v440
  %v527 = vunpack.c.l.b16 %v441
  %v528 = vunpack.c.l.b16 %v442
  %v529 = vunpack.c.h.b16 %v442
  %v530 = vunpack.c.l.b16 %v443
  %v531 = vpack.c.b16 %v486, %v483
  %v532 = vpack.c.b16 %v487, %v484
  %v533 = vpack.c.b16 %v488, %v485
  %v534 = vpack.c.b16 %v492, %v489
  %v535 = vpack.c.b16 %v493, %v490
  %v536 = vpack.c.b16 %v494, %v491
  %v537 = vpack.c.b16 %v498, %v495
  %v538 = vpack.c.b16 %v499, %v496
  %v539 = vpack.c.b16 %v500, %v497
  %v540 = vpack.c.b16 %v504, %v501
  %v541 = vpack.c.b16 %v505, %v502
  %v542 = vpack.c.b16 %v506, %v503
  %v543 = vpack.c.b16 %v510, %v507
  %v544 = vpack.c.b16 %v511, %v508
  %v545 = vpack.c.b16 %v512, %v509
  %v546 = vpack.c.b16 %v516, %v513
  %v547 = vpack.c.b16 %v517, %v514
  %v548 = vpack.c.b16 %v518, %v515
  %v549 = vpack.c.b16 %v522, %v519
  %v550 = vpack.c.b16 %v523, %v520
  %v551 = vpack.c.b16 %v524, %v521
  %v552 = vpack.c.b16 %v528, %v525
  %v553 = vpack.c.b16 %v529, %v526
  %v554 = vpack.c.b16 %v530, %v527
  %579 = vmatprep.subr.bf16.mxu0 %v553
  %580 = vmatpush1.bf16.msra.mxu0 %v552
  %581 = vmatprep.subr.bf16.mxu0 %v550
  %582 = vmatpush1.bf16.msra.mxu0 %v549
  %583 = vmatprep.subr.bf16.mxu0 %v547
  %584 = vmatpush1.bf16.msra.mxu0 %v546
  %585 = vmatprep.subr.bf16.mxu0 %v544
  %586 = vmatpush1.bf16.msra.mxu0 %v543
  %587 = vmatprep.subr.bf16.mxu0 %v541
  %588 = vmatpush1.bf16.msra.mxu0 %v540
  %589 = vmatprep.subr.bf16.mxu0 %v538
  %590 = vmatpush1.bf16.msra.mxu0 %v537
  %591 = vmatprep.subr.bf16.mxu0 %v535
  %592 = vmatpush1.bf16.msra.mxu0 %v534
  %593 = vmatprep.subr.bf16.mxu0 %v532
  %594 = vmatpush1.bf16.msra.mxu0 %v531
  %595 = vmatprep.subr.bf16.mxu0 0
  %596 = vmatpush2.bf16.msra.mxu0 0
  %597 = vmatprep.subr.bf16.mxu0 0
  %598 = vmatpush2.bf16.msra.mxu0 0
  %599 = vmatprep.subr.bf16.mxu0 0
  %600 = vmatpush2.bf16.msra.mxu0 0
  %601 = vmatprep.subr.bf16.mxu0 0
  %602 = vmatpush2.bf16.msra.mxu0 0
  %603 = vmatprep.subr.bf16.mxu0 0
  %604 = vmatpush2.bf16.msra.mxu0 0
  %605 = vmatprep.subr.bf16.mxu0 0
  %606 = vmatpush2.bf16.msra.mxu0 0
  %607 = vmatprep.subr.bf16.mxu0 0
  %608 = vmatpush2.bf16.msra.mxu0 0
  %609 = vmatprep.subr.bf16.mxu0 0
  %610 = vmatpush2.bf16.msra.mxu0 0
  %611 = vmatprep.mubr.bf16.mxu0 0
  %612 = vmatmul.mubr.bf16.gmra.mxu0 %v450
  %v613 = vpop.f32.mrf.mxu0
  %v614 = vadd.f32 0.0, %v613
  %v615 = vpop.f32.mrf.mxu0
  %v616 = vadd.f32 0.0, %v615
  %v617 = vpop.f32.mrf.mxu0
  %v618 = vpop.f32.mrf.mxu0
  %619 = vdwg.mxu0
  %620 = vmatprep.subr.bf16.mxu0 0
  %621 = vmatpush1.bf16.msra.mxu0 %v554
  %622 = vmatprep.subr.bf16.mxu0 0
  %623 = vmatpush1.bf16.msra.mxu0 %v551
  %624 = vmatprep.subr.bf16.mxu0 0
  %625 = vmatpush1.bf16.msra.mxu0 %v548
  %626 = vmatprep.subr.bf16.mxu0 0
  %627 = vmatpush1.bf16.msra.mxu0 %v545
  %628 = vmatprep.subr.bf16.mxu0 0
  %629 = vmatpush1.bf16.msra.mxu0 %v542
  %630 = vmatprep.subr.bf16.mxu0 0
  %631 = vmatpush1.bf16.msra.mxu0 %v539
  %632 = vmatprep.subr.bf16.mxu0 0
  %633 = vmatpush1.bf16.msra.mxu0 %v536
  %634 = vmatprep.subr.bf16.mxu0 0
  %635 = vmatpush1.bf16.msra.mxu0 %v533
  %636 = vmatprep.subr.bf16.mxu0 0
  %637 = vmatpush2.bf16.msra.mxu0 0
  %638 = vmatprep.subr.bf16.mxu0 0
  %639 = vmatpush2.bf16.msra.mxu0 0
  %640 = vmatprep.subr.bf16.mxu0 0
  %641 = vmatpush2.bf16.msra.mxu0 0
  %642 = vmatprep.subr.bf16.mxu0 0
  %643 = vmatpush2.bf16.msra.mxu0 0
  %644 = vmatprep.subr.bf16.mxu0 0
  %645 = vmatpush2.bf16.msra.mxu0 0
  %646 = vmatprep.subr.bf16.mxu0 0
  %647 = vmatpush2.bf16.msra.mxu0 0
  %648 = vmatprep.subr.bf16.mxu0 0
  %649 = vmatpush2.bf16.msra.mxu0 0
  %650 = vmatprep.subr.bf16.mxu0 0
  %651 = vmatpush2.bf16.msra.mxu0 0
  %652 = vmatprep.mubr.bf16.mxu0 0
  %653 = vmatmul.mubr.bf16.gmra.mxu0 %v450
  %v654 = vpop.f32.mrf.mxu0
  %v655 = vadd.f32 0.0, %v654
  %v656 = vpop.f32.mrf.mxu0
  %v657 = vpop.f32.mrf.mxu0
  %v658 = vpop.f32.mrf.mxu0
  %659 = vdwg.mxu0
  %v660 = vadd.f32 %v449, %v614
  %v661 = vxor.u32 %v660, 2147483648
  %v662 = vmul.f32 %v661, 1.442695
  %v663 = vpow.pop %v662
  %v664 = vadd.f32 %v663, 1.0
  %v665 = vrcp.pop %v664
  %v666 = vmul.f32 1.0, %v665
  %v668 = vrot.slane %v449, 1
  %v670 = vadd.f32 %v668, %v616
  %v671 = vxor.u32 %v670, 2147483648
  %v672 = vmul.f32 %v671, 1.442695
  %v673 = vpow.pop %v672
  %v674 = vadd.f32 %v673, 1.0
  %v675 = vrcp.pop %v674
  %v676 = vmul.f32 1.0, %v675
  %v677 = vadd.f32 %v655, %v444
  %v678 = vmul.f32 %v666, %v677
  %v679 = vrot.slane %v449, 2
  %v681 = vadd.f32 %v679, %v678
  %v682 = vtanh.pop %v681
  %v683 = vsub.f32 1.0, %v676
  %v684 = vmul.f32 %v683, %v682
  %v685 = vmul.f32 %v676, %v445
  %v686 = vadd.f32 %v684, %v685
  %s687 = sadd.s32 0, 1
  %s688 = sshra.s32 %s687, 3
  %s689 = sand.u32 %s687, 7
  %s690 = sshra.s32 %s687, 3
  %s691 = sand.u32 %s687, 7
  %s692 = smul.u32 %s688, 3
  %s693 = smul.u32 %s692, 8
  %s694 = sadd.s32 %s693, %s691
  %s695 = scalar_lea.vmem [#allocation2], %s694
  %v696 = vld [vmem:[%s695] ss:$8 sm:$0x7]
  %v697 = vpack.c.bf16 %v686, %v686
  %698 = vmatprep.subr.bf16.mxu0 %v553
  %699 = vmatpush1.bf16.msra.mxu0 %v552
  %700 = vmatprep.subr.bf16.mxu0 %v550
  %701 = vmatpush1.bf16.msra.mxu0 %v549
  %702 = vmatprep.subr.bf16.mxu0 %v547
  %703 = vmatpush1.bf16.msra.mxu0 %v546
  %704 = vmatprep.subr.bf16.mxu0 %v544
  %705 = vmatpush1.bf16.msra.mxu0 %v543
  %706 = vmatprep.subr.bf16.mxu0 %v541
  %707 = vmatpush1.bf16.msra.mxu0 %v540
  %708 = vmatprep.subr.bf16.mxu0 %v538
  %709 = vmatpush1.bf16.msra.mxu0 %v537
  %710 = vmatprep.subr.bf16.mxu0 %v535
  %711 = vmatpush1.bf16.msra.mxu0 %v534
  %712 = vmatprep.subr.bf16.mxu0 %v532
  %713 = vmatpush1.bf16.msra.mxu0 %v531
  %714 = vmatprep.subr.bf16.mxu0 0
  %715 = vmatpush2.bf16.msra.mxu0 0
  %716 = vmatprep.subr.bf16.mxu0 0
  %717 = vmatpush2.bf16.msra.mxu0 0
  %718 = vmatprep.subr.bf16.mxu0 0
  %719 = vmatpush2.bf16.msra.mxu0 0
  %720 = vmatprep.subr.bf16.mxu0 0
  %721 = vmatpush2.bf16.msra.mxu0 0
  %722 = vmatprep.subr.bf16.mxu0 0
  %723 = vmatpush2.bf16.msra.mxu0 0
  %724 = vmatprep.subr.bf16.mxu0 0
  %725 = vmatpush2.bf16.msra.mxu0 0
  %726 = vmatprep.subr.bf16.mxu0 0
  %727 = vmatpush2.bf16.msra.mxu0 0
  %728 = vmatprep.subr.bf16.mxu0 0
  %729 = vmatpush2.bf16.msra.mxu0 0
  %730 = vmatprep.mubr.bf16.mxu0 0
  %731 = vmatmul.mubr.bf16.gmra.mxu0 %v697
  %v732 = vpop.f32.mrf.mxu0
  %v733 = vadd.f32 0.0, %v732
  %v734 = vpop.f32.mrf.mxu0
  %v735 = vadd.f32 0.0, %v734
  %v736 = vpop.f32.mrf.mxu0
  %v737 = vpop.f32.mrf.mxu0
  %738 = vdwg.mxu0
  %739 = vmatprep.subr.bf16.mxu0 0
  %740 = vmatpush1.bf16.msra.mxu0 %v554
  %741 = vmatprep.subr.bf16.mxu0 0
  %742 = vmatpush1.bf16.msra.mxu0 %v551
  %743 = vmatprep.subr.bf16.mxu0 0
  %744 = vmatpush1.bf16.msra.mxu0 %v548
  %745 = vmatprep.subr.bf16.mxu0 0
  %746 = vmatpush1.bf16.msra.mxu0 %v545
  %747 = vmatprep.subr.bf16.mxu0 0
  %748 = vmatpush1.bf16.msra.mxu0 %v542
  %749 = vmatprep.subr.bf16.mxu0 0
  %750 = vmatpush1.bf16.msra.mxu0 %v539
  %751 = vmatprep.subr.bf16.mxu0 0
  %752 = vmatpush1.bf16.msra.mxu0 %v536
  %753 = vmatprep.subr.bf16.mxu0 0
  %754 = vmatpush1.bf16.msra.mxu0 %v533
  %755 = vmatprep.subr.bf16.mxu0 0
  %756 = vmatpush2.bf16.msra.mxu0 0
  %757 = vmatprep.subr.bf16.mxu0 0
  %758 = vmatpush2.bf16.msra.mxu0 0
  %759 = vmatprep.subr.bf16.mxu0 0
  %760 = vmatpush2.bf16.msra.mxu0 0
  %761 = vmatprep.subr.bf16.mxu0 0
  %762 = vmatpush2.bf16.msra.mxu0 0
  %763 = vmatprep.subr.bf16.mxu0 0
  %764 = vmatpush2.bf16.msra.mxu0 0
  %765 = vmatprep.subr.bf16.mxu0 0
  %766 = vmatpush2.bf16.msra.mxu0 0
  %767 = vmatprep.subr.bf16.mxu0 0
  %768 = vmatpush2.bf16.msra.mxu0 0
  %769 = vmatprep.subr.bf16.mxu0 0
  %770 = vmatpush2.bf16.msra.mxu0 0
  %771 = vmatprep.mubr.bf16.mxu0 0
  %772 = vmatmul.mubr.bf16.gmra.mxu0 %v697
  %v773 = vpop.f32.mrf.mxu0
  %v774 = vadd.f32 0.0, %v773
  %v775 = vpop.f32.mrf.mxu0
  %v776 = vpop.f32.mrf.mxu0
  %v777 = vpop.f32.mrf.mxu0
  %778 = vdwg.mxu0
  %v779 = vadd.f32 %v696, %v733
  %v780 = vxor.u32 %v779, 2147483648
  %v781 = vmul.f32 %v780, 1.442695
  %v782 = vpow.pop %v781
  %v783 = vadd.f32 %v782, 1.0
  %v784 = vrcp.pop %v783
  %v785 = vmul.f32 1.0, %v784
  %v787 = vrot.slane %v696, 1
  %v789 = vadd.f32 %v787, %v735
  %v790 = vxor.u32 %v789, 2147483648
  %v791 = vmul.f32 %v790, 1.442695
  %v792 = vpow.pop %v791
  %v793 = vadd.f32 %v792, 1.0
  %v794 = vrcp.pop %v793
  %v795 = vmul.f32 1.0, %v794
  %v796 = vadd.f32 %v774, %v444
  %v797 = vmul.f32 %v785, %v796
  %v798 = vrot.slane %v696, 2
  %v800 = vadd.f32 %v798, %v797
  %v801 = vtanh.pop %v800
  %v802 = vsub.f32 1.0, %v795
  %v803 = vmul.f32 %v802, %v801
  %v804 = vmul.f32 %v795, %v686
  %v805 = vadd.f32 %v803, %v804
  %s806 = sadd.s32 0, 2
  %s807 = sshra.s32 %s806, 3
  %s808 = sand.u32 %s806, 7
  %s809 = sshra.s32 %s806, 3
  %s810 = sand.u32 %s806, 7
  %s811 = smul.u32 %s807, 3
  %s812 = smul.u32 %s811, 8
  %s813 = sadd.s32 %s812, %s810
  %s814 = scalar_lea.vmem [#allocation2], %s813
  %v815 = vld [vmem:[%s814] ss:$8 sm:$0x7]
  %v816 = vpack.c.bf16 %v805, %v805
  %817 = vmatprep.subr.bf16.mxu0 %v553
  %818 = vmatpush1.bf16.msra.mxu0 %v552
  %819 = vmatprep.subr.bf16.mxu0 %v550
  %820 = vmatpush1.bf16.msra.mxu0 %v549
  %821 = vmatprep.subr.bf16.mxu0 %v547
  %822 = vmatpush1.bf16.msra.mxu0 %v546
  %823 = vmatprep.subr.bf16.mxu0 %v544
  %824 = vmatpush1.bf16.msra.mxu0 %v543
  %825 = vmatprep.subr.bf16.mxu0 %v541
  %826 = vmatpush1.bf16.msra.mxu0 %v540
  %827 = vmatprep.subr.bf16.mxu0 %v538
  %828 = vmatpush1.bf16.msra.mxu0 %v537
  %829 = vmatprep.subr.bf16.mxu0 %v535
  %830 = vmatpush1.bf16.msra.mxu0 %v534
  %831 = vmatprep.subr.bf16.mxu0 %v532
  %832 = vmatpush1.bf16.msra.mxu0 %v531
  %833 = vmatprep.subr.bf16.mxu0 0
  %834 = vmatpush2.bf16.msra.mxu0 0
  %835 = vmatprep.subr.bf16.mxu0 0
  %836 = vmatpush2.bf16.msra.mxu0 0
  %837 = vmatprep.subr.bf16.mxu0 0
  %838 = vmatpush2.bf16.msra.mxu0 0
  %839 = vmatprep.subr.bf16.mxu0 0
  %840 = vmatpush2.bf16.msra.mxu0 0
  %841 = vmatprep.subr.bf16.mxu0 0
  %842 = vmatpush2.bf16.msra.mxu0 0
  %843 = vmatprep.subr.bf16.mxu0 0
  %844 = vmatpush2.bf16.msra.mxu0 0
  %845 = vmatprep.subr.bf16.mxu0 0
  %846 = vmatpush2.bf16.msra.mxu0 0
  %847 = vmatprep.subr.bf16.mxu0 0
  %848 = vmatpush2.bf16.msra.mxu0 0
  %849 = vmatprep.mubr.bf16.mxu0 0
  %850 = vmatmul.mubr.bf16.gmra.mxu0 %v816
  %v851 = vpop.f32.mrf.mxu0
  %v852 = vadd.f32 0.0, %v851
  %v853 = vpop.f32.mrf.mxu0
  %v854 = vadd.f32 0.0, %v853
  %v855 = vpop.f32.mrf.mxu0
  %v856 = vpop.f32.mrf.mxu0
  %857 = vdwg.mxu0
  %858 = vmatprep.subr.bf16.mxu0 0
  %859 = vmatpush1.bf16.msra.mxu0 %v554
  %860 = vmatprep.subr.bf16.mxu0 0
  %861 = vmatpush1.bf16.msra.mxu0 %v551
  %862 = vmatprep.subr.bf16.mxu0 0
  %863 = vmatpush1.bf16.msra.mxu0 %v548
  %864 = vmatprep.subr.bf16.mxu0 0
  %865 = vmatpush1.bf16.msra.mxu0 %v545
  %866 = vmatprep.subr.bf16.mxu0 0
  %867 = vmatpush1.bf16.msra.mxu0 %v542
  %868 = vmatprep.subr.bf16.mxu0 0
  %869 = vmatpush1.bf16.msra.mxu0 %v539
  %870 = vmatprep.subr.bf16.mxu0 0
  %871 = vmatpush1.bf16.msra.mxu0 %v536
  %872 = vmatprep.subr.bf16.mxu0 0
  %873 = vmatpush1.bf16.msra.mxu0 %v533
  %874 = vmatprep.subr.bf16.mxu0 0
  %875 = vmatpush2.bf16.msra.mxu0 0
  %876 = vmatprep.subr.bf16.mxu0 0
  %877 = vmatpush2.bf16.msra.mxu0 0
  %878 = vmatprep.subr.bf16.mxu0 0
  %879 = vmatpush2.bf16.msra.mxu0 0
  %880 = vmatprep.subr.bf16.mxu0 0
  %881 = vmatpush2.bf16.msra.mxu0 0
  %882 = vmatprep.subr.bf16.mxu0 0
  %883 = vmatpush2.bf16.msra.mxu0 0
  %884 = vmatprep.subr.bf16.mxu0 0
  %885 = vmatpush2.bf16.msra.mxu0 0
  %886 = vmatprep.subr.bf16.mxu0 0
  %887 = vmatpush2.bf16.msra.mxu0 0
  %888 = vmatprep.subr.bf16.mxu0 0
  %889 = vmatpush2.bf16.msra.mxu0 0
  %890 = vmatprep.mubr.bf16.mxu0 0
  %891 = vmatmul.mubr.bf16.gmra.mxu0 %v816
  %v892 = vpop.f32.mrf.mxu0
  %v893 = vadd.f32 0.0, %v892
  %v894 = vpop.f32.mrf.mxu0
  %v895 = vpop.f32.mrf.mxu0
  %v896 = vpop.f32.mrf.mxu0
  %897 = vdwg.mxu0
  %v898 = vadd.f32 %v815, %v852
  %v899 = vxor.u32 %v898, 2147483648
  %v900 = vmul.f32 %v899, 1.442695
  %v901 = vpow.pop %v900
  %v902 = vadd.f32 %v901, 1.0
  %v903 = vrcp.pop %v902
  %v904 = vmul.f32 1.0, %v903
  %v906 = vrot.slane %v815, 1
  %v908 = vadd.f32 %v906, %v854
  %v909 = vxor.u32 %v908, 2147483648
  %v910 = vmul.f32 %v909, 1.442695
  %v911 = vpow.pop %v910
  %v912 = vadd.f32 %v911, 1.0
  %v913 = vrcp.pop %v912
  %v914 = vmul.f32 1.0, %v913
  %v915 = vadd.f32 %v893, %v444
  %v916 = vmul.f32 %v904, %v915
  %v917 = vrot.slane %v815, 2
  %v919 = vadd.f32 %v917, %v916
  %v920 = vtanh.pop %v919
  %v921 = vsub.f32 1.0, %v914
  %v922 = vmul.f32 %v921, %v920
  %v923 = vmul.f32 %v914, %v805
  %v924 = vadd.f32 %v922, %v923
  %s925 = sadd.s32 0, 3
  %s926 = sshra.s32 %s925, 3
  %s927 = sand.u32 %s925, 7
  %s928 = sshra.s32 %s925, 3
  %s929 = sand.u32 %s925, 7
  %s930 = smul.u32 %s926, 3
  %s931 = smul.u32 %s930, 8
  %s932 = sadd.s32 %s931, %s929
  %s933 = scalar_lea.vmem [#allocation2], %s932
  %v934 = vld [vmem:[%s933] ss:$8 sm:$0x7]
  %v935 = vpack.c.bf16 %v924, %v924
  %936 = vmatprep.subr.bf16.mxu0 %v553
  %937 = vmatpush1.bf16.msra.mxu0 %v552
  %938 = vmatprep.subr.bf16.mxu0 %v550
  %939 = vmatpush1.bf16.msra.mxu0 %v549
  %940 = vmatprep.subr.bf16.mxu0 %v547
  %941 = vmatpush1.bf16.msra.mxu0 %v546
  %942 = vmatprep.subr.bf16.mxu0 %v544
  %943 = vmatpush1.bf16.msra.mxu0 %v543
  %944 = vmatprep.subr.bf16.mxu0 %v541
  %945 = vmatpush1.bf16.msra.mxu0 %v540
  %946 = vmatprep.subr.bf16.mxu0 %v538
  %947 = vmatpush1.bf16.msra.mxu0 %v537
  %948 = vmatprep.subr.bf16.mxu0 %v535
  %949 = vmatpush1.bf16.msra.mxu0 %v534
  %950 = vmatprep.subr.bf16.mxu0 %v532
  %951 = vmatpush1.bf16.msra.mxu0 %v531
  %952 = vmatprep.subr.bf16.mxu0 0
  %953 = vmatpush2.bf16.msra.mxu0 0
  %954 = vmatprep.subr.bf16.mxu0 0
  %955 = vmatpush2.bf16.msra.mxu0 0
  %956 = vmatprep.subr.bf16.mxu0 0
  %957 = vmatpush2.bf16.msra.mxu0 0
  %958 = vmatprep.subr.bf16.mxu0 0
  %959 = vmatpush2.bf16.msra.mxu0 0
  %960 = vmatprep.subr.bf16.mxu0 0
  %961 = vmatpush2.bf16.msra.mxu0 0
  %962 = vmatprep.subr.bf16.mxu0 0
  %963 = vmatpush2.bf16.msra.mxu0 0
  %964 = vmatprep.subr.bf16.mxu0 0
  %965 = vmatpush2.bf16.msra.mxu0 0
  %966 = vmatprep.subr.bf16.mxu0 0
  %967 = vmatpush2.bf16.msra.mxu0 0
  %968 = vmatprep.mubr.bf16.mxu0 0
  %969 = vmatmul.mubr.bf16.gmra.mxu0 %v935
  %v970 = vpop.f32.mrf.mxu0
  %v971 = vadd.f32 0.0, %v970
  %v972 = vpop.f32.mrf.mxu0
  %v973 = vadd.f32 0.0, %v972
  %v974 = vpop.f32.mrf.mxu0
  %v975 = vpop.f32.mrf.mxu0
  %976 = vdwg.mxu0
  %977 = vmatprep.subr.bf16.mxu0 0
  %978 = vmatpush1.bf16.msra.mxu0 %v554
  %979 = vmatprep.subr.bf16.mxu0 0
  %980 = vmatpush1.bf16.msra.mxu0 %v551
  %981 = vmatprep.subr.bf16.mxu0 0
  %982 = vmatpush1.bf16.msra.mxu0 %v548
  %983 = vmatprep.subr.bf16.mxu0 0
  %984 = vmatpush1.bf16.msra.mxu0 %v545
  %985 = vmatprep.subr.bf16.mxu0 0
  %986 = vmatpush1.bf16.msra.mxu0 %v542
  %987 = vmatprep.subr.bf16.mxu0 0
  %988 = vmatpush1.bf16.msra.mxu0 %v539
  %989 = vmatprep.subr.bf16.mxu0 0
  %990 = vmatpush1.bf16.msra.mxu0 %v536
  %991 = vmatprep.subr.bf16.mxu0 0
  %992 = vmatpush1.bf16.msra.mxu0 %v533
  %993 = vmatprep.subr.bf16.mxu0 0
  %994 = vmatpush2.bf16.msra.mxu0 0
  %995 = vmatprep.subr.bf16.mxu0 0
  %996 = vmatpush2.bf16.msra.mxu0 0
  %997 = vmatprep.subr.bf16.mxu0 0
  %998 = vmatpush2.bf16.msra.mxu0 0
  %999 = vmatprep.subr.bf16.mxu0 0
  %1000 = vmatpush2.bf16.msra.mxu0 0
  %1001 = vmatprep.subr.bf16.mxu0 0
  %1002 = vmatpush2.bf16.msra.mxu0 0
  %1003 = vmatprep.subr.bf16.mxu0 0
  %1004 = vmatpush2.bf16.msra.mxu0 0
  %1005 = vmatprep.subr.bf16.mxu0 0
  %1006 = vmatpush2.bf16.msra.mxu0 0
  %1007 = vmatprep.subr.bf16.mxu0 0
  %1008 = vmatpush2.bf16.msra.mxu0 0
  %1009 = vmatprep.mubr.bf16.mxu0 0
  %1010 = vmatmul.mubr.bf16.gmra.mxu0 %v935
  %v1011 = vpop.f32.mrf.mxu0
  %v1012 = vadd.f32 0.0, %v1011
  %v1013 = vpop.f32.mrf.mxu0
  %v1014 = vpop.f32.mrf.mxu0
  %v1015 = vpop.f32.mrf.mxu0
  %1016 = vdwg.mxu0
  %v1017 = vadd.f32 %v934, %v971
  %v1018 = vxor.u32 %v1017, 2147483648
  %v1019 = vmul.f32 %v1018, 1.442695
  %v1020 = vpow.pop %v1019
  %v1021 = vadd.f32 %v1020, 1.0
  %v1022 = vrcp.pop %v1021
  %v1023 = vmul.f32 1.0, %v1022
  %v1025 = vrot.slane %v934, 1
  %v1027 = vadd.f32 %v1025, %v973
  %v1028 = vxor.u32 %v1027, 2147483648
  %v1029 = vmul.f32 %v1028, 1.442695
  %v1030 = vpow.pop %v1029
  %v1031 = vadd.f32 %v1030, 1.0
  %v1032 = vrcp.pop %v1031
  %v1033 = vmul.f32 1.0, %v1032
  %v1034 = vadd.f32 %v1012, %v444
  %v1035 = vmul.f32 %v1023, %v1034
  %v1036 = vrot.slane %v934, 2
  %v1038 = vadd.f32 %v1036, %v1035
  %v1039 = vtanh.pop %v1038
  %v1040 = vsub.f32 1.0, %v1033
  %v1041 = vmul.f32 %v1040, %v1039
  %v1042 = vmul.f32 %v1033, %v924
  %v1043 = vadd.f32 %v1041, %v1042
  %s1044 = sadd.s32 0, 4
  %s1045 = sshra.s32 %s1044, 3
  %s1046 = sand.u32 %s1044, 7
  %s1047 = sshra.s32 %s1044, 3
  %s1048 = sand.u32 %s1044, 7
  %s1049 = smul.u32 %s1045, 3
  %s1050 = smul.u32 %s1049, 8
  %s1051 = sadd.s32 %s1050, %s1048
  %s1052 = scalar_lea.vmem [#allocation2], %s1051
  %v1053 = vld [vmem:[%s1052] ss:$8 sm:$0x7]
  %v1054 = vpack.c.bf16 %v1043, %v1043
  %1055 = vmatprep.subr.bf16.mxu0 %v553
  %1056 = vmatpush1.bf16.msra.mxu0 %v552
  %1057 = vmatprep.subr.bf16.mxu0 %v550
  %1058 = vmatpush1.bf16.msra.mxu0 %v549
  %1059 = vmatprep.subr.bf16.mxu0 %v547
  %1060 = vmatpush1.bf16.msra.mxu0 %v546
  %1061 = vmatprep.subr.bf16.mxu0 %v544
  %1062 = vmatpush1.bf16.msra.mxu0 %v543
  %1063 = vmatprep.subr.bf16.mxu0 %v541
  %1064 = vmatpush1.bf16.msra.mxu0 %v540
  %1065 = vmatprep.subr.bf16.mxu0 %v538
  %1066 = vmatpush1.bf16.msra.mxu0 %v537
  %1067 = vmatprep.subr.bf16.mxu0 %v535
  %1068 = vmatpush1.bf16.msra.mxu0 %v534
  %1069 = vmatprep.subr.bf16.mxu0 %v532
  %1070 = vmatpush1.bf16.msra.mxu0 %v531
  %1071 = vmatprep.subr.bf16.mxu0 0
  %1072 = vmatpush2.bf16.msra.mxu0 0
  %1073 = vmatprep.subr.bf16.mxu0 0
  %1074 = vmatpush2.bf16.msra.mxu0 0
  %1075 = vmatprep.subr.bf16.mxu0 0
  %1076 = vmatpush2.bf16.msra.mxu0 0
  %1077 = vmatprep.subr.bf16.mxu0 0
  %1078 = vmatpush2.bf16.msra.mxu0 0
  %1079 = vmatprep.subr.bf16.mxu0 0
  %1080 = vmatpush2.bf16.msra.mxu0 0
  %1081 = vmatprep.subr.bf16.mxu0 0
  %1082 = vmatpush2.bf16.msra.mxu0 0
  %1083 = vmatprep.subr.bf16.mxu0 0
  %1084 = vmatpush2.bf16.msra.mxu0 0
  %1085 = vmatprep.subr.bf16.mxu0 0
  %1086 = vmatpush2.bf16.msra.mxu0 0
  %1087 = vmatprep.mubr.bf16.mxu0 0
  %1088 = vmatmul.mubr.bf16.gmra.mxu0 %v1054
  %v1089 = vpop.f32.mrf.mxu0
  %v1090 = vadd.f32 0.0, %v1089
  %v1091 = vpop.f32.mrf.mxu0
  %v1092 = vadd.f32 0.0, %v1091
  %v1093 = vpop.f32.mrf.mxu0
  %v1094 = vpop.f32.mrf.mxu0
  %1095 = vdwg.mxu0
  %1096 = vmatprep.subr.bf16.mxu0 0
  %1097 = vmatpush1.bf16.msra.mxu0 %v554
  %1098 = vmatprep.subr.bf16.mxu0 0
  %1099 = vmatpush1.bf16.msra.mxu0 %v551
  %1100 = vmatprep.subr.bf16.mxu0 0
  %1101 = vmatpush1.bf16.msra.mxu0 %v548
  %1102 = vmatprep.subr.bf16.mxu0 0
  %1103 = vmatpush1.bf16.msra.mxu0 %v545
  %1104 = vmatprep.subr.bf16.mxu0 0
  %1105 = vmatpush1.bf16.msra.mxu0 %v542
  %1106 = vmatprep.subr.bf16.mxu0 0
  %1107 = vmatpush1.bf16.msra.mxu0 %v539
  %1108 = vmatprep.subr.bf16.mxu0 0
  %1109 = vmatpush1.bf16.msra.mxu0 %v536
  %1110 = vmatprep.subr.bf16.mxu0 0
  %1111 = vmatpush1.bf16.msra.mxu0 %v533
  %1112 = vmatprep.subr.bf16.mxu0 0
  %1113 = vmatpush2.bf16.msra.mxu0 0
  %1114 = vmatprep.subr.bf16.mxu0 0
  %1115 = vmatpush2.bf16.msra.mxu0 0
  %1116 = vmatprep.subr.bf16.mxu0 0
  %1117 = vmatpush2.bf16.msra.mxu0 0
  %1118 = vmatprep.subr.bf16.mxu0 0
  %1119 = vmatpush2.bf16.msra.mxu0 0
  %1120 = vmatprep.subr.bf16.mxu0 0
  %1121 = vmatpush2.bf16.msra.mxu0 0
  %1122 = vmatprep.subr.bf16.mxu0 0
  %1123 = vmatpush2.bf16.msra.mxu0 0
  %1124 = vmatprep.subr.bf16.mxu0 0
  %1125 = vmatpush2.bf16.msra.mxu0 0
  %1126 = vmatprep.subr.bf16.mxu0 0
  %1127 = vmatpush2.bf16.msra.mxu0 0
  %1128 = vmatprep.mubr.bf16.mxu0 0
  %1129 = vmatmul.mubr.bf16.gmra.mxu0 %v1054
  %v1130 = vpop.f32.mrf.mxu0
  %v1131 = vadd.f32 0.0, %v1130
  %v1132 = vpop.f32.mrf.mxu0
  %v1133 = vpop.f32.mrf.mxu0
  %v1134 = vpop.f32.mrf.mxu0
  %1135 = vdwg.mxu0
  %v1136 = vadd.f32 %v1053, %v1090
  %v1137 = vxor.u32 %v1136, 2147483648
  %v1138 = vmul.f32 %v1137, 1.442695
  %v1139 = vpow.pop %v1138
  %v1140 = vadd.f32 %v1139, 1.0
  %v1141 = vrcp.pop %v1140
  %v1142 = vmul.f32 1.0, %v1141
  %v1144 = vrot.slane %v1053, 1
  %v1146 = vadd.f32 %v1144, %v1092
  %v1147 = vxor.u32 %v1146, 2147483648
  %v1148 = vmul.f32 %v1147, 1.442695
  %v1149 = vpow.pop %v1148
  %v1150 = vadd.f32 %v1149, 1.0
  %v1151 = vrcp.pop %v1150
  %v1152 = vmul.f32 1.0, %v1151
  %v1153 = vadd.f32 %v1131, %v444
  %v1154 = vmul.f32 %v1142, %v1153
  %v1155 = vrot.slane %v1053, 2
  %v1157 = vadd.f32 %v1155, %v1154
  %v1158 = vtanh.pop %v1157
  %v1159 = vsub.f32 1.0, %v1152
  %v1160 = vmul.f32 %v1159, %v1158
  %v1161 = vmul.f32 %v1152, %v1043
  %v1162 = vadd.f32 %v1160, %v1161
  %s1163 = sadd.s32 0, 5
  %s1164 = sshra.s32 %s1163, 3
  %s1165 = sand.u32 %s1163, 7
  %s1166 = sshra.s32 %s1163, 3
  %s1167 = sand.u32 %s1163, 7
  %s1168 = smul.u32 %s1164, 3
  %s1169 = smul.u32 %s1168, 8
  %s1170 = sadd.s32 %s1169, %s1167
  %s1171 = scalar_lea.vmem [#allocation2], %s1170
  %v1172 = vld [vmem:[%s1171] ss:$8 sm:$0x7]
  %v1173 = vpack.c.bf16 %v1162, %v1162
  %1174 = vmatprep.subr.bf16.mxu0 %v553
  %1175 = vmatpush1.bf16.msra.mxu0 %v552
  %1176 = vmatprep.subr.bf16.mxu0 %v550
  %1177 = vmatpush1.bf16.msra.mxu0 %v549
  %1178 = vmatprep.subr.bf16.mxu0 %v547
  %1179 = vmatpush1.bf16.msra.mxu0 %v546
  %1180 = vmatprep.subr.bf16.mxu0 %v544
  %1181 = vmatpush1.bf16.msra.mxu0 %v543
  %1182 = vmatprep.subr.bf16.mxu0 %v541
  %1183 = vmatpush1.bf16.msra.mxu0 %v540
  %1184 = vmatprep.subr.bf16.mxu0 %v538
  %1185 = vmatpush1.bf16.msra.mxu0 %v537
  %1186 = vmatprep.subr.bf16.mxu0 %v535
  %1187 = vmatpush1.bf16.msra.mxu0 %v534
  %1188 = vmatprep.subr.bf16.mxu0 %v532
  %1189 = vmatpush1.bf16.msra.mxu0 %v531
  %1190 = vmatprep.subr.bf16.mxu0 0
  %1191 = vmatpush2.bf16.msra.mxu0 0
  %1192 = vmatprep.subr.bf16.mxu0 0
  %1193 = vmatpush2.bf16.msra.mxu0 0
  %1194 = vmatprep.subr.bf16.mxu0 0
  %1195 = vmatpush2.bf16.msra.mxu0 0
  %1196 = vmatprep.subr.bf16.mxu0 0
  %1197 = vmatpush2.bf16.msra.mxu0 0
  %1198 = vmatprep.subr.bf16.mxu0 0
  %1199 = vmatpush2.bf16.msra.mxu0 0
  %1200 = vmatprep.subr.bf16.mxu0 0
  %1201 = vmatpush2.bf16.msra.mxu0 0
  %1202 = vmatprep.subr.bf16.mxu0 0
  %1203 = vmatpush2.bf16.msra.mxu0 0
  %1204 = vmatprep.subr.bf16.mxu0 0
  %1205 = vmatpush2.bf16.msra.mxu0 0
  %1206 = vmatprep.mubr.bf16.mxu0 0
  %1207 = vmatmul.mubr.bf16.gmra.mxu0 %v1173
  %v1208 = vpop.f32.mrf.mxu0
  %v1209 = vadd.f32 0.0, %v1208
  %v1210 = vpop.f32.mrf.mxu0
  %v1211 = vadd.f32 0.0, %v1210
  %v1212 = vpop.f32.mrf.mxu0
  %v1213 = vpop.f32.mrf.mxu0
  %1214 = vdwg.mxu0
  %1215 = vmatprep.subr.bf16.mxu0 0
  %1216 = vmatpush1.bf16.msra.mxu0 %v554
  %1217 = vmatprep.subr.bf16.mxu0 0
  %1218 = vmatpush1.bf16.msra.mxu0 %v551
  %1219 = vmatprep.subr.bf16.mxu0 0
  %1220 = vmatpush1.bf16.msra.mxu0 %v548
  %1221 = vmatprep.subr.bf16.mxu0 0
  %1222 = vmatpush1.bf16.msra.mxu0 %v545
  %1223 = vmatprep.subr.bf16.mxu0 0
  %1224 = vmatpush1.bf16.msra.mxu0 %v542
  %1225 = vmatprep.subr.bf16.mxu0 0
  %1226 = vmatpush1.bf16.msra.mxu0 %v539
  %1227 = vmatprep.subr.bf16.mxu0 0
  %1228 = vmatpush1.bf16.msra.mxu0 %v536
  %1229 = vmatprep.subr.bf16.mxu0 0
  %1230 = vmatpush1.bf16.msra.mxu0 %v533
  %1231 = vmatprep.subr.bf16.mxu0 0
  %1232 = vmatpush2.bf16.msra.mxu0 0
  %1233 = vmatprep.subr.bf16.mxu0 0
  %1234 = vmatpush2.bf16.msra.mxu0 0
  %1235 = vmatprep.subr.bf16.mxu0 0
  %1236 = vmatpush2.bf16.msra.mxu0 0
  %1237 = vmatprep.subr.bf16.mxu0 0
  %1238 = vmatpush2.bf16.msra.mxu0 0
  %1239 = vmatprep.subr.bf16.mxu0 0
  %1240 = vmatpush2.bf16.msra.mxu0 0
  %1241 = vmatprep.subr.bf16.mxu0 0
  %1242 = vmatpush2.bf16.msra.mxu0 0
  %1243 = vmatprep.subr.bf16.mxu0 0
  %1244 = vmatpush2.bf16.msra.mxu0 0
  %1245 = vmatprep.subr.bf16.mxu0 0
  %1246 = vmatpush2.bf16.msra.mxu0 0
  %1247 = vmatprep.mubr.bf16.mxu0 0
  %1248 = vmatmul.mubr.bf16.gmra.mxu0 %v1173
  %v1249 = vpop.f32.mrf.mxu0
  %v1250 = vadd.f32 0.0, %v1249
  %v1251 = vpop.f32.mrf.mxu0
  %v1252 = vpop.f32.mrf.mxu0
  %v1253 = vpop.f32.mrf.mxu0
  %1254 = vdwg.mxu0
  %v1255 = vadd.f32 %v1172, %v1209
  %v1256 = vxor.u32 %v1255, 2147483648
  %v1257 = vmul.f32 %v1256, 1.442695
  %v1258 = vpow.pop %v1257
  %v1259 = vadd.f32 %v1258, 1.0
  %v1260 = vrcp.pop %v1259
  %v1261 = vmul.f32 1.0, %v1260
  %v1263 = vrot.slane %v1172, 1
  %v1265 = vadd.f32 %v1263, %v1211
  %v1266 = vxor.u32 %v1265, 2147483648
  %v1267 = vmul.f32 %v1266, 1.442695
  %v1268 = vpow.pop %v1267
  %v1269 = vadd.f32 %v1268, 1.0
  %v1270 = vrcp.pop %v1269
  %v1271 = vmul.f32 1.0, %v1270
  %v1272 = vadd.f32 %v1250, %v444
  %v1273 = vmul.f32 %v1261, %v1272
  %v1274 = vrot.slane %v1172, 2
  %v1276 = vadd.f32 %v1274, %v1273
  %v1277 = vtanh.pop %v1276
  %v1278 = vsub.f32 1.0, %v1271
  %v1279 = vmul.f32 %v1278, %v1277
  %v1280 = vmul.f32 %v1271, %v1162
  %v1281 = vadd.f32 %v1279, %v1280
  %s1282 = sadd.s32 0, 6
  %s1283 = sshra.s32 %s1282, 3
  %s1284 = sand.u32 %s1282, 7
  %s1285 = sshra.s32 %s1282, 3
  %s1286 = sand.u32 %s1282, 7
  %s1287 = smul.u32 %s1283, 3
  %s1288 = smul.u32 %s1287, 8
  %s1289 = sadd.s32 %s1288, %s1286
  %s1290 = scalar_lea.vmem [#allocation2], %s1289
  %v1291 = vld [vmem:[%s1290] ss:$8 sm:$0x7]
  %v1292 = vpack.c.bf16 %v1281, %v1281
  %1293 = vmatprep.subr.bf16.mxu0 %v553
  %1294 = vmatpush1.bf16.msra.mxu0 %v552
  %1295 = vmatprep.subr.bf16.mxu0 %v550
  %1296 = vmatpush1.bf16.msra.mxu0 %v549
  %1297 = vmatprep.subr.bf16.mxu0 %v547
  %1298 = vmatpush1.bf16.msra.mxu0 %v546
  %1299 = vmatprep.subr.bf16.mxu0 %v544
  %1300 = vmatpush1.bf16.msra.mxu0 %v543
  %1301 = vmatprep.subr.bf16.mxu0 %v541
  %1302 = vmatpush1.bf16.msra.mxu0 %v540
  %1303 = vmatprep.subr.bf16.mxu0 %v538
  %1304 = vmatpush1.bf16.msra.mxu0 %v537
  %1305 = vmatprep.subr.bf16.mxu0 %v535
  %1306 = vmatpush1.bf16.msra.mxu0 %v534
  %1307 = vmatprep.subr.bf16.mxu0 %v532
  %1308 = vmatpush1.bf16.msra.mxu0 %v531
  %1309 = vmatprep.subr.bf16.mxu0 0
  %1310 = vmatpush2.bf16.msra.mxu0 0
  %1311 = vmatprep.subr.bf16.mxu0 0
  %1312 = vmatpush2.bf16.msra.mxu0 0
  %1313 = vmatprep.subr.bf16.mxu0 0
  %1314 = vmatpush2.bf16.msra.mxu0 0
  %1315 = vmatprep.subr.bf16.mxu0 0
  %1316 = vmatpush2.bf16.msra.mxu0 0
  %1317 = vmatprep.subr.bf16.mxu0 0
  %1318 = vmatpush2.bf16.msra.mxu0 0
  %1319 = vmatprep.subr.bf16.mxu0 0
  %1320 = vmatpush2.bf16.msra.mxu0 0
  %1321 = vmatprep.subr.bf16.mxu0 0
  %1322 = vmatpush2.bf16.msra.mxu0 0
  %1323 = vmatprep.subr.bf16.mxu0 0
  %1324 = vmatpush2.bf16.msra.mxu0 0
  %1325 = vmatprep.mubr.bf16.mxu0 0
  %1326 = vmatmul.mubr.bf16.gmra.mxu0 %v1292
  %v1327 = vpop.f32.mrf.mxu0
  %v1328 = vadd.f32 0.0, %v1327
  %v1329 = vpop.f32.mrf.mxu0
  %v1330 = vadd.f32 0.0, %v1329
  %v1331 = vpop.f32.mrf.mxu0
  %v1332 = vpop.f32.mrf.mxu0
  %1333 = vdwg.mxu0
  %1334 = vmatprep.subr.bf16.mxu0 0
  %1335 = vmatpush1.bf16.msra.mxu0 %v554
  %1336 = vmatprep.subr.bf16.mxu0 0
  %1337 = vmatpush1.bf16.msra.mxu0 %v551
  %1338 = vmatprep.subr.bf16.mxu0 0
  %1339 = vmatpush1.bf16.msra.mxu0 %v548
  %1340 = vmatprep.subr.bf16.mxu0 0
  %1341 = vmatpush1.bf16.msra.mxu0 %v545
  %1342 = vmatprep.subr.bf16.mxu0 0
  %1343 = vmatpush1.bf16.msra.mxu0 %v542
  %1344 = vmatprep.subr.bf16.mxu0 0
  %1345 = vmatpush1.bf16.msra.mxu0 %v539
  %1346 = vmatprep.subr.bf16.mxu0 0
  %1347 = vmatpush1.bf16.msra.mxu0 %v536
  %1348 = vmatprep.subr.bf16.mxu0 0
  %1349 = vmatpush1.bf16.msra.mxu0 %v533
  %1350 = vmatprep.subr.bf16.mxu0 0
  %1351 = vmatpush2.bf16.msra.mxu0 0
  %1352 = vmatprep.subr.bf16.mxu0 0
  %1353 = vmatpush2.bf16.msra.mxu0 0
  %1354 = vmatprep.subr.bf16.mxu0 0
  %1355 = vmatpush2.bf16.msra.mxu0 0
  %1356 = vmatprep.subr.bf16.mxu0 0
  %1357 = vmatpush2.bf16.msra.mxu0 0
  %1358 = vmatprep.subr.bf16.mxu0 0
  %1359 = vmatpush2.bf16.msra.mxu0 0
  %1360 = vmatprep.subr.bf16.mxu0 0
  %1361 = vmatpush2.bf16.msra.mxu0 0
  %1362 = vmatprep.subr.bf16.mxu0 0
  %1363 = vmatpush2.bf16.msra.mxu0 0
  %1364 = vmatprep.subr.bf16.mxu0 0
  %1365 = vmatpush2.bf16.msra.mxu0 0
  %1366 = vmatprep.mubr.bf16.mxu0 0
  %1367 = vmatmul.mubr.bf16.gmra.mxu0 %v1292
  %v1368 = vpop.f32.mrf.mxu0
  %v1369 = vadd.f32 0.0, %v1368
  %v1370 = vpop.f32.mrf.mxu0
  %v1371 = vpop.f32.mrf.mxu0
  %v1372 = vpop.f32.mrf.mxu0
  %1373 = vdwg.mxu0
  %v1374 = vadd.f32 %v1291, %v1328
  %v1375 = vxor.u32 %v1374, 2147483648
  %v1376 = vmul.f32 %v1375, 1.442695
  %v1377 = vpow.pop %v1376
  %v1378 = vadd.f32 %v1377, 1.0
  %v1379 = vrcp.pop %v1378
  %v1380 = vmul.f32 1.0, %v1379
  %v1382 = vrot.slane %v1291, 1
  %v1384 = vadd.f32 %v1382, %v1330
  %v1385 = vxor.u32 %v1384, 2147483648
  %v1386 = vmul.f32 %v1385, 1.442695
  %v1387 = vpow.pop %v1386
  %v1388 = vadd.f32 %v1387, 1.0
  %v1389 = vrcp.pop %v1388
  %v1390 = vmul.f32 1.0, %v1389
  %v1391 = vadd.f32 %v1369, %v444
  %v1392 = vmul.f32 %v1380, %v1391
  %v1393 = vrot.slane %v1291, 2
  %v1395 = vadd.f32 %v1393, %v1392
  %v1396 = vtanh.pop %v1395
  %v1397 = vsub.f32 1.0, %v1390
  %v1398 = vmul.f32 %v1397, %v1396
  %v1399 = vmul.f32 %v1390, %v1281
  %v1400 = vadd.f32 %v1398, %v1399
  %s1401 = sadd.s32 0, 7
  %s1402 = sshra.s32 %s1401, 3
  %s1403 = sand.u32 %s1401, 7
  %s1404 = sshra.s32 %s1401, 3
  %s1405 = sand.u32 %s1401, 7
  %s1406 = smul.u32 %s1402, 3
  %s1407 = smul.u32 %s1406, 8
  %s1408 = sadd.s32 %s1407, %s1405
  %s1409 = scalar_lea.vmem [#allocation2], %s1408
  %v1410 = vld [vmem:[%s1409] ss:$8 sm:$0x7]
  %v1411 = vpack.c.bf16 %v1400, %v1400
  %1412 = vmatprep.subr.bf16.mxu0 %v553
  %1413 = vmatpush1.bf16.msra.mxu0 %v552
  %1414 = vmatprep.subr.bf16.mxu0 %v550
  %1415 = vmatpush1.bf16.msra.mxu0 %v549
  %1416 = vmatprep.subr.bf16.mxu0 %v547
  %1417 = vmatpush1.bf16.msra.mxu0 %v546
  %1418 = vmatprep.subr.bf16.mxu0 %v544
  %1419 = vmatpush1.bf16.msra.mxu0 %v543
  %1420 = vmatprep.subr.bf16.mxu0 %v541
  %1421 = vmatpush1.bf16.msra.mxu0 %v540
  %1422 = vmatprep.subr.bf16.mxu0 %v538
  %1423 = vmatpush1.bf16.msra.mxu0 %v537
  %1424 = vmatprep.subr.bf16.mxu0 %v535
  %1425 = vmatpush1.bf16.msra.mxu0 %v534
  %1426 = vmatprep.subr.bf16.mxu0 %v532
  %1427 = vmatpush1.bf16.msra.mxu0 %v531
  %1428 = vmatprep.subr.bf16.mxu0 0
  %1429 = vmatpush2.bf16.msra.mxu0 0
  %1430 = vmatprep.subr.bf16.mxu0 0
  %1431 = vmatpush2.bf16.msra.mxu0 0
  %1432 = vmatprep.subr.bf16.mxu0 0
  %1433 = vmatpush2.bf16.msra.mxu0 0
  %1434 = vmatprep.subr.bf16.mxu0 0
  %1435 = vmatpush2.bf16.msra.mxu0 0
  %1436 = vmatprep.subr.bf16.mxu0 0
  %1437 = vmatpush2.bf16.msra.mxu0 0
  %1438 = vmatprep.subr.bf16.mxu0 0
  %1439 = vmatpush2.bf16.msra.mxu0 0
  %1440 = vmatprep.subr.bf16.mxu0 0
  %1441 = vmatpush2.bf16.msra.mxu0 0
  %1442 = vmatprep.subr.bf16.mxu0 0
  %1443 = vmatpush2.bf16.msra.mxu0 0
  %1444 = vmatprep.mubr.bf16.mxu0 0
  %1445 = vmatmul.mubr.bf16.gmra.mxu0 %v1411
  %v1446 = vpop.f32.mrf.mxu0
  %v1447 = vadd.f32 0.0, %v1446
  %v1448 = vpop.f32.mrf.mxu0
  %v1449 = vadd.f32 0.0, %v1448
  %v1450 = vpop.f32.mrf.mxu0
  %v1451 = vpop.f32.mrf.mxu0
  %1452 = vdwg.mxu0
  %1453 = vmatprep.subr.bf16.mxu0 0
  %1454 = vmatpush1.bf16.msra.mxu0 %v554
  %1455 = vmatprep.subr.bf16.mxu0 0
  %1456 = vmatpush1.bf16.msra.mxu0 %v551
  %1457 = vmatprep.subr.bf16.mxu0 0
  %1458 = vmatpush1.bf16.msra.mxu0 %v548
  %1459 = vmatprep.subr.bf16.mxu0 0
  %1460 = vmatpush1.bf16.msra.mxu0 %v545
  %1461 = vmatprep.subr.bf16.mxu0 0
  %1462 = vmatpush1.bf16.msra.mxu0 %v542
  %1463 = vmatprep.subr.bf16.mxu0 0
  %1464 = vmatpush1.bf16.msra.mxu0 %v539
  %1465 = vmatprep.subr.bf16.mxu0 0
  %1466 = vmatpush1.bf16.msra.mxu0 %v536
  %1467 = vmatprep.subr.bf16.mxu0 0
  %1468 = vmatpush1.bf16.msra.mxu0 %v533
  %1469 = vmatprep.subr.bf16.mxu0 0
  %1470 = vmatpush2.bf16.msra.mxu0 0
  %1471 = vmatprep.subr.bf16.mxu0 0
  %1472 = vmatpush2.bf16.msra.mxu0 0
  %1473 = vmatprep.subr.bf16.mxu0 0
  %1474 = vmatpush2.bf16.msra.mxu0 0
  %1475 = vmatprep.subr.bf16.mxu0 0
  %1476 = vmatpush2.bf16.msra.mxu0 0
  %1477 = vmatprep.subr.bf16.mxu0 0
  %1478 = vmatpush2.bf16.msra.mxu0 0
  %1479 = vmatprep.subr.bf16.mxu0 0
  %1480 = vmatpush2.bf16.msra.mxu0 0
  %1481 = vmatprep.subr.bf16.mxu0 0
  %1482 = vmatpush2.bf16.msra.mxu0 0
  %1483 = vmatprep.subr.bf16.mxu0 0
  %1484 = vmatpush2.bf16.msra.mxu0 0
  %1485 = vmatprep.mubr.bf16.mxu0 0
  %1486 = vmatmul.mubr.bf16.gmra.mxu0 %v1411
  %v1487 = vpop.f32.mrf.mxu0
  %v1488 = vadd.f32 0.0, %v1487
  %v1489 = vpop.f32.mrf.mxu0
  %v1490 = vpop.f32.mrf.mxu0
  %v1491 = vpop.f32.mrf.mxu0
  %1492 = vdwg.mxu0
  %v1493 = vadd.f32 %v1410, %v1447
  %v1494 = vxor.u32 %v1493, 2147483648
  %v1495 = vmul.f32 %v1494, 1.442695
  %v1496 = vpow.pop %v1495
  %v1497 = vadd.f32 %v1496, 1.0
  %v1498 = vrcp.pop %v1497
  %v1499 = vmul.f32 1.0, %v1498
  %v1501 = vrot.slane %v1410, 1
  %v1503 = vadd.f32 %v1501, %v1449
  %v1504 = vxor.u32 %v1503, 2147483648
  %v1505 = vmul.f32 %v1504, 1.442695
  %v1506 = vpow.pop %v1505
  %v1507 = vadd.f32 %v1506, 1.0
  %v1508 = vrcp.pop %v1507
  %v1509 = vmul.f32 1.0, %v1508
  %v1510 = vadd.f32 %v1488, %v444
  %v1511 = vmul.f32 %v1499, %v1510
  %v1512 = vrot.slane %v1410, 2
  %v1514 = vadd.f32 %v1512, %v1511
  %v1515 = vtanh.pop %v1514
  %v1516 = vsub.f32 1.0, %v1509
  %v1517 = vmul.f32 %v1516, %v1515
  %v1518 = vmul.f32 %v1509, %v1400
  %v1519 = vadd.f32 %v1517, %v1518
  %v1521 = vlaneseq
  %v1522 = vshrl.u32 %v1521, 7
  %v1523 = vsub.s32 0, %v1522
  %v1524 = vrot.slane %v805, %v1523
  %v1527 = vlaneseq
  %v1528 = vshrl.u32 %v1527, 7
  %v1529 = vsub.s32 0, %v1528
  %v1530 = vrot.slane %v924, %v1529
  %v1533 = vlaneseq
  %v1534 = vshrl.u32 %v1533, 7
  %v1535 = vsub.s32 0, %v1534
  %v1536 = vrot.slane %v1043, %v1535
  %v1539 = vlaneseq
  %v1540 = vshrl.u32 %v1539, 7
  %v1541 = vsub.s32 0, %v1540
  %v1542 = vrot.slane %v1162, %v1541
  %v1545 = vlaneseq
  %v1546 = vshrl.u32 %v1545, 7
  %v1547 = vsub.s32 0, %v1546
  %v1548 = vrot.slane %v1281, %v1547
  %v1551 = vlaneseq
  %v1552 = vshrl.u32 %v1551, 7
  %v1553 = vsub.s32 0, %v1552
  %v1554 = vrot.slane %v1400, %v1553
  %v1557 = vlaneseq
  %v1558 = vshrl.u32 %v1557, 7
  %v1559 = vsub.s32 0, %v1558
  %v1560 = vrot.slane %v1519, %v1559
  %vm1562 = vcmask 1040384
  %v1563 = vsel %vm1562, %v686, %v1524
  %vm1564 = vcmask 1041408
  %v1565 = vsel %vm1564, %v1563, %v1530
  %vm1566 = vcmask 1042432
  %v1567 = vsel %vm1566, %v1565, %v1536
  %v1568 = vsel %vm43, %v1567, %v1542
  %vm1569 = vcmask 1044480
  %v1570 = vsel %vm1569, %v1568, %v1548
  %vm1571 = vcmask 1045504
  %v1572 = vsel %vm1571, %v1570, %v1554
  %vm1573 = vcmask 1046528
  %v1574 = vsel %vm1573, %v1572, %v1560
  %1575 = vst [vmem:[%s9] sm:$0xff] %v1574
  %s1576 = smul.u32 1, 3
  %s1577 = smul.addr %s1576, 8
  %s1578 = scalar_lea.vmem [#allocation2], %s1577
  %v1579 = vld [vmem:[%s1578] ss:$8 sm:$0x7]
  %v1580 = vpack.c.bf16 %v1519, %v1519
  %1581 = vmatprep.subr.bf16.mxu0 %v553
  %1582 = vmatpush1.bf16.msra.mxu0 %v552
  %1583 = vmatprep.subr.bf16.mxu0 %v550
  %1584 = vmatpush1.bf16.msra.mxu0 %v549
  %1585 = vmatprep.subr.bf16.mxu0 %v547
  %1586 = vmatpush1.bf16.msra.mxu0 %v546
  %1587 = vmatprep.subr.bf16.mxu0 %v544
  %1588 = vmatpush1.bf16.msra.mxu0 %v543
  %1589 = vmatprep.subr.bf16.mxu0 %v541
  %1590 = vmatpush1.bf16.msra.mxu0 %v540
  %1591 = vmatprep.subr.bf16.mxu0 %v538
  %1592 = vmatpush1.bf16.msra.mxu0 %v537
  %1593 = vmatprep.subr.bf16.mxu0 %v535
  %1594 = vmatpush1.bf16.msra.mxu0 %v534
  %1595 = vmatprep.subr.bf16.mxu0 %v532
  %1596 = vmatpush1.bf16.msra.mxu0 %v531
  %1597 = vmatprep.subr.bf16.mxu0 0
  %1598 = vmatpush2.bf16.msra.mxu0 0
  %1599 = vmatprep.subr.bf16.mxu0 0
  %1600 = vmatpush2.bf16.msra.mxu0 0
  %1601 = vmatprep.subr.bf16.mxu0 0
  %1602 = vmatpush2.bf16.msra.mxu0 0
  %1603 = vmatprep.subr.bf16.mxu0 0
  %1604 = vmatpush2.bf16.msra.mxu0 0
  %1605 = vmatprep.subr.bf16.mxu0 0
  %1606 = vmatpush2.bf16.msra.mxu0 0
  %1607 = vmatprep.subr.bf16.mxu0 0
  %1608 = vmatpush2.bf16.msra.mxu0 0
  %1609 = vmatprep.subr.bf16.mxu0 0
  %1610 = vmatpush2.bf16.msra.mxu0 0
  %1611 = vmatprep.subr.bf16.mxu0 0
  %1612 = vmatpush2.bf16.msra.mxu0 0
  %1613 = vmatprep.mubr.bf16.mxu0 0
  %1614 = vmatmul.mubr.bf16.gmra.mxu0 %v1580
  %v1615 = vpop.f32.mrf.mxu0
  %v1616 = vadd.f32 0.0, %v1615
  %v1617 = vpop.f32.mrf.mxu0
  %v1618 = vadd.f32 0.0, %v1617
  %v1619 = vpop.f32.mrf.mxu0
  %v1620 = vpop.f32.mrf.mxu0
  %1621 = vdwg.mxu0
  %1622 = vmatprep.subr.bf16.mxu0 0
  %1623 = vmatpush1.bf16.msra.mxu0 %v554
  %1624 = vmatprep.subr.bf16.mxu0 0
  %1625 = vmatpush1.bf16.msra.mxu0 %v551
  %1626 = vmatprep.subr.bf16.mxu0 0
  %1627 = vmatpush1.bf16.msra.mxu0 %v548
  %1628 = vmatprep.subr.bf16.mxu0 0
  %1629 = vmatpush1.bf16.msra.mxu0 %v545
  %1630 = vmatprep.subr.bf16.mxu0 0
  %1631 = vmatpush1.bf16.msra.mxu0 %v542
  %1632 = vmatprep.subr.bf16.mxu0 0
  %1633 = vmatpush1.bf16.msra.mxu0 %v539
  %1634 = vmatprep.subr.bf16.mxu0 0
  %1635 = vmatpush1.bf16.msra.mxu0 %v536
  %1636 = vmatprep.subr.bf16.mxu0 0
  %1637 = vmatpush1.bf16.msra.mxu0 %v533
  %1638 = vmatprep.subr.bf16.mxu0 0
  %1639 = vmatpush2.bf16.msra.mxu0 0
  %1640 = vmatprep.subr.bf16.mxu0 0
  %1641 = vmatpush2.bf16.msra.mxu0 0
  %1642 = vmatprep.subr.bf16.mxu0 0
  %1643 = vmatpush2.bf16.msra.mxu0 0
  %1644 = vmatprep.subr.bf16.mxu0 0
  %1645 = vmatpush2.bf16.msra.mxu0 0
  %1646 = vmatprep.subr.bf16.mxu0 0
  %1647 = vmatpush2.bf16.msra.mxu0 0
  %1648 = vmatprep.subr.bf16.mxu0 0
  %1649 = vmatpush2.bf16.msra.mxu0 0
  %1650 = vmatprep.subr.bf16.mxu0 0
  %1651 = vmatpush2.bf16.msra.mxu0 0
  %1652 = vmatprep.subr.bf16.mxu0 0
  %1653 = vmatpush2.bf16.msra.mxu0 0
  %1654 = vmatprep.mubr.bf16.mxu0 0
  %1655 = vmatmul.mubr.bf16.gmra.mxu0 %v1580
  %v1656 = vpop.f32.mrf.mxu0
  %v1657 = vadd.f32 0.0, %v1656
  %v1658 = vpop.f32.mrf.mxu0
  %v1659 = vpop.f32.mrf.mxu0
  %v1660 = vpop.f32.mrf.mxu0
  %1661 = vdwg.mxu0
  %v1662 = vadd.f32 %v1579, %v1616
  %v1663 = vxor.u32 %v1662, 2147483648
  %v1664 = vmul.f32 %v1663, 1.442695
  %v1665 = vpow.pop %v1664
  %v1666 = vadd.f32 %v1665, 1.0
  %v1667 = vrcp.pop %v1666
  %v1668 = vmul.f32 1.0, %v1667
  %v1670 = vrot.slane %v1579, 1
  %v1672 = vadd.f32 %v1670, %v1618
  %v1673 = vxor.u32 %v1672, 2147483648
  %v1674 = vmul.f32 %v1673, 1.442695
  %v1675 = vpow.pop %v1674
  %v1676 = vadd.f32 %v1675, 1.0
  %v1677 = vrcp.pop %v1676
  %v1678 = vmul.f32 1.0, %v1677
  %v1679 = vadd.f32 %v1657, %v444
  %v1680 = vmul.f32 %v1668, %v1679
  %v1681 = vrot.slane %v1579, 2
  %v1683 = vadd.f32 %v1681, %v1680
  %v1684 = vtanh.pop %v1683
  %v1685 = vsub.f32 1.0, %v1678
  %v1686 = vmul.f32 %v1685, %v1684
  %v1687 = vmul.f32 %v1678, %v1519
  %v1688 = vadd.f32 %v1686, %v1687
  %s1689 = sadd.s32 8, 1
  %s1690 = sshra.s32 %s1689, 3
  %s1691 = sand.u32 %s1689, 7
  %s1692 = sshra.s32 %s1689, 3
  %s1693 = sand.u32 %s1689, 7
  %s1694 = smul.u32 %s1690, 3
  %s1695 = smul.u32 %s1694, 8
  %s1696 = sadd.s32 %s1695, %s1693
  %s1697 = scalar_lea.vmem [#allocation2], %s1696
  %v1698 = vld [vmem:[%s1697] ss:$8 sm:$0x7]
  %v1699 = vpack.c.bf16 %v1688, %v1688
  %1700 = vmatprep.subr.bf16.mxu0 %v553
  %1701 = vmatpush1.bf16.msra.mxu0 %v552
  %1702 = vmatprep.subr.bf16.mxu0 %v550
  %1703 = vmatpush1.bf16.msra.mxu0 %v549
  %1704 = vmatprep.subr.bf16.mxu0 %v547
  %1705 = vmatpush1.bf16.msra.mxu0 %v546
  %1706 = vmatprep.subr.bf16.mxu0 %v544
  %1707 = vmatpush1.bf16.msra.mxu0 %v543
  %1708 = vmatprep.subr.bf16.mxu0 %v541
  %1709 = vmatpush1.bf16.msra.mxu0 %v540
  %1710 = vmatprep.subr.bf16.mxu0 %v538
  %1711 = vmatpush1.bf16.msra.mxu0 %v537
  %1712 = vmatprep.subr.bf16.mxu0 %v535
  %1713 = vmatpush1.bf16.msra.mxu0 %v534
  %1714 = vmatprep.subr.bf16.mxu0 %v532
  %1715 = vmatpush1.bf16.msra.mxu0 %v531
  %1716 = vmatprep.subr.bf16.mxu0 0
  %1717 = vmatpush2.bf16.msra.mxu0 0
  %1718 = vmatprep.subr.bf16.mxu0 0
  %1719 = vmatpush2.bf16.msra.mxu0 0
  %1720 = vmatprep.subr.bf16.mxu0 0
  %1721 = vmatpush2.bf16.msra.mxu0 0
  %1722 = vmatprep.subr.bf16.mxu0 0
  %1723 = vmatpush2.bf16.msra.mxu0 0
  %1724 = vmatprep.subr.bf16.mxu0 0
  %1725 = vmatpush2.bf16.msra.mxu0 0
  %1726 = vmatprep.subr.bf16.mxu0 0
  %1727 = vmatpush2.bf16.msra.mxu0 0
  %1728 = vmatprep.subr.bf16.mxu0 0
  %1729 = vmatpush2.bf16.msra.mxu0 0
  %1730 = vmatprep.subr.bf16.mxu0 0
  %1731 = vmatpush2.bf16.msra.mxu0 0
  %1732 = vmatprep.mubr.bf16.mxu0 0
  %1733 = vmatmul.mubr.bf16.gmra.mxu0 %v1699
  %v1734 = vpop.f32.mrf.mxu0
  %v1735 = vadd.f32 0.0, %v1734
  %v1736 = vpop.f32.mrf.mxu0
  %v1737 = vadd.f32 0.0, %v1736
  %v1738 = vpop.f32.mrf.mxu0
  %v1739 = vpop.f32.mrf.mxu0
  %1740 = vdwg.mxu0
  %1741 = vmatprep.subr.bf16.mxu0 0
  %1742 = vmatpush1.bf16.msra.mxu0 %v554
  %1743 = vmatprep.subr.bf16.mxu0 0
  %1744 = vmatpush1.bf16.msra.mxu0 %v551
  %1745 = vmatprep.subr.bf16.mxu0 0
  %1746 = vmatpush1.bf16.msra.mxu0 %v548
  %1747 = vmatprep.subr.bf16.mxu0 0
  %1748 = vmatpush1.bf16.msra.mxu0 %v545
  %1749 = vmatprep.subr.bf16.mxu0 0
  %1750 = vmatpush1.bf16.msra.mxu0 %v542
  %1751 = vmatprep.subr.bf16.mxu0 0
  %1752 = vmatpush1.bf16.msra.mxu0 %v539
  %1753 = vmatprep.subr.bf16.mxu0 0
  %1754 = vmatpush1.bf16.msra.mxu0 %v536
  %1755 = vmatprep.subr.bf16.mxu0 0
  %1756 = vmatpush1.bf16.msra.mxu0 %v533
  %1757 = vmatprep.subr.bf16.mxu0 0
  %1758 = vmatpush2.bf16.msra.mxu0 0
  %1759 = vmatprep.subr.bf16.mxu0 0
  %1760 = vmatpush2.bf16.msra.mxu0 0
  %1761 = vmatprep.subr.bf16.mxu0 0
  %1762 = vmatpush2.bf16.msra.mxu0 0
  %1763 = vmatprep.subr.bf16.mxu0 0
  %1764 = vmatpush2.bf16.msra.mxu0 0
  %1765 = vmatprep.subr.bf16.mxu0 0
  %1766 = vmatpush2.bf16.msra.mxu0 0
  %1767 = vmatprep.subr.bf16.mxu0 0
  %1768 = vmatpush2.bf16.msra.mxu0 0
  %1769 = vmatprep.subr.bf16.mxu0 0
  %1770 = vmatpush2.bf16.msra.mxu0 0
  %1771 = vmatprep.subr.bf16.mxu0 0
  %1772 = vmatpush2.bf16.msra.mxu0 0
  %1773 = vmatprep.mubr.bf16.mxu0 0
  %1774 = vmatmul.mubr.bf16.gmra.mxu0 %v1699
  %v1775 = vpop.f32.mrf.mxu0
  %v1776 = vadd.f32 0.0, %v1775
  %v1777 = vpop.f32.mrf.mxu0
  %v1778 = vpop.f32.mrf.mxu0
  %v1779 = vpop.f32.mrf.mxu0
  %1780 = vdwg.mxu0
  %v1781 = vadd.f32 %v1698, %v1735
  %v1782 = vxor.u32 %v1781, 2147483648
  %v1783 = vmul.f32 %v1782, 1.442695
  %v1784 = vpow.pop %v1783
  %v1785 = vadd.f32 %v1784, 1.0
  %v1786 = vrcp.pop %v1785
  %v1787 = vmul.f32 1.0, %v1786
  %v1789 = vrot.slane %v1698, 1
  %v1791 = vadd.f32 %v1789, %v1737
  %v1792 = vxor.u32 %v1791, 2147483648
  %v1793 = vmul.f32 %v1792, 1.442695
  %v1794 = vpow.pop %v1793
  %v1795 = vadd.f32 %v1794, 1.0
  %v1796 = vrcp.pop %v1795
  %v1797 = vmul.f32 1.0, %v1796
  %v1798 = vadd.f32 %v1776, %v444
  %v1799 = vmul.f32 %v1787, %v1798
  %v1800 = vrot.slane %v1698, 2
  %v1802 = vadd.f32 %v1800, %v1799
  %v1803 = vtanh.pop %v1802
  %v1804 = vsub.f32 1.0, %v1797
  %v1805 = vmul.f32 %v1804, %v1803
  %v1806 = vmul.f32 %v1797, %v1688
  %v1807 = vadd.f32 %v1805, %v1806
  %s1808 = sadd.s32 8, 2
  %s1809 = sshra.s32 %s1808, 3
  %s1810 = sand.u32 %s1808, 7
  %s1811 = sshra.s32 %s1808, 3
  %s1812 = sand.u32 %s1808, 7
  %s1813 = smul.u32 %s1809, 3
  %s1814 = smul.u32 %s1813, 8
  %s1815 = sadd.s32 %s1814, %s1812
  %s1816 = scalar_lea.vmem [#allocation2], %s1815
  %v1817 = vld [vmem:[%s1816] ss:$8 sm:$0x7]
  %v1818 = vpack.c.bf16 %v1807, %v1807
  %1819 = vmatprep.subr.bf16.mxu0 %v553
  %1820 = vmatpush1.bf16.msra.mxu0 %v552
  %1821 = vmatprep.subr.bf16.mxu0 %v550
  %1822 = vmatpush1.bf16.msra.mxu0 %v549
  %1823 = vmatprep.subr.bf16.mxu0 %v547
  %1824 = vmatpush1.bf16.msra.mxu0 %v546
  %1825 = vmatprep.subr.bf16.mxu0 %v544
  %1826 = vmatpush1.bf16.msra.mxu0 %v543
  %1827 = vmatprep.subr.bf16.mxu0 %v541
  %1828 = vmatpush1.bf16.msra.mxu0 %v540
  %1829 = vmatprep.subr.bf16.mxu0 %v538
  %1830 = vmatpush1.bf16.msra.mxu0 %v537
  %1831 = vmatprep.subr.bf16.mxu0 %v535
  %1832 = vmatpush1.bf16.msra.mxu0 %v534
  %1833 = vmatprep.subr.bf16.mxu0 %v532
  %1834 = vmatpush1.bf16.msra.mxu0 %v531
  %1835 = vmatprep.subr.bf16.mxu0 0
  %1836 = vmatpush2.bf16.msra.mxu0 0
  %1837 = vmatprep.subr.bf16.mxu0 0
  %1838 = vmatpush2.bf16.msra.mxu0 0
  %1839 = vmatprep.subr.bf16.mxu0 0
  %1840 = vmatpush2.bf16.msra.mxu0 0
  %1841 = vmatprep.subr.bf16.mxu0 0
  %1842 = vmatpush2.bf16.msra.mxu0 0
  %1843 = vmatprep.subr.bf16.mxu0 0
  %1844 = vmatpush2.bf16.msra.mxu0 0
  %1845 = vmatprep.subr.bf16.mxu0 0
  %1846 = vmatpush2.bf16.msra.mxu0 0
  %1847 = vmatprep.subr.bf16.mxu0 0
  %1848 = vmatpush2.bf16.msra.mxu0 0
  %1849 = vmatprep.subr.bf16.mxu0 0
  %1850 = vmatpush2.bf16.msra.mxu0 0
  %1851 = vmatprep.mubr.bf16.mxu0 0
  %1852 = vmatmul.mubr.bf16.gmra.mxu0 %v1818
  %v1853 = vpop.f32.mrf.mxu0
  %v1854 = vadd.f32 0.0, %v1853
  %v1855 = vpop.f32.mrf.mxu0
  %v1856 = vadd.f32 0.0, %v1855
  %v1857 = vpop.f32.mrf.mxu0
  %v1858 = vpop.f32.mrf.mxu0
  %1859 = vdwg.mxu0
  %1860 = vmatprep.subr.bf16.mxu0 0
  %1861 = vmatpush1.bf16.msra.mxu0 %v554
  %1862 = vmatprep.subr.bf16.mxu0 0
  %1863 = vmatpush1.bf16.msra.mxu0 %v551
  %1864 = vmatprep.subr.bf16.mxu0 0
  %1865 = vmatpush1.bf16.msra.mxu0 %v548
  %1866 = vmatprep.subr.bf16.mxu0 0
  %1867 = vmatpush1.bf16.msra.mxu0 %v545
  %1868 = vmatprep.subr.bf16.mxu0 0
  %1869 = vmatpush1.bf16.msra.mxu0 %v542
  %1870 = vmatprep.subr.bf16.mxu0 0
  %1871 = vmatpush1.bf16.msra.mxu0 %v539
  %1872 = vmatprep.subr.bf16.mxu0 0
  %1873 = vmatpush1.bf16.msra.mxu0 %v536
  %1874 = vmatprep.subr.bf16.mxu0 0
  %1875 = vmatpush1.bf16.msra.mxu0 %v533
  %1876 = vmatprep.subr.bf16.mxu0 0
  %1877 = vmatpush2.bf16.msra.mxu0 0
  %1878 = vmatprep.subr.bf16.mxu0 0
  %1879 = vmatpush2.bf16.msra.mxu0 0
  %1880 = vmatprep.subr.bf16.mxu0 0
  %1881 = vmatpush2.bf16.msra.mxu0 0
  %1882 = vmatprep.subr.bf16.mxu0 0
  %1883 = vmatpush2.bf16.msra.mxu0 0
  %1884 = vmatprep.subr.bf16.mxu0 0
  %1885 = vmatpush2.bf16.msra.mxu0 0
  %1886 = vmatprep.subr.bf16.mxu0 0
  %1887 = vmatpush2.bf16.msra.mxu0 0
  %1888 = vmatprep.subr.bf16.mxu0 0
  %1889 = vmatpush2.bf16.msra.mxu0 0
  %1890 = vmatprep.subr.bf16.mxu0 0
  %1891 = vmatpush2.bf16.msra.mxu0 0
  %1892 = vmatprep.mubr.bf16.mxu0 0
  %1893 = vmatmul.mubr.bf16.gmra.mxu0 %v1818
  %v1894 = vpop.f32.mrf.mxu0
  %v1895 = vadd.f32 0.0, %v1894
  %v1896 = vpop.f32.mrf.mxu0
  %v1897 = vpop.f32.mrf.mxu0
  %v1898 = vpop.f32.mrf.mxu0
  %1899 = vdwg.mxu0
  %v1900 = vadd.f32 %v1817, %v1854
  %v1901 = vxor.u32 %v1900, 2147483648
  %v1902 = vmul.f32 %v1901, 1.442695
  %v1903 = vpow.pop %v1902
  %v1904 = vadd.f32 %v1903, 1.0
  %v1905 = vrcp.pop %v1904
  %v1906 = vmul.f32 1.0, %v1905
  %v1908 = vrot.slane %v1817, 1
  %v1910 = vadd.f32 %v1908, %v1856
  %v1911 = vxor.u32 %v1910, 2147483648
  %v1912 = vmul.f32 %v1911, 1.442695
  %v1913 = vpow.pop %v1912
  %v1914 = vadd.f32 %v1913, 1.0
  %v1915 = vrcp.pop %v1914
  %v1916 = vmul.f32 1.0, %v1915
  %v1917 = vadd.f32 %v1895, %v444
  %v1918 = vmul.f32 %v1906, %v1917
  %v1919 = vrot.slane %v1817, 2
  %v1921 = vadd.f32 %v1919, %v1918
  %v1922 = vtanh.pop %v1921
  %v1923 = vsub.f32 1.0, %v1916
  %v1924 = vmul.f32 %v1923, %v1922
  %v1925 = vmul.f32 %v1916, %v1807
  %v1926 = vadd.f32 %v1924, %v1925
  %s1927 = sadd.s32 8, 3
  %s1928 = sshra.s32 %s1927, 3
  %s1929 = sand.u32 %s1927, 7
  %s1930 = sshra.s32 %s1927, 3
  %s1931 = sand.u32 %s1927, 7
  %s1932 = smul.u32 %s1928, 3
  %s1933 = smul.u32 %s1932, 8
  %s1934 = sadd.s32 %s1933, %s1931
  %s1935 = scalar_lea.vmem [#allocation2], %s1934
  %v1936 = vld [vmem:[%s1935] ss:$8 sm:$0x7]
  %v1937 = vpack.c.bf16 %v1926, %v1926
  %1938 = vmatprep.subr.bf16.mxu0 %v553
  %1939 = vmatpush1.bf16.msra.mxu0 %v552
  %1940 = vmatprep.subr.bf16.mxu0 %v550
  %1941 = vmatpush1.bf16.msra.mxu0 %v549
  %1942 = vmatprep.subr.bf16.mxu0 %v547
  %1943 = vmatpush1.bf16.msra.mxu0 %v546
  %1944 = vmatprep.subr.bf16.mxu0 %v544
  %1945 = vmatpush1.bf16.msra.mxu0 %v543
  %1946 = vmatprep.subr.bf16.mxu0 %v541
  %1947 = vmatpush1.bf16.msra.mxu0 %v540
  %1948 = vmatprep.subr.bf16.mxu0 %v538
  %1949 = vmatpush1.bf16.msra.mxu0 %v537
  %1950 = vmatprep.subr.bf16.mxu0 %v535
  %1951 = vmatpush1.bf16.msra.mxu0 %v534
  %1952 = vmatprep.subr.bf16.mxu0 %v532
  %1953 = vmatpush1.bf16.msra.mxu0 %v531
  %1954 = vmatprep.subr.bf16.mxu0 0
  %1955 = vmatpush2.bf16.msra.mxu0 0
  %1956 = vmatprep.subr.bf16.mxu0 0
  %1957 = vmatpush2.bf16.msra.mxu0 0
  %1958 = vmatprep.subr.bf16.mxu0 0
  %1959 = vmatpush2.bf16.msra.mxu0 0
  %1960 = vmatprep.subr.bf16.mxu0 0
  %1961 = vmatpush2.bf16.msra.mxu0 0
  %1962 = vmatprep.subr.bf16.mxu0 0
  %1963 = vmatpush2.bf16.msra.mxu0 0
  %1964 = vmatprep.subr.bf16.mxu0 0
  %1965 = vmatpush2.bf16.msra.mxu0 0
  %1966 = vmatprep.subr.bf16.mxu0 0
  %1967 = vmatpush2.bf16.msra.mxu0 0
  %1968 = vmatprep.subr.bf16.mxu0 0
  %1969 = vmatpush2.bf16.msra.mxu0 0
  %1970 = vmatprep.mubr.bf16.mxu0 0
  %1971 = vmatmul.mubr.bf16.gmra.mxu0 %v1937
  %v1972 = vpop.f32.mrf.mxu0
  %v1973 = vadd.f32 0.0, %v1972
  %v1974 = vpop.f32.mrf.mxu0
  %v1975 = vadd.f32 0.0, %v1974
  %v1976 = vpop.f32.mrf.mxu0
  %v1977 = vpop.f32.mrf.mxu0
  %1978 = vdwg.mxu0
  %1979 = vmatprep.subr.bf16.mxu0 0
  %1980 = vmatpush1.bf16.msra.mxu0 %v554
  %1981 = vmatprep.subr.bf16.mxu0 0
  %1982 = vmatpush1.bf16.msra.mxu0 %v551
  %1983 = vmatprep.subr.bf16.mxu0 0
  %1984 = vmatpush1.bf16.msra.mxu0 %v548
  %1985 = vmatprep.subr.bf16.mxu0 0
  %1986 = vmatpush1.bf16.msra.mxu0 %v545
  %1987 = vmatprep.subr.bf16.mxu0 0
  %1988 = vmatpush1.bf16.msra.mxu0 %v542
  %1989 = vmatprep.subr.bf16.mxu0 0
  %1990 = vmatpush1.bf16.msra.mxu0 %v539
  %1991 = vmatprep.subr.bf16.mxu0 0
  %1992 = vmatpush1.bf16.msra.mxu0 %v536
  %1993 = vmatprep.subr.bf16.mxu0 0
  %1994 = vmatpush1.bf16.msra.mxu0 %v533
  %1995 = vmatprep.subr.bf16.mxu0 0
  %1996 = vmatpush2.bf16.msra.mxu0 0
  %1997 = vmatprep.subr.bf16.mxu0 0
  %1998 = vmatpush2.bf16.msra.mxu0 0
  %1999 = vmatprep.subr.bf16.mxu0 0
  %2000 = vmatpush2.bf16.msra.mxu0 0
  %2001 = vmatprep.subr.bf16.mxu0 0
  %2002 = vmatpush2.bf16.msra.mxu0 0
  %2003 = vmatprep.subr.bf16.mxu0 0
  %2004 = vmatpush2.bf16.msra.mxu0 0
  %2005 = vmatprep.subr.bf16.mxu0 0
  %2006 = vmatpush2.bf16.msra.mxu0 0
  %2007 = vmatprep.subr.bf16.mxu0 0
  %2008 = vmatpush2.bf16.msra.mxu0 0
  %2009 = vmatprep.subr.bf16.mxu0 0
  %2010 = vmatpush2.bf16.msra.mxu0 0
  %2011 = vmatprep.mubr.bf16.mxu0 0
  %2012 = vmatmul.mubr.bf16.gmra.mxu0 %v1937
  %v2013 = vpop.f32.mrf.mxu0
  %v2014 = vadd.f32 0.0, %v2013
  %v2015 = vpop.f32.mrf.mxu0
  %v2016 = vpop.f32.mrf.mxu0
  %v2017 = vpop.f32.mrf.mxu0
  %2018 = vdwg.mxu0
  %v2019 = vadd.f32 %v1936, %v1973
  %v2020 = vxor.u32 %v2019, 2147483648
  %v2021 = vmul.f32 %v2020, 1.442695
  %v2022 = vpow.pop %v2021
  %v2023 = vadd.f32 %v2022, 1.0
  %v2024 = vrcp.pop %v2023
  %v2025 = vmul.f32 1.0, %v2024
  %v2027 = vrot.slane %v1936, 1
  %v2029 = vadd.f32 %v2027, %v1975
  %v2030 = vxor.u32 %v2029, 2147483648
  %v2031 = vmul.f32 %v2030, 1.442695
  %v2032 = vpow.pop %v2031
  %v2033 = vadd.f32 %v2032, 1.0
  %v2034 = vrcp.pop %v2033
  %v2035 = vmul.f32 1.0, %v2034
  %v2036 = vadd.f32 %v2014, %v444
  %v2037 = vmul.f32 %v2025, %v2036
  %v2038 = vrot.slane %v1936, 2
  %v2040 = vadd.f32 %v2038, %v2037
  %v2041 = vtanh.pop %v2040
  %v2042 = vsub.f32 1.0, %v2035
  %v2043 = vmul.f32 %v2042, %v2041
  %v2044 = vmul.f32 %v2035, %v1926
  %v2045 = vadd.f32 %v2043, %v2044
  %s2046 = sadd.s32 8, 4
  %s2047 = sshra.s32 %s2046, 3
  %s2048 = sand.u32 %s2046, 7
  %s2049 = sshra.s32 %s2046, 3
  %s2050 = sand.u32 %s2046, 7
  %s2051 = smul.u32 %s2047, 3
  %s2052 = smul.u32 %s2051, 8
  %s2053 = sadd.s32 %s2052, %s2050
  %s2054 = scalar_lea.vmem [#allocation2], %s2053
  %v2055 = vld [vmem:[%s2054] ss:$8 sm:$0x7]
  %v2056 = vpack.c.bf16 %v2045, %v2045
  %2057 = vmatprep.subr.bf16.mxu0 %v553
  %2058 = vmatpush1.bf16.msra.mxu0 %v552
  %2059 = vmatprep.subr.bf16.mxu0 %v550
  %2060 = vmatpush1.bf16.msra.mxu0 %v549
  %2061 = vmatprep.subr.bf16.mxu0 %v547
  %2062 = vmatpush1.bf16.msra.mxu0 %v546
  %2063 = vmatprep.subr.bf16.mxu0 %v544
  %2064 = vmatpush1.bf16.msra.mxu0 %v543
  %2065 = vmatprep.subr.bf16.mxu0 %v541
  %2066 = vmatpush1.bf16.msra.mxu0 %v540
  %2067 = vmatprep.subr.bf16.mxu0 %v538
  %2068 = vmatpush1.bf16.msra.mxu0 %v537
  %2069 = vmatprep.subr.bf16.mxu0 %v535
  %2070 = vmatpush1.bf16.msra.mxu0 %v534
  %2071 = vmatprep.subr.bf16.mxu0 %v532
  %2072 = vmatpush1.bf16.msra.mxu0 %v531
  %2073 = vmatprep.subr.bf16.mxu0 0
  %2074 = vmatpush2.bf16.msra.mxu0 0
  %2075 = vmatprep.subr.bf16.mxu0 0
  %2076 = vmatpush2.bf16.msra.mxu0 0
  %2077 = vmatprep.subr.bf16.mxu0 0
  %2078 = vmatpush2.bf16.msra.mxu0 0
  %2079 = vmatprep.subr.bf16.mxu0 0
  %2080 = vmatpush2.bf16.msra.mxu0 0
  %2081 = vmatprep.subr.bf16.mxu0 0
  %2082 = vmatpush2.bf16.msra.mxu0 0
  %2083 = vmatprep.subr.bf16.mxu0 0
  %2084 = vmatpush2.bf16.msra.mxu0 0
  %2085 = vmatprep.subr.bf16.mxu0 0
  %2086 = vmatpush2.bf16.msra.mxu0 0
  %2087 = vmatprep.subr.bf16.mxu0 0
  %2088 = vmatpush2.bf16.msra.mxu0 0
  %2089 = vmatprep.mubr.bf16.mxu0 0
  %2090 = vmatmul.mubr.bf16.gmra.mxu0 %v2056
  %v2091 = vpop.f32.mrf.mxu0
  %v2092 = vadd.f32 0.0, %v2091
  %v2093 = vpop.f32.mrf.mxu0
  %v2094 = vadd.f32 0.0, %v2093
  %v2095 = vpop.f32.mrf.mxu0
  %v2096 = vpop.f32.mrf.mxu0
  %2097 = vdwg.mxu0
  %2098 = vmatprep.subr.bf16.mxu0 0
  %2099 = vmatpush1.bf16.msra.mxu0 %v554
  %2100 = vmatprep.subr.bf16.mxu0 0
  %2101 = vmatpush1.bf16.msra.mxu0 %v551
  %2102 = vmatprep.subr.bf16.mxu0 0
  %2103 = vmatpush1.bf16.msra.mxu0 %v548
  %2104 = vmatprep.subr.bf16.mxu0 0
  %2105 = vmatpush1.bf16.msra.mxu0 %v545
  %2106 = vmatprep.subr.bf16.mxu0 0
  %2107 = vmatpush1.bf16.msra.mxu0 %v542
  %2108 = vmatprep.subr.bf16.mxu0 0
  %2109 = vmatpush1.bf16.msra.mxu0 %v539
  %2110 = vmatprep.subr.bf16.mxu0 0
  %2111 = vmatpush1.bf16.msra.mxu0 %v536
  %2112 = vmatprep.subr.bf16.mxu0 0
  %2113 = vmatpush1.bf16.msra.mxu0 %v533
  %2114 = vmatprep.subr.bf16.mxu0 0
  %2115 = vmatpush2.bf16.msra.mxu0 0
  %2116 = vmatprep.subr.bf16.mxu0 0
  %2117 = vmatpush2.bf16.msra.mxu0 0
  %2118 = vmatprep.subr.bf16.mxu0 0
  %2119 = vmatpush2.bf16.msra.mxu0 0
  %2120 = vmatprep.subr.bf16.mxu0 0
  %2121 = vmatpush2.bf16.msra.mxu0 0
  %2122 = vmatprep.subr.bf16.mxu0 0
  %2123 = vmatpush2.bf16.msra.mxu0 0
  %2124 = vmatprep.subr.bf16.mxu0 0
  %2125 = vmatpush2.bf16.msra.mxu0 0
  %2126 = vmatprep.subr.bf16.mxu0 0
  %2127 = vmatpush2.bf16.msra.mxu0 0
  %2128 = vmatprep.subr.bf16.mxu0 0
  %2129 = vmatpush2.bf16.msra.mxu0 0
  %2130 = vmatprep.mubr.bf16.mxu0 0
  %2131 = vmatmul.mubr.bf16.gmra.mxu0 %v2056
  %v2132 = vpop.f32.mrf.mxu0
  %v2133 = vadd.f32 0.0, %v2132
  %v2134 = vpop.f32.mrf.mxu0
  %v2135 = vpop.f32.mrf.mxu0
  %v2136 = vpop.f32.mrf.mxu0
  %2137 = vdwg.mxu0
  %v2138 = vadd.f32 %v2055, %v2092
  %v2139 = vxor.u32 %v2138, 2147483648
  %v2140 = vmul.f32 %v2139, 1.442695
  %v2141 = vpow.pop %v2140
  %v2142 = vadd.f32 %v2141, 1.0
  %v2143 = vrcp.pop %v2142
  %v2144 = vmul.f32 1.0, %v2143
  %v2146 = vrot.slane %v2055, 1
  %v2148 = vadd.f32 %v2146, %v2094
  %v2149 = vxor.u32 %v2148, 2147483648
  %v2150 = vmul.f32 %v2149, 1.442695
  %v2151 = vpow.pop %v2150
  %v2152 = vadd.f32 %v2151, 1.0
  %v2153 = vrcp.pop %v2152
  %v2154 = vmul.f32 1.0, %v2153
  %v2155 = vadd.f32 %v2133, %v444
  %v2156 = vmul.f32 %v2144, %v2155
  %v2157 = vrot.slane %v2055, 2
  %v2159 = vadd.f32 %v2157, %v2156
  %v2160 = vtanh.pop %v2159
  %v2161 = vsub.f32 1.0, %v2154
  %v2162 = vmul.f32 %v2161, %v2160
  %v2163 = vmul.f32 %v2154, %v2045
  %v2164 = vadd.f32 %v2162, %v2163
  %s2165 = sadd.s32 8, 5
  %s2166 = sshra.s32 %s2165, 3
  %s2167 = sand.u32 %s2165, 7
  %s2168 = sshra.s32 %s2165, 3
  %s2169 = sand.u32 %s2165, 7
  %s2170 = smul.u32 %s2166, 3
  %s2171 = smul.u32 %s2170, 8
  %s2172 = sadd.s32 %s2171, %s2169
  %s2173 = scalar_lea.vmem [#allocation2], %s2172
  %v2174 = vld [vmem:[%s2173] ss:$8 sm:$0x7]
  %v2175 = vpack.c.bf16 %v2164, %v2164
  %2176 = vmatprep.subr.bf16.mxu0 %v553
  %2177 = vmatpush1.bf16.msra.mxu0 %v552
  %2178 = vmatprep.subr.bf16.mxu0 %v550
  %2179 = vmatpush1.bf16.msra.mxu0 %v549
  %2180 = vmatprep.subr.bf16.mxu0 %v547
  %2181 = vmatpush1.bf16.msra.mxu0 %v546
  %2182 = vmatprep.subr.bf16.mxu0 %v544
  %2183 = vmatpush1.bf16.msra.mxu0 %v543
  %2184 = vmatprep.subr.bf16.mxu0 %v541
  %2185 = vmatpush1.bf16.msra.mxu0 %v540
  %2186 = vmatprep.subr.bf16.mxu0 %v538
  %2187 = vmatpush1.bf16.msra.mxu0 %v537
  %2188 = vmatprep.subr.bf16.mxu0 %v535
  %2189 = vmatpush1.bf16.msra.mxu0 %v534
  %2190 = vmatprep.subr.bf16.mxu0 %v532
  %2191 = vmatpush1.bf16.msra.mxu0 %v531
  %2192 = vmatprep.subr.bf16.mxu0 0
  %2193 = vmatpush2.bf16.msra.mxu0 0
  %2194 = vmatprep.subr.bf16.mxu0 0
  %2195 = vmatpush2.bf16.msra.mxu0 0
  %2196 = vmatprep.subr.bf16.mxu0 0
  %2197 = vmatpush2.bf16.msra.mxu0 0
  %2198 = vmatprep.subr.bf16.mxu0 0
  %2199 = vmatpush2.bf16.msra.mxu0 0
  %2200 = vmatprep.subr.bf16.mxu0 0
  %2201 = vmatpush2.bf16.msra.mxu0 0
  %2202 = vmatprep.subr.bf16.mxu0 0
  %2203 = vmatpush2.bf16.msra.mxu0 0
  %2204 = vmatprep.subr.bf16.mxu0 0
  %2205 = vmatpush2.bf16.msra.mxu0 0
  %2206 = vmatprep.subr.bf16.mxu0 0
  %2207 = vmatpush2.bf16.msra.mxu0 0
  %2208 = vmatprep.mubr.bf16.mxu0 0
  %2209 = vmatmul.mubr.bf16.gmra.mxu0 %v2175
  %v2210 = vpop.f32.mrf.mxu0
  %v2211 = vadd.f32 0.0, %v2210
  %v2212 = vpop.f32.mrf.mxu0
  %v2213 = vadd.f32 0.0, %v2212
  %v2214 = vpop.f32.mrf.mxu0
  %v2215 = vpop.f32.mrf.mxu0
  %2216 = vdwg.mxu0
  %2217 = vmatprep.subr.bf16.mxu0 0
  %2218 = vmatpush1.bf16.msra.mxu0 %v554
  %2219 = vmatprep.subr.bf16.mxu0 0
  %2220 = vmatpush1.bf16.msra.mxu0 %v551
  %2221 = vmatprep.subr.bf16.mxu0 0
  %2222 = vmatpush1.bf16.msra.mxu0 %v548
  %2223 = vmatprep.subr.bf16.mxu0 0
  %2224 = vmatpush1.bf16.msra.mxu0 %v545
  %2225 = vmatprep.subr.bf16.mxu0 0
  %2226 = vmatpush1.bf16.msra.mxu0 %v542
  %2227 = vmatprep.subr.bf16.mxu0 0
  %2228 = vmatpush1.bf16.msra.mxu0 %v539
  %2229 = vmatprep.subr.bf16.mxu0 0
  %2230 = vmatpush1.bf16.msra.mxu0 %v536
  %2231 = vmatprep.subr.bf16.mxu0 0
  %2232 = vmatpush1.bf16.msra.mxu0 %v533
  %2233 = vmatprep.subr.bf16.mxu0 0
  %2234 = vmatpush2.bf16.msra.mxu0 0
  %2235 = vmatprep.subr.bf16.mxu0 0
  %2236 = vmatpush2.bf16.msra.mxu0 0
  %2237 = vmatprep.subr.bf16.mxu0 0
  %2238 = vmatpush2.bf16.msra.mxu0 0
  %2239 = vmatprep.subr.bf16.mxu0 0
  %2240 = vmatpush2.bf16.msra.mxu0 0
  %2241 = vmatprep.subr.bf16.mxu0 0
  %2242 = vmatpush2.bf16.msra.mxu0 0
  %2243 = vmatprep.subr.bf16.mxu0 0
  %2244 = vmatpush2.bf16.msra.mxu0 0
  %2245 = vmatprep.subr.bf16.mxu0 0
  %2246 = vmatpush2.bf16.msra.mxu0 0
  %2247 = vmatprep.subr.bf16.mxu0 0
  %2248 = vmatpush2.bf16.msra.mxu0 0
  %2249 = vmatprep.mubr.bf16.mxu0 0
  %2250 = vmatmul.mubr.bf16.gmra.mxu0 %v2175
  %v2251 = vpop.f32.mrf.mxu0
  %v2252 = vadd.f32 0.0, %v2251
  %v2253 = vpop.f32.mrf.mxu0
  %v2254 = vpop.f32.mrf.mxu0
  %v2255 = vpop.f32.mrf.mxu0
  %2256 = vdwg.mxu0
  %v2257 = vadd.f32 %v2174, %v2211
  %v2258 = vxor.u32 %v2257, 2147483648
  %v2259 = vmul.f32 %v2258, 1.442695
  %v2260 = vpow.pop %v2259
  %v2261 = vadd.f32 %v2260, 1.0
  %v2262 = vrcp.pop %v2261
  %v2263 = vmul.f32 1.0, %v2262
  %v2265 = vrot.slane %v2174, 1
  %v2267 = vadd.f32 %v2265, %v2213
  %v2268 = vxor.u32 %v2267, 2147483648
  %v2269 = vmul.f32 %v2268, 1.442695
  %v2270 = vpow.pop %v2269
  %v2271 = vadd.f32 %v2270, 1.0
  %v2272 = vrcp.pop %v2271
  %v2273 = vmul.f32 1.0, %v2272
  %v2274 = vadd.f32 %v2252, %v444
  %v2275 = vmul.f32 %v2263, %v2274
  %v2276 = vrot.slane %v2174, 2
  %v2278 = vadd.f32 %v2276, %v2275
  %v2279 = vtanh.pop %v2278
  %v2280 = vsub.f32 1.0, %v2273
  %v2281 = vmul.f32 %v2280, %v2279
  %v2282 = vmul.f32 %v2273, %v2164
  %v2283 = vadd.f32 %v2281, %v2282
  %s2284 = sadd.s32 8, 6
  %s2285 = sshra.s32 %s2284, 3
  %s2286 = sand.u32 %s2284, 7
  %s2287 = sshra.s32 %s2284, 3
  %s2288 = sand.u32 %s2284, 7
  %s2289 = smul.u32 %s2285, 3
  %s2290 = smul.u32 %s2289, 8
  %s2291 = sadd.s32 %s2290, %s2288
  %s2292 = scalar_lea.vmem [#allocation2], %s2291
  %v2293 = vld [vmem:[%s2292] ss:$8 sm:$0x7]
  %v2294 = vpack.c.bf16 %v2283, %v2283
  %2295 = vmatprep.subr.bf16.mxu0 %v553
  %2296 = vmatpush1.bf16.msra.mxu0 %v552
  %2297 = vmatprep.subr.bf16.mxu0 %v550
  %2298 = vmatpush1.bf16.msra.mxu0 %v549
  %2299 = vmatprep.subr.bf16.mxu0 %v547
  %2300 = vmatpush1.bf16.msra.mxu0 %v546
  %2301 = vmatprep.subr.bf16.mxu0 %v544
  %2302 = vmatpush1.bf16.msra.mxu0 %v543
  %2303 = vmatprep.subr.bf16.mxu0 %v541
  %2304 = vmatpush1.bf16.msra.mxu0 %v540
  %2305 = vmatprep.subr.bf16.mxu0 %v538
  %2306 = vmatpush1.bf16.msra.mxu0 %v537
  %2307 = vmatprep.subr.bf16.mxu0 %v535
  %2308 = vmatpush1.bf16.msra.mxu0 %v534
  %2309 = vmatprep.subr.bf16.mxu0 %v532
  %2310 = vmatpush1.bf16.msra.mxu0 %v531
  %2311 = vmatprep.subr.bf16.mxu0 0
  %2312 = vmatpush2.bf16.msra.mxu0 0
  %2313 = vmatprep.subr.bf16.mxu0 0
  %2314 = vmatpush2.bf16.msra.mxu0 0
  %2315 = vmatprep.subr.bf16.mxu0 0
  %2316 = vmatpush2.bf16.msra.mxu0 0
  %2317 = vmatprep.subr.bf16.mxu0 0
  %2318 = vmatpush2.bf16.msra.mxu0 0
  %2319 = vmatprep.subr.bf16.mxu0 0
  %2320 = vmatpush2.bf16.msra.mxu0 0
  %2321 = vmatprep.subr.bf16.mxu0 0
  %2322 = vmatpush2.bf16.msra.mxu0 0
  %2323 = vmatprep.subr.bf16.mxu0 0
  %2324 = vmatpush2.bf16.msra.mxu0 0
  %2325 = vmatprep.subr.bf16.mxu0 0
  %2326 = vmatpush2.bf16.msra.mxu0 0
  %2327 = vmatprep.mubr.bf16.mxu0 0
  %2328 = vmatmul.mubr.bf16.gmra.mxu0 %v2294
  %v2329 = vpop.f32.mrf.mxu0
  %v2330 = vadd.f32 0.0, %v2329
  %v2331 = vpop.f32.mrf.mxu0
  %v2332 = vadd.f32 0.0, %v2331
  %v2333 = vpop.f32.mrf.mxu0
  %v2334 = vpop.f32.mrf.mxu0
  %2335 = vdwg.mxu0
  %2336 = vmatprep.subr.bf16.mxu0 0
  %2337 = vmatpush1.bf16.msra.mxu0 %v554
  %2338 = vmatprep.subr.bf16.mxu0 0
  %2339 = vmatpush1.bf16.msra.mxu0 %v551
  %2340 = vmatprep.subr.bf16.mxu0 0
  %2341 = vmatpush1.bf16.msra.mxu0 %v548
  %2342 = vmatprep.subr.bf16.mxu0 0
  %2343 = vmatpush1.bf16.msra.mxu0 %v545
  %2344 = vmatprep.subr.bf16.mxu0 0
  %2345 = vmatpush1.bf16.msra.mxu0 %v542
  %2346 = vmatprep.subr.bf16.mxu0 0
  %2347 = vmatpush1.bf16.msra.mxu0 %v539
  %2348 = vmatprep.subr.bf16.mxu0 0
  %2349 = vmatpush1.bf16.msra.mxu0 %v536
  %2350 = vmatprep.subr.bf16.mxu0 0
  %2351 = vmatpush1.bf16.msra.mxu0 %v533
  %2352 = vmatprep.subr.bf16.mxu0 0
  %2353 = vmatpush2.bf16.msra.mxu0 0
  %2354 = vmatprep.subr.bf16.mxu0 0
  %2355 = vmatpush2.bf16.msra.mxu0 0
  %2356 = vmatprep.subr.bf16.mxu0 0
  %2357 = vmatpush2.bf16.msra.mxu0 0
  %2358 = vmatprep.subr.bf16.mxu0 0
  %2359 = vmatpush2.bf16.msra.mxu0 0
  %2360 = vmatprep.subr.bf16.mxu0 0
  %2361 = vmatpush2.bf16.msra.mxu0 0
  %2362 = vmatprep.subr.bf16.mxu0 0
  %2363 = vmatpush2.bf16.msra.mxu0 0
  %2364 = vmatprep.subr.bf16.mxu0 0
  %2365 = vmatpush2.bf16.msra.mxu0 0
  %2366 = vmatprep.subr.bf16.mxu0 0
  %2367 = vmatpush2.bf16.msra.mxu0 0
  %2368 = vmatprep.mubr.bf16.mxu0 0
  %2369 = vmatmul.mubr.bf16.gmra.mxu0 %v2294
  %v2370 = vpop.f32.mrf.mxu0
  %v2371 = vadd.f32 0.0, %v2370
  %v2372 = vpop.f32.mrf.mxu0
  %v2373 = vpop.f32.mrf.mxu0
  %v2374 = vpop.f32.mrf.mxu0
  %2375 = vdwg.mxu0
  %v2376 = vadd.f32 %v2293, %v2330
  %v2377 = vxor.u32 %v2376, 2147483648
  %v2378 = vmul.f32 %v2377, 1.442695
  %v2379 = vpow.pop %v2378
  %v2380 = vadd.f32 %v2379, 1.0
  %v2381 = vrcp.pop %v2380
  %v2382 = vmul.f32 1.0, %v2381
  %v2384 = vrot.slane %v2293, 1
  %v2386 = vadd.f32 %v2384, %v2332
  %v2387 = vxor.u32 %v2386, 2147483648
  %v2388 = vmul.f32 %v2387, 1.442695
  %v2389 = vpow.pop %v2388
  %v2390 = vadd.f32 %v2389, 1.0
  %v2391 = vrcp.pop %v2390
  %v2392 = vmul.f32 1.0, %v2391
  %v2393 = vadd.f32 %v2371, %v444
  %v2394 = vmul.f32 %v2382, %v2393
  %v2395 = vrot.slane %v2293, 2
  %v2397 = vadd.f32 %v2395, %v2394
  %v2398 = vtanh.pop %v2397
  %v2399 = vsub.f32 1.0, %v2392
  %v2400 = vmul.f32 %v2399, %v2398
  %v2401 = vmul.f32 %v2392, %v2283
  %v2402 = vadd.f32 %v2400, %v2401
  %s2403 = sadd.s32 8, 7
  %s2404 = sshra.s32 %s2403, 3
  %s2405 = sand.u32 %s2403, 7
  %s2406 = sshra.s32 %s2403, 3
  %s2407 = sand.u32 %s2403, 7
  %s2408 = smul.u32 %s2404, 3
  %s2409 = smul.u32 %s2408, 8
  %s2410 = sadd.s32 %s2409, %s2407
  %s2411 = scalar_lea.vmem [#allocation2], %s2410
  %v2412 = vld [vmem:[%s2411] ss:$8 sm:$0x7]
  %v2413 = vpack.c.bf16 %v2402, %v2402
  %2414 = vmatprep.subr.bf16.mxu0 %v553
  %2415 = vmatpush1.bf16.msra.mxu0 %v552
  %2416 = vmatprep.subr.bf16.mxu0 %v550
  %2417 = vmatpush1.bf16.msra.mxu0 %v549
  %2418 = vmatprep.subr.bf16.mxu0 %v547
  %2419 = vmatpush1.bf16.msra.mxu0 %v546
  %2420 = vmatprep.subr.bf16.mxu0 %v544
  %2421 = vmatpush1.bf16.msra.mxu0 %v543
  %2422 = vmatprep.subr.bf16.mxu0 %v541
  %2423 = vmatpush1.bf16.msra.mxu0 %v540
  %2424 = vmatprep.subr.bf16.mxu0 %v538
  %2425 = vmatpush1.bf16.msra.mxu0 %v537
  %2426 = vmatprep.subr.bf16.mxu0 %v535
  %2427 = vmatpush1.bf16.msra.mxu0 %v534
  %2428 = vmatprep.subr.bf16.mxu0 %v532
  %2429 = vmatpush1.bf16.msra.mxu0 %v531
  %2430 = vmatprep.subr.bf16.mxu0 0
  %2431 = vmatpush2.bf16.msra.mxu0 0
  %2432 = vmatprep.subr.bf16.mxu0 0
  %2433 = vmatpush2.bf16.msra.mxu0 0
  %2434 = vmatprep.subr.bf16.mxu0 0
  %2435 = vmatpush2.bf16.msra.mxu0 0
  %2436 = vmatprep.subr.bf16.mxu0 0
  %2437 = vmatpush2.bf16.msra.mxu0 0
  %2438 = vmatprep.subr.bf16.mxu0 0
  %2439 = vmatpush2.bf16.msra.mxu0 0
  %2440 = vmatprep.subr.bf16.mxu0 0
  %2441 = vmatpush2.bf16.msra.mxu0 0
  %2442 = vmatprep.subr.bf16.mxu0 0
  %2443 = vmatpush2.bf16.msra.mxu0 0
  %2444 = vmatprep.subr.bf16.mxu0 0
  %2445 = vmatpush2.bf16.msra.mxu0 0
  %2446 = vmatprep.mubr.bf16.mxu0 0
  %2447 = vmatmul.mubr.bf16.gmra.mxu0 %v2413
  %v2448 = vpop.f32.mrf.mxu0
  %v2449 = vadd.f32 0.0, %v2448
  %v2450 = vpop.f32.mrf.mxu0
  %v2451 = vadd.f32 0.0, %v2450
  %v2452 = vpop.f32.mrf.mxu0
  %v2453 = vpop.f32.mrf.mxu0
  %2454 = vdwg.mxu0
  %2455 = vmatprep.subr.bf16.mxu0 0
  %2456 = vmatpush1.bf16.msra.mxu0 %v554
  %2457 = vmatprep.subr.bf16.mxu0 0
  %2458 = vmatpush1.bf16.msra.mxu0 %v551
  %2459 = vmatprep.subr.bf16.mxu0 0
  %2460 = vmatpush1.bf16.msra.mxu0 %v548
  %2461 = vmatprep.subr.bf16.mxu0 0
  %2462 = vmatpush1.bf16.msra.mxu0 %v545
  %2463 = vmatprep.subr.bf16.mxu0 0
  %2464 = vmatpush1.bf16.msra.mxu0 %v542
  %2465 = vmatprep.subr.bf16.mxu0 0
  %2466 = vmatpush1.bf16.msra.mxu0 %v539
  %2467 = vmatprep.subr.bf16.mxu0 0
  %2468 = vmatpush1.bf16.msra.mxu0 %v536
  %2469 = vmatprep.subr.bf16.mxu0 0
  %2470 = vmatpush1.bf16.msra.mxu0 %v533
  %2471 = vmatprep.subr.bf16.mxu0 0
  %2472 = vmatpush2.bf16.msra.mxu0 0
  %2473 = vmatprep.subr.bf16.mxu0 0
  %2474 = vmatpush2.bf16.msra.mxu0 0
  %2475 = vmatprep.subr.bf16.mxu0 0
  %2476 = vmatpush2.bf16.msra.mxu0 0
  %2477 = vmatprep.subr.bf16.mxu0 0
  %2478 = vmatpush2.bf16.msra.mxu0 0
  %2479 = vmatprep.subr.bf16.mxu0 0
  %2480 = vmatpush2.bf16.msra.mxu0 0
  %2481 = vmatprep.subr.bf16.mxu0 0
  %2482 = vmatpush2.bf16.msra.mxu0 0
  %2483 = vmatprep.subr.bf16.mxu0 0
  %2484 = vmatpush2.bf16.msra.mxu0 0
  %2485 = vmatprep.subr.bf16.mxu0 0
  %2486 = vmatpush2.bf16.msra.mxu0 0
  %2487 = vmatprep.mubr.bf16.mxu0 0
  %2488 = vmatmul.mubr.bf16.gmra.mxu0 %v2413
  %v2489 = vpop.f32.mrf.mxu0
  %v2490 = vadd.f32 0.0, %v2489
  %v2491 = vpop.f32.mrf.mxu0
  %v2492 = vpop.f32.mrf.mxu0
  %v2493 = vpop.f32.mrf.mxu0
  %2494 = vdwg.mxu0
  %v2495 = vadd.f32 %v2412, %v2449
  %v2496 = vxor.u32 %v2495, 2147483648
  %v2497 = vmul.f32 %v2496, 1.442695
  %v2498 = vpow.pop %v2497
  %v2499 = vadd.f32 %v2498, 1.0
  %v2500 = vrcp.pop %v2499
  %v2501 = vmul.f32 1.0, %v2500
  %v2503 = vrot.slane %v2412, 1
  %v2505 = vadd.f32 %v2503, %v2451
  %v2506 = vxor.u32 %v2505, 2147483648
  %v2507 = vmul.f32 %v2506, 1.442695
  %v2508 = vpow.pop %v2507
  %v2509 = vadd.f32 %v2508, 1.0
  %v2510 = vrcp.pop %v2509
  %v2511 = vmul.f32 1.0, %v2510
  %v2512 = vadd.f32 %v2490, %v444
  %v2513 = vmul.f32 %v2501, %v2512
  %v2514 = vrot.slane %v2412, 2
  %v2516 = vadd.f32 %v2514, %v2513
  %v2517 = vtanh.pop %v2516
  %v2518 = vsub.f32 1.0, %v2511
  %v2519 = vmul.f32 %v2518, %v2517
  %v2520 = vmul.f32 %v2511, %v2402
  %v2521 = vadd.f32 %v2519, %v2520
  %v2523 = vlaneseq
  %v2524 = vshrl.u32 %v2523, 7
  %v2525 = vsub.s32 0, %v2524
  %v2526 = vrot.slane %v1807, %v2525
  %v2529 = vlaneseq
  %v2530 = vshrl.u32 %v2529, 7
  %v2531 = vsub.s32 0, %v2530
  %v2532 = vrot.slane %v1926, %v2531
  %v2535 = vlaneseq
  %v2536 = vshrl.u32 %v2535, 7
  %v2537 = vsub.s32 0, %v2536
  %v2538 = vrot.slane %v2045, %v2537
  %v2541 = vlaneseq
  %v2542 = vshrl.u32 %v2541, 7
  %v2543 = vsub.s32 0, %v2542
  %v2544 = vrot.slane %v2164, %v2543
  %v2547 = vlaneseq
  %v2548 = vshrl.u32 %v2547, 7
  %v2549 = vsub.s32 0, %v2548
  %v2550 = vrot.slane %v2283, %v2549
  %v2553 = vlaneseq
  %v2554 = vshrl.u32 %v2553, 7
  %v2555 = vsub.s32 0, %v2554
  %v2556 = vrot.slane %v2402, %v2555
  %v2559 = vlaneseq
  %v2560 = vshrl.u32 %v2559, 7
  %v2561 = vsub.s32 0, %v2560
  %v2562 = vrot.slane %v2521, %v2561
  %v2564 = vsel %vm1562, %v1688, %v2526
  %v2565 = vsel %vm1564, %v2564, %v2532
  %v2566 = vsel %vm1566, %v2565, %v2538
  %v2567 = vsel %vm43, %v2566, %v2544
  %v2568 = vsel %vm1569, %v2567, %v2550
  %v2569 = vsel %vm1571, %v2568, %v2556
  %v2570 = vsel %vm1573, %v2569, %v2562
  %s2571 = scalar_lea.vmem %s9, 8
  %2572 = vst [vmem:[%s2571] sm:$0xff] %v2570
  %2573 = vst [vmem:[%s10] sm:$0x1] %v2521
  // Predicated region
  $region38: #{tgcn_forward.1} parent=0 // pred_check
    _
  $region39: #{tgcn_forward.1} parent=0 // pred_check_branch
    %2575 = sbr.rel (0) target = $region41
  $region40: #{tgcn_forward.1} parent=0 // pred_region
    _
  $region41: #{tgcn_forward.1} parent=0 // pred_fallthru
    _
  // Predicated region
  $region42: #{tgcn_forward.1} parent=0 // pred_check
    _
  $region43: #{tgcn_forward.1} parent=0 // pred_check_branch
    %2577 = sbr.rel (0) target = $region45
  $region44: #{tgcn_forward.1} parent=0 // pred_region
    _
  $region45: #{tgcn_forward.1} parent=0 // pred_fallthru
    _
  // Predicated region
  $region46: #{tgcn_forward.1} parent=0 // pred_check
    _
  $region47: #{tgcn_forward.1} parent=0 // pred_check_branch
    %2579 = sbr.rel (0) target = $region49
  $region48: #{tgcn_forward.1} parent=0 // pred_region
    _
  $region49: #{tgcn_forward.1} parent=0 // pred_fallthru
    _
  // Predicated region
  $region50: #{tgcn_forward.1} parent=0 // pred_check
    _
  $region51: #{tgcn_forward.1} parent=0 // pred_check_branch
    %2581 = sbr.rel (0) target = $region53
  $region52: #{tgcn_forward.1} parent=0 // pred_region
    _
  $region53: #{tgcn_forward.1} parent=0 // pred_fallthru
    _

</llo_original>
